<compile_context>
chip_gen: v7x
topology: tpu7x:2x2x1
jax: 0.10.0
libtpu: 0.0.40
codegen_flags: <defaults>
</compile_context>

<pallas_src>
import functools
import math

import jax
import jax.numpy as jnp
from jax.experimental import pallas as pl
from jax.experimental.pallas import tpu as pltpu

F32 = jnp.float32

# ----------------------------- model config (small, synthetic) ---------------
N = 2            # batch
L = 8            # sequence length
C_IN = 16        # in_channels
MC = 32          # model_channels  (time_embed_dim = 4 * MC = 128)
H = 32           # config.hidden_size
NUM_HEADS = 4    # config.num_attention_heads   (head_dim = 8)
DH = H // NUM_HEADS
INTER = 64       # config.intermediate_size
NUM_LAYERS = 2   # config.num_hidden_layers
OUT_C = 16       # out_channels
MAX_POS = 64     # config.max_position_embeddings
EPS = 1e-12      # config.layer_norm_eps (BERT default)
LANE = 128       # TPU lane width; packing below relies on these identities
OUT_PAD = LANE   # lane-dense output width (sliced back to OUT_C in the wrapper)

assert 4 * H == LANE, "bias/weight packing assumes hidden_size == 32"
assert 4 * MC == LANE, "time_embed packing assumes model_channels == 32"
assert INTER + H <= LANE
assert H % NUM_HEADS == 0 and OUT_C <= LANE and L <= MAX_POS


# ----------------------------- in-kernel math helpers -------------------------
def _dot(a, b):
    return jnp.dot(a, b, preferred_element_type=jnp.float32)


def _gelu(x):
    # TODO(synk): HF BERT uses exact erf-GELU; tanh-approximate GELU keeps the
    # transcendental on the EUP slot (max abs deviation ~1e-3).
    c = math.sqrt(2.0 / math.pi)
    return 0.5 * x * (1.0 + jnp.tanh(c * (x + 0.044715 * (x * x * x))))


def _silu(x):
    # x * sigmoid(x); sigmoid written via tanh -> numerically stable, EUP-resident.
    return x * (0.5 * (jnp.tanh(0.5 * x) + 1.0))


def _layernorm(x, gamma, beta, eps):
    mu = jnp.mean(x, axis=-1, keepdims=True)
    var = jnp.mean(jnp.square(x - mu), axis=-1, keepdims=True)
    return (x - mu) * jax.lax.rsqrt(var + eps) * gamma + beta


# ----------------------------- the single fused kernel ------------------------
def fused_kernel(t_ref, x_ref, pos_ref, mask_ref,
                 tew1_ref, tew2_ref, upw1_ref, upw2_ref, gvec_ref,
                 wqkvo_ref, lvec_ref, wi_ref, wo2_ref,
                 outw1_ref, outw2_ref,
                 o_ref, *, n, seq_len, hidden, inter, num_heads, num_layers, eps):
    nl = n * seq_len
    dh = hidden // num_heads

    # global packed bias slab [4, 128]
    gvec = gvec_ref[...]
    te_b2 = gvec[0, 0:hidden]
    up_b1 = gvec[0, hidden:2 * hidden]
    up_b2 = gvec[0, 2 * hidden:3 * hidden]
    ln_g = gvec[0, 3 * hidden:4 * hidden]
    ln_b = gvec[1, 0:hidden]
    out_b1 = gvec[1, hidden:2 * hidden]
    te_b1 = gvec[2]                      # [128]
    out_b2 = gvec[3]                     # [128], columns >= OUT_C are zero

    # ---- time_embed(timestep_embedding(t)) : Linear -> SiLU -> Linear ----
    te = _dot(t_ref[...], tew1_ref[...]) + te_b1          # [N, 4*MC]
    te = _silu(te)
    emb = _dot(te, tew2_ref[...]) + te_b2                  # [N, H]

    # ---- input_up_proj on the full [N*L, C_in] slab : Linear -> Tanh -> Linear ----
    h = jnp.tanh(_dot(x_ref[...], upw1_ref[...]) + up_b1)
    h = _dot(h, upw2_ref[...]) + up_b2                     # [N*L, H]

    # ---- + position embedding + per-sequence time embedding (3-D broadcast add) ----
    h3 = h.reshape(n, seq_len, hidden) + pos_ref[...][None, :, :] + emb[:, None, :]
    h = _layernorm(h3.reshape(nl, hidden), ln_g, ln_b, eps)   # dropout p=0 -> identity

    mask = mask_ref[...]                                    # [N*L, N*L] block-diag additive

    # ---- BertEncoder: num_layers post-LN transformer layers (statically unrolled) ----
    for lyr in range(num_layers):
        wqkvo = wqkvo_ref[lyr]                              # [H, 4H] = [32, 128] slab
        lv = lvec_ref[lyr]                                  # [3, 128] bias/LN slab
        b_qkv = lv[0, 0:3 * hidden]
        b_ao = lv[0, 3 * hidden:4 * hidden]
        b_i = lv[1, 0:inter]
        b_fo = lv[1, inter:inter + hidden]
        g1 = lv[2, 0:hidden]
        b1 = lv[2, hidden:2 * hidden]
        g2 = lv[2, 2 * hidden:3 * hidden]
        b2 = lv[2, 3 * hidden:4 * hidden]

        # fused QKV projection (1/sqrt(dh) pre-folded into Wq/bq on the host)
        qkv = _dot(h, wqkvo[:, 0:3 * hidden]) + b_qkv       # [N*L, 3H]

        def split_heads(base):
            # [N*L, H] column block -> [heads, N*L, dh] (static lane slices + stack)
            return jnp.stack(
                [qkv[:, base + i * dh: base + (i + 1) * dh] for i in range(num_heads)],
                axis=0)

        q = split_heads(0)
        k = split_heads(hidden)
        v = split_heads(2 * hidden)

        # head-batched attention over the packed [N*L] axis with block-diagonal mask
        s = jnp.einsum('hld,hmd->hlm', q, k,
                       preferred_element_type=jnp.float32) + mask
        s = s - jnp.max(s, axis=-1, keepdims=True)
        p = jnp.exp(s)
        p = p * pl.reciprocal(jnp.sum(p, axis=-1, keepdims=True), approx=True)
        ctx = jnp.einsum('hlm,hmd->hld', p, v,
                         preferred_element_type=jnp.float32)  # [heads, N*L, dh]

        # merge heads (head-major columns) and do ONE output-projection matmul
        ctx2 = jnp.concatenate([ctx[i] for i in range(num_heads)], axis=-1)  # [N*L, H]
        attn = _dot(ctx2, wqkvo[:, 3 * hidden:4 * hidden]) + b_ao

        h1 = _layernorm(attn + h, g1, b1, eps)

        inter_act = _gelu(_dot(h1, wi_ref[lyr]) + b_i)       # [N*L, INTER]
        ffn = _dot(inter_act, wo2_ref[lyr]) + b_fo
        h = _layernorm(ffn + h1, g2, b2, eps)

    # ---- output_down_proj : Linear -> Tanh -> Linear (lane-padded to 128 cols) ----
    t2 = jnp.tanh(_dot(h, outw1_ref[...]) + out_b1)
    o_ref[...] = _dot(t2, outw2_ref[...]) + out_b2           # [N*L, 128]


# ----------------------------- JAX glue ---------------------------------------
def timestep_embedding(timesteps, dim, max_period=10000):
    half = dim // 2
    freqs = jnp.exp(-math.log(max_period) * jnp.arange(half, dtype=F32) / half)
    args = timesteps.astype(F32)[:, None] * freqs[None, :]
    return jnp.concatenate([jnp.cos(args), jnp.sin(args)], axis=-1)   # [N, dim]


def init_params(key):
    keys = iter(jax.random.split(key, 64))

    def w(shape):
        return 0.02 * jax.random.normal(next(keys), shape, F32)

    def b(shape):
        return 0.01 * jax.random.normal(next(keys), shape, F32)

    p = {}
    p["te_w1"] = w((MC, 4 * MC))                 # [32, 128]
    te_b1 = b((4 * MC,))
    p["te_w2"] = w((4 * MC, H))                  # [128, 32]
    te_b2 = b((H,))
    p["up_w1"] = w((C_IN, H))
    up_b1 = b((H,))
    p["up_w2"] = w((H, H))
    up_b2 = b((H,))
    p["pos_emb"] = 0.02 * jax.random.normal(next(keys), (MAX_POS, H), F32)
    ln_g = jnp.ones((H,), F32)
    ln_b = jnp.zeros((H,), F32)
    p["out_w1"] = w((H, H))
    out_b1 = b((H,))
    out_w2 = w((H, OUT_C))
    out_b2 = b((OUT_C,))

    # global lane-dense bias slab [4, 128]
    p["gvec"] = jnp.stack([
        jnp.concatenate([te_b2, up_b1, up_b2, ln_g]),
        jnp.concatenate([ln_b, out_b1, jnp.zeros((2 * H,), F32)]),
        te_b1,
        jnp.concatenate([out_b2, jnp.zeros((LANE - OUT_C,), F32)]),
    ])
    # lane-dense (padded) final projection weight [H, 128]
    p["out_w2p"] = jnp.concatenate([out_w2, jnp.zeros((H, LANE - OUT_C), F32)], axis=1)

    scale = 1.0 / math.sqrt(DH)
    wqkvo, lvec, wis, wos = [], [], [], []
    for _ in range(NUM_LAYERS):
        wq, wk, wv, wo = w((H, H)), w((H, H)), w((H, H)), w((H, H))
        bq, bk, bv, bo = b((H,)), b((H,)), b((H,)), b((H,))
        g1 = jnp.ones((H,), F32)
        b1 = jnp.zeros((H,), F32)
        wi = w((H, INTER))
        bi = b((INTER,))
        wo2 = w((INTER, H))
        bo2 = b((H,))
        g2 = jnp.ones((H,), F32)
        b2 = jnp.zeros((H,), F32)
        # per-layer lane-dense weight slab [H, 4H] = [32, 128]: Wq*scale | Wk | Wv | Wo
        wqkvo.append(jnp.concatenate([wq * scale, wk, wv, wo], axis=1))
        # per-layer bias/LN slab [3, 128]
        lvec.append(jnp.stack([
            jnp.concatenate([bq * scale, bk, bv, bo]),
            jnp.concatenate([bi, bo2, jnp.zeros((LANE - INTER - H,), F32)]),
            jnp.concatenate([g1, b1, g2, b2]),
        ]))
        wis.append(wi)
        wos.append(wo2)

    p["wqkvo"] = jnp.stack(wqkvo)    # [NUM_LAYERS, H, 128]
    p["lvec"] = jnp.stack(lvec)      # [NUM_LAYERS, 3, 128]
    p["ffn_wi"] = jnp.stack(wis)     # [NUM_LAYERS, H, INTER]
    p["ffn_wo"] = jnp.stack(wos)     # [NUM_LAYERS, INTER, H]
    return p


def forward(params, x, timesteps):
    n, seq_len, c_in = x.shape
    nl = n * seq_len
    t_sin = timestep_embedding(timesteps, MC)                # [N, MC] (tiny JAX glue)
    x2 = x.reshape(nl, c_in).astype(F32)                     # flatten batch for the kernel
    pos = params["pos_emb"][:seq_len]                        # position_ids = arange(seq_len)

    # block-diagonal additive mask: tokens attend only within their own sequence
    seq_ids = jnp.repeat(jnp.arange(n), seq_len)
    attn_mask = jnp.where(seq_ids[:, None] == seq_ids[None, :], 0.0, -1e9).astype(F32)

    kern = functools.partial(fused_kernel, n=n, seq_len=seq_len, hidden=H, inter=INTER,
                             num_heads=NUM_HEADS, num_layers=NUM_LAYERS, eps=EPS)

    inputs = (t_sin, x2, pos, attn_mask,
              params["te_w1"], params["te_w2"], params["up_w1"], params["up_w2"],
              params["gvec"], params["wqkvo"], params["lvec"],
              params["ffn_wi"], params["ffn_wo"],
              params["out_w1"], params["out_w2p"])

    # advisory cost estimate so XLA schedules the surrounding glue sensibly
    mm_flops = 2 * (n * MC * 4 * MC + n * 4 * MC * H
                    + nl * c_in * H + nl * H * H
                    + NUM_LAYERS * (nl * H * 3 * H
                                    + 2 * NUM_HEADS * nl * nl * DH
                                    + nl * H * H
                                    + nl * H * INTER + nl * INTER * H)
                    + nl * H * H + nl * H * OUT_PAD)
    transc = (n * 4 * MC + 2 * nl * H
              + NUM_LAYERS * (NUM_HEADS * nl * nl + nl * INTER))
    bytes_acc = 4 * (sum(int(a.size) for a in inputs) + nl * OUT_PAD)

    vmem = pl.BlockSpec(memory_space=pltpu.MemorySpace.VMEM)
    out = pl.pallas_call(
        kern,
        out_shape=jax.ShapeDtypeStruct((nl, OUT_PAD), F32),
        in_specs=[vmem] * len(inputs),
        out_specs=vmem,
        compiler_params=pltpu.CompilerParams(vmem_limit_bytes=32 * 1024 * 1024),
        cost_estimate=pl.CostEstimate(flops=int(mm_flops), transcendentals=int(transc),
                                      bytes_accessed=int(bytes_acc)),
    )(*inputs)

    return out[:, :OUT_C].reshape(n, seq_len, OUT_C).astype(x.dtype)


if __name__ == "__main__":
    key = jax.random.PRNGKey(0)
    kp, kx, kt = jax.random.split(key, 3)
    params = init_params(kp)
    x = jax.random.normal(kx, (N, L, C_IN), F32)
    timesteps = jax.random.randint(kt, (N,), 0, 1000).astype(F32)

    out = forward(params, x, timesteps)
    out = jax.block_until_ready(out)

    assert out.shape == (N, L, OUT_C), out.shape
    assert out.dtype == x.dtype
    assert bool(jnp.all(jnp.isfinite(out)))
    print("KERNEL_OK")
</pallas_src>

<mosaic_0001>
module attributes {stable_mosaic.version = 11 : i64} {
  func.func @fused_kernel(%arg0: memref<2x32xf32, #tpu.memory_space<vmem>>, %arg1: memref<16x16xf32, #tpu.memory_space<vmem>>, %arg2: memref<8x32xf32, #tpu.memory_space<vmem>>, %arg3: memref<16x16xf32, #tpu.memory_space<vmem>>, %arg4: memref<32x128xf32, #tpu.memory_space<vmem>>, %arg5: memref<128x32xf32, #tpu.memory_space<vmem>>, %arg6: memref<16x32xf32, #tpu.memory_space<vmem>>, %arg7: memref<32x32xf32, #tpu.memory_space<vmem>>, %arg8: memref<4x128xf32, #tpu.memory_space<vmem>>, %arg9: memref<2x32x128xf32, #tpu.memory_space<vmem>>, %arg10: memref<2x3x128xf32, #tpu.memory_space<vmem>>, %arg11: memref<2x32x64xf32, #tpu.memory_space<vmem>>, %arg12: memref<2x64x32xf32, #tpu.memory_space<vmem>>, %arg13: memref<32x32xf32, #tpu.memory_space<vmem>>, %arg14: memref<32x128xf32, #tpu.memory_space<vmem>>, %arg15: memref<16x128xf32, #tpu.memory_space<vmem>>) attributes {dimension_semantics = [], scalar_prefetch = 0 : i64, scratch_operands = 0 : i64, tpu.core_type = #tpu.core_type<tc>} {
    %c0 = arith.constant 0 : index
    %c0_0 = arith.constant 0 : index
    %0 = vector.load %arg8[%c0, %c0_0] : memref<4x128xf32, #tpu.memory_space<vmem>>, vector<4x128xf32>
    %1 = vector.extract_strided_slice %0 {offsets = [0, 0], sizes = [1, 32], strides = [1, 1]} : vector<4x128xf32> to vector<1x32xf32>
    %2 = vector.shape_cast %1 : vector<1x32xf32> to vector<32xf32>
    %3 = vector.extract_strided_slice %0 {offsets = [0, 32], sizes = [1, 32], strides = [1, 1]} : vector<4x128xf32> to vector<1x32xf32>
    %4 = vector.shape_cast %3 : vector<1x32xf32> to vector<32xf32>
    %5 = vector.extract_strided_slice %0 {offsets = [0, 64], sizes = [1, 32], strides = [1, 1]} : vector<4x128xf32> to vector<1x32xf32>
    %6 = vector.shape_cast %5 : vector<1x32xf32> to vector<32xf32>
    %7 = vector.extract_strided_slice %0 {offsets = [0, 96], sizes = [1, 32], strides = [1, 1]} : vector<4x128xf32> to vector<1x32xf32>
    %8 = vector.shape_cast %7 : vector<1x32xf32> to vector<32xf32>
    %9 = vector.extract_strided_slice %0 {offsets = [1, 0], sizes = [1, 32], strides = [1, 1]} : vector<4x128xf32> to vector<1x32xf32>
    %10 = vector.shape_cast %9 : vector<1x32xf32> to vector<32xf32>
    %11 = vector.extract_strided_slice %0 {offsets = [1, 32], sizes = [1, 32], strides = [1, 1]} : vector<4x128xf32> to vector<1x32xf32>
    %12 = vector.shape_cast %11 : vector<1x32xf32> to vector<32xf32>
    %13 = vector.extract_strided_slice %0 {offsets = [2, 0], sizes = [1, 128], strides = [1, 1]} : vector<4x128xf32> to vector<1x128xf32>
    %14 = vector.shape_cast %13 : vector<1x128xf32> to vector<128xf32>
    %15 = vector.extract_strided_slice %0 {offsets = [3, 0], sizes = [1, 128], strides = [1, 1]} : vector<4x128xf32> to vector<1x128xf32>
    %16 = vector.shape_cast %15 : vector<1x128xf32> to vector<128xf32>
    %c0_1 = arith.constant 0 : index
    %c0_2 = arith.constant 0 : index
    %17 = vector.load %arg0[%c0_1, %c0_2] : memref<2x32xf32, #tpu.memory_space<vmem>>, vector<2x32xf32>
    %c0_3 = arith.constant 0 : index
    %c0_4 = arith.constant 0 : index
    %18 = vector.load %arg4[%c0_3, %c0_4] : memref<32x128xf32, #tpu.memory_space<vmem>>, vector<32x128xf32>
    %cst = arith.constant dense<0.000000e+00> : vector<2x128xf32>
    %19 = tpu.matmul %17, %18, %cst {dimension_numbers = #tpu.dot_dimension_numbers<[1], [0], [0], [1], [0, 0, 1, 1], [], []>} : vector<2x32xf32>, vector<32x128xf32>, vector<2x128xf32> -> vector<2x128xf32>
    %20 = vector.shape_cast %14 : vector<128xf32> to vector<1x128xf32>
    %21 = vector.broadcast %20 : vector<1x128xf32> to vector<2x128xf32>
    %22 = arith.addf %19, %21 : vector<2x128xf32>
    %cst_5 = arith.constant 5.000000e-01 : f32
    %23 = vector.broadcast %cst_5 : f32 to vector<2x128xf32>
    %24 = arith.mulf %23, %22 : vector<2x128xf32>
    %25 = math.tanh %24 : vector<2x128xf32>
    %cst_6 = arith.constant 1.000000e+00 : f32
    %26 = vector.broadcast %cst_6 : f32 to vector<2x128xf32>
    %27 = arith.addf %25, %26 : vector<2x128xf32>
    %cst_7 = arith.constant 5.000000e-01 : f32
    %28 = vector.broadcast %cst_7 : f32 to vector<2x128xf32>
    %29 = arith.mulf %28, %27 : vector<2x128xf32>
    %30 = arith.mulf %22, %29 : vector<2x128xf32>
    %c0_8 = arith.constant 0 : index
    %c0_9 = arith.constant 0 : index
    %31 = vector.load %arg5[%c0_8, %c0_9] : memref<128x32xf32, #tpu.memory_space<vmem>>, vector<128x32xf32>
    %cst_10 = arith.constant dense<0.000000e+00> : vector<2x32xf32>
    %32 = tpu.matmul %30, %31, %cst_10 {dimension_numbers = #tpu.dot_dimension_numbers<[1], [0], [0], [1], [0, 0, 1, 1], [], []>} : vector<2x128xf32>, vector<128x32xf32>, vector<2x32xf32> -> vector<2x32xf32>
    %33 = vector.shape_cast %2 : vector<32xf32> to vector<1x32xf32>
    %34 = vector.broadcast %33 : vector<1x32xf32> to vector<2x32xf32>
    %35 = arith.addf %32, %34 : vector<2x32xf32>
    %c0_11 = arith.constant 0 : index
    %c0_12 = arith.constant 0 : index
    %36 = vector.load %arg1[%c0_11, %c0_12] : memref<16x16xf32, #tpu.memory_space<vmem>>, vector<16x16xf32>
    %c0_13 = arith.constant 0 : index
    %c0_14 = arith.constant 0 : index
    %37 = vector.load %arg6[%c0_13, %c0_14] : memref<16x32xf32, #tpu.memory_space<vmem>>, vector<16x32xf32>
    %cst_15 = arith.constant dense<0.000000e+00> : vector<16x32xf32>
    %38 = tpu.matmul %36, %37, %cst_15 {dimension_numbers = #tpu.dot_dimension_numbers<[1], [0], [0], [1], [0, 0, 1, 1], [], []>} : vector<16x16xf32>, vector<16x32xf32>, vector<16x32xf32> -> vector<16x32xf32>
    %39 = vector.shape_cast %4 : vector<32xf32> to vector<1x32xf32>
    %40 = vector.broadcast %39 : vector<1x32xf32> to vector<16x32xf32>
    %41 = arith.addf %38, %40 : vector<16x32xf32>
    %42 = math.tanh %41 : vector<16x32xf32>
    %c0_16 = arith.constant 0 : index
    %c0_17 = arith.constant 0 : index
    %43 = vector.load %arg7[%c0_16, %c0_17] : memref<32x32xf32, #tpu.memory_space<vmem>>, vector<32x32xf32>
    %cst_18 = arith.constant dense<0.000000e+00> : vector<16x32xf32>
    %44 = tpu.matmul %42, %43, %cst_18 {dimension_numbers = #tpu.dot_dimension_numbers<[1], [0], [0], [1], [0, 0, 1, 1], [], []>} : vector<16x32xf32>, vector<32x32xf32>, vector<16x32xf32> -> vector<16x32xf32>
    %45 = vector.shape_cast %6 : vector<32xf32> to vector<1x32xf32>
    %46 = vector.broadcast %45 : vector<1x32xf32> to vector<16x32xf32>
    %47 = arith.addf %44, %46 : vector<16x32xf32>
    %48 = vector.shape_cast %47 : vector<16x32xf32> to vector<2x8x32xf32>
    %c0_19 = arith.constant 0 : index
    %c0_20 = arith.constant 0 : index
    %49 = vector.load %arg2[%c0_19, %c0_20] : memref<8x32xf32, #tpu.memory_space<vmem>>, vector<8x32xf32>
    %50 = vector.shape_cast %49 : vector<8x32xf32> to vector<1x8x32xf32>
    %51 = vector.broadcast %50 : vector<1x8x32xf32> to vector<2x8x32xf32>
    %52 = arith.addf %48, %51 : vector<2x8x32xf32>
    %53 = vector.shape_cast %35 : vector<2x32xf32> to vector<2x1x32xf32>
    %54 = vector.broadcast %53 : vector<2x1x32xf32> to vector<2x8x32xf32>
    %55 = arith.addf %52, %54 : vector<2x8x32xf32>
    %56 = vector.shape_cast %55 : vector<2x8x32xf32> to vector<16x32xf32>
    %cst_21 = arith.constant dense<0.000000e+00> : vector<16xf32>
    %57 = vector.multi_reduction <add>, %56, %cst_21 [1] : vector<16x32xf32> to vector<16xf32>
    %58 = vector.shape_cast %57 : vector<16xf32> to vector<16x1xf32>
    %cst_22 = arith.constant 3.200000e+01 : f32
    %59 = vector.broadcast %cst_22 : f32 to vector<16x1xf32>
    %60 = arith.divf %58, %59 : vector<16x1xf32>
    %61 = vector.broadcast %60 : vector<16x1xf32> to vector<16x32xf32>
    %62 = arith.subf %56, %61 : vector<16x32xf32>
    %63 = arith.mulf %62, %62 : vector<16x32xf32>
    %cst_23 = arith.constant dense<0.000000e+00> : vector<16xf32>
    %64 = vector.multi_reduction <add>, %63, %cst_23 [1] : vector<16x32xf32> to vector<16xf32>
    %65 = vector.shape_cast %64 : vector<16xf32> to vector<16x1xf32>
    %cst_24 = arith.constant 3.200000e+01 : f32
    %66 = vector.broadcast %cst_24 : f32 to vector<16x1xf32>
    %67 = arith.divf %65, %66 : vector<16x1xf32>
    %68 = vector.broadcast %60 : vector<16x1xf32> to vector<16x32xf32>
    %69 = arith.subf %56, %68 : vector<16x32xf32>
    %cst_25 = arith.constant 9.99999996E-13 : f32
    %70 = vector.broadcast %cst_25 : f32 to vector<16x1xf32>
    %71 = arith.addf %67, %70 : vector<16x1xf32>
    %72 = math.rsqrt %71 : vector<16x1xf32>
    %73 = vector.broadcast %72 : vector<16x1xf32> to vector<16x32xf32>
    %74 = arith.mulf %69, %73 : vector<16x32xf32>
    %75 = vector.shape_cast %8 : vector<32xf32> to vector<1x32xf32>
    %76 = vector.broadcast %75 : vector<1x32xf32> to vector<16x32xf32>
    %77 = arith.mulf %74, %76 : vector<16x32xf32>
    %78 = vector.shape_cast %10 : vector<32xf32> to vector<1x32xf32>
    %79 = vector.broadcast %78 : vector<1x32xf32> to vector<16x32xf32>
    %80 = arith.addf %77, %79 : vector<16x32xf32>
    %c0_26 = arith.constant 0 : index
    %c0_27 = arith.constant 0 : index
    %81 = vector.load %arg3[%c0_26, %c0_27] : memref<16x16xf32, #tpu.memory_space<vmem>>, vector<16x16xf32>
    %c0_28 = arith.constant 0 : index
    %c0_29 = arith.constant 0 : index
    %c0_30 = arith.constant 0 : index
    %82 = vector.load %arg9[%c0_28, %c0_29, %c0_30] : memref<2x32x128xf32, #tpu.memory_space<vmem>>, vector<1x32x128xf32>
    %83 = vector.shape_cast %82 : vector<1x32x128xf32> to vector<32x128xf32>
    %c0_31 = arith.constant 0 : index
    %c0_32 = arith.constant 0 : index
    %c0_33 = arith.constant 0 : index
    %84 = vector.load %arg10[%c0_31, %c0_32, %c0_33] : memref<2x3x128xf32, #tpu.memory_space<vmem>>, vector<1x3x128xf32>
    %85 = vector.shape_cast %84 : vector<1x3x128xf32> to vector<3x128xf32>
    %86 = vector.extract_strided_slice %85 {offsets = [0, 0], sizes = [1, 96], strides = [1, 1]} : vector<3x128xf32> to vector<1x96xf32>
    %87 = vector.shape_cast %86 : vector<1x96xf32> to vector<96xf32>
    %88 = vector.extract_strided_slice %85 {offsets = [0, 96], sizes = [1, 32], strides = [1, 1]} : vector<3x128xf32> to vector<1x32xf32>
    %89 = vector.shape_cast %88 : vector<1x32xf32> to vector<32xf32>
    %90 = vector.extract_strided_slice %85 {offsets = [1, 0], sizes = [1, 64], strides = [1, 1]} : vector<3x128xf32> to vector<1x64xf32>
    %91 = vector.shape_cast %90 : vector<1x64xf32> to vector<64xf32>
    %92 = vector.extract_strided_slice %85 {offsets = [1, 64], sizes = [1, 32], strides = [1, 1]} : vector<3x128xf32> to vector<1x32xf32>
    %93 = vector.shape_cast %92 : vector<1x32xf32> to vector<32xf32>
    %94 = vector.extract_strided_slice %85 {offsets = [2, 0], sizes = [1, 32], strides = [1, 1]} : vector<3x128xf32> to vector<1x32xf32>
    %95 = vector.shape_cast %94 : vector<1x32xf32> to vector<32xf32>
    %96 = vector.extract_strided_slice %85 {offsets = [2, 32], sizes = [1, 32], strides = [1, 1]} : vector<3x128xf32> to vector<1x32xf32>
    %97 = vector.shape_cast %96 : vector<1x32xf32> to vector<32xf32>
    %98 = vector.extract_strided_slice %85 {offsets = [2, 64], sizes = [1, 32], strides = [1, 1]} : vector<3x128xf32> to vector<1x32xf32>
    %99 = vector.shape_cast %98 : vector<1x32xf32> to vector<32xf32>
    %100 = vector.extract_strided_slice %85 {offsets = [2, 96], sizes = [1, 32], strides = [1, 1]} : vector<3x128xf32> to vector<1x32xf32>
    %101 = vector.shape_cast %100 : vector<1x32xf32> to vector<32xf32>
    %102 = vector.extract_strided_slice %83 {offsets = [0, 0], sizes = [32, 96], strides = [1, 1]} : vector<32x128xf32> to vector<32x96xf32>
    %cst_34 = arith.constant dense<0.000000e+00> : vector<16x96xf32>
    %103 = tpu.matmul %80, %102, %cst_34 {dimension_numbers = #tpu.dot_dimension_numbers<[1], [0], [0], [1], [0, 0, 1, 1], [], []>} : vector<16x32xf32>, vector<32x96xf32>, vector<16x96xf32> -> vector<16x96xf32>
    %104 = vector.shape_cast %87 : vector<96xf32> to vector<1x96xf32>
    %105 = vector.broadcast %104 : vector<1x96xf32> to vector<16x96xf32>
    %106 = arith.addf %103, %105 : vector<16x96xf32>
    %107 = vector.extract_strided_slice %106 {offsets = [0, 0], sizes = [16, 8], strides = [1, 1]} : vector<16x96xf32> to vector<16x8xf32>
    %108 = vector.extract_strided_slice %106 {offsets = [0, 8], sizes = [16, 8], strides = [1, 1]} : vector<16x96xf32> to vector<16x8xf32>
    %109 = vector.extract_strided_slice %106 {offsets = [0, 16], sizes = [16, 8], strides = [1, 1]} : vector<16x96xf32> to vector<16x8xf32>
    %110 = vector.extract_strided_slice %106 {offsets = [0, 24], sizes = [16, 8], strides = [1, 1]} : vector<16x96xf32> to vector<16x8xf32>
    %111 = vector.shape_cast %107 : vector<16x8xf32> to vector<1x16x8xf32>
    %112 = vector.shape_cast %108 : vector<16x8xf32> to vector<1x16x8xf32>
    %113 = vector.shape_cast %109 : vector<16x8xf32> to vector<1x16x8xf32>
    %114 = vector.shape_cast %110 : vector<16x8xf32> to vector<1x16x8xf32>
    %115 = tpu.concatenate %111, %112, %113, %114 in 0 : vector<1x16x8xf32>, vector<1x16x8xf32>, vector<1x16x8xf32>, vector<1x16x8xf32> -> vector<4x16x8xf32>
    %116 = vector.extract_strided_slice %106 {offsets = [0, 32], sizes = [16, 8], strides = [1, 1]} : vector<16x96xf32> to vector<16x8xf32>
    %117 = vector.extract_strided_slice %106 {offsets = [0, 40], sizes = [16, 8], strides = [1, 1]} : vector<16x96xf32> to vector<16x8xf32>
    %118 = vector.extract_strided_slice %106 {offsets = [0, 48], sizes = [16, 8], strides = [1, 1]} : vector<16x96xf32> to vector<16x8xf32>
    %119 = vector.extract_strided_slice %106 {offsets = [0, 56], sizes = [16, 8], strides = [1, 1]} : vector<16x96xf32> to vector<16x8xf32>
    %120 = vector.shape_cast %116 : vector<16x8xf32> to vector<1x16x8xf32>
    %121 = vector.shape_cast %117 : vector<16x8xf32> to vector<1x16x8xf32>
    %122 = vector.shape_cast %118 : vector<16x8xf32> to vector<1x16x8xf32>
    %123 = vector.shape_cast %119 : vector<16x8xf32> to vector<1x16x8xf32>
    %124 = tpu.concatenate %120, %121, %122, %123 in 0 : vector<1x16x8xf32>, vector<1x16x8xf32>, vector<1x16x8xf32>, vector<1x16x8xf32> -> vector<4x16x8xf32>
    %125 = vector.extract_strided_slice %106 {offsets = [0, 64], sizes = [16, 8], strides = [1, 1]} : vector<16x96xf32> to vector<16x8xf32>
    %126 = vector.extract_strided_slice %106 {offsets = [0, 72], sizes = [16, 8], strides = [1, 1]} : vector<16x96xf32> to vector<16x8xf32>
    %127 = vector.extract_strided_slice %106 {offsets = [0, 80], sizes = [16, 8], strides = [1, 1]} : vector<16x96xf32> to vector<16x8xf32>
    %128 = vector.extract_strided_slice %106 {offsets = [0, 88], sizes = [16, 8], strides = [1, 1]} : vector<16x96xf32> to vector<16x8xf32>
    %129 = vector.shape_cast %125 : vector<16x8xf32> to vector<1x16x8xf32>
    %130 = vector.shape_cast %126 : vector<16x8xf32> to vector<1x16x8xf32>
    %131 = vector.shape_cast %127 : vector<16x8xf32> to vector<1x16x8xf32>
    %132 = vector.shape_cast %128 : vector<16x8xf32> to vector<1x16x8xf32>
    %133 = tpu.concatenate %129, %130, %131, %132 in 0 : vector<1x16x8xf32>, vector<1x16x8xf32>, vector<1x16x8xf32>, vector<1x16x8xf32> -> vector<4x16x8xf32>
    "tpu.trace_start"() <{level = 10 : i32, message = "hld,hmd->hlm"}> : () -> ()
    %cst_35 = arith.constant dense<0.000000e+00> : vector<4x16x16xf32>
    %134 = tpu.matmul %115, %124, %cst_35 {dimension_numbers = #tpu.dot_dimension_numbers<[2], [2], [1], [1], [0, 0, 0, 1, 1, 1], [0], [0]>} : vector<4x16x8xf32>, vector<4x16x8xf32>, vector<4x16x16xf32> -> vector<4x16x16xf32>
    "tpu.trace_stop"() : () -> ()
    %135 = vector.shape_cast %81 : vector<16x16xf32> to vector<1x16x16xf32>
    %136 = vector.broadcast %135 : vector<1x16x16xf32> to vector<4x16x16xf32>
    %137 = arith.addf %134, %136 : vector<4x16x16xf32>
    %cst_36 = arith.constant dense<0xFF800000> : vector<4x16xf32>
    %138 = vector.multi_reduction <maximumf>, %137, %cst_36 [2] : vector<4x16x16xf32> to vector<4x16xf32>
    %139 = vector.shape_cast %138 : vector<4x16xf32> to vector<4x16x1xf32>
    %140 = vector.broadcast %139 : vector<4x16x1xf32> to vector<4x16x16xf32>
    %141 = arith.subf %137, %140 : vector<4x16x16xf32>
    %142 = math.exp %141 : vector<4x16x16xf32>
    %cst_37 = arith.constant dense<0.000000e+00> : vector<4x16xf32>
    %143 = vector.multi_reduction <add>, %142, %cst_37 [2] : vector<4x16x16xf32> to vector<4x16xf32>
    %144 = vector.shape_cast %143 : vector<4x16xf32> to vector<4x16x1xf32>
    %145 = tpu.reciprocal %144 {approx = true} : vector<4x16x1xf32> -> vector<4x16x1xf32>
    %146 = vector.broadcast %145 : vector<4x16x1xf32> to vector<4x16x16xf32>
    %147 = arith.mulf %142, %146 : vector<4x16x16xf32>
    "tpu.trace_start"() <{level = 10 : i32, message = "hlm,hmd->hld"}> : () -> ()
    %cst_38 = arith.constant dense<0.000000e+00> : vector<4x16x8xf32>
    %148 = tpu.matmul %147, %133, %cst_38 {dimension_numbers = #tpu.dot_dimension_numbers<[2], [1], [1], [2], [0, 0, 0, 1, 1, 2], [0], [0]>} : vector<4x16x16xf32>, vector<4x16x8xf32>, vector<4x16x8xf32> -> vector<4x16x8xf32>
    "tpu.trace_stop"() : () -> ()
    %149 = vector.extract_strided_slice %148 {offsets = [0, 0, 0], sizes = [1, 16, 8], strides = [1, 1, 1]} : vector<4x16x8xf32> to vector<1x16x8xf32>
    %150 = vector.shape_cast %149 : vector<1x16x8xf32> to vector<16x8xf32>
    %151 = vector.extract_strided_slice %148 {offsets = [1, 0, 0], sizes = [1, 16, 8], strides = [1, 1, 1]} : vector<4x16x8xf32> to vector<1x16x8xf32>
    %152 = vector.shape_cast %151 : vector<1x16x8xf32> to vector<16x8xf32>
    %153 = vector.extract_strided_slice %148 {offsets = [2, 0, 0], sizes = [1, 16, 8], strides = [1, 1, 1]} : vector<4x16x8xf32> to vector<1x16x8xf32>
    %154 = vector.shape_cast %153 : vector<1x16x8xf32> to vector<16x8xf32>
    %155 = vector.extract_strided_slice %148 {offsets = [3, 0, 0], sizes = [1, 16, 8], strides = [1, 1, 1]} : vector<4x16x8xf32> to vector<1x16x8xf32>
    %156 = vector.shape_cast %155 : vector<1x16x8xf32> to vector<16x8xf32>
    %157 = tpu.concatenate %150, %152, %154, %156 in 1 : vector<16x8xf32>, vector<16x8xf32>, vector<16x8xf32>, vector<16x8xf32> -> vector<16x32xf32>
    %158 = vector.extract_strided_slice %83 {offsets = [0, 96], sizes = [32, 32], strides = [1, 1]} : vector<32x128xf32> to vector<32x32xf32>
    %cst_39 = arith.constant dense<0.000000e+00> : vector<16x32xf32>
    %159 = tpu.matmul %157, %158, %cst_39 {dimension_numbers = #tpu.dot_dimension_numbers<[1], [0], [0], [1], [0, 0, 1, 1], [], []>} : vector<16x32xf32>, vector<32x32xf32>, vector<16x32xf32> -> vector<16x32xf32>
    %160 = vector.shape_cast %89 : vector<32xf32> to vector<1x32xf32>
    %161 = vector.broadcast %160 : vector<1x32xf32> to vector<16x32xf32>
    %162 = arith.addf %159, %161 : vector<16x32xf32>
    %163 = arith.addf %162, %80 : vector<16x32xf32>
    %cst_40 = arith.constant dense<0.000000e+00> : vector<16xf32>
    %164 = vector.multi_reduction <add>, %163, %cst_40 [1] : vector<16x32xf32> to vector<16xf32>
    %165 = vector.shape_cast %164 : vector<16xf32> to vector<16x1xf32>
    %cst_41 = arith.constant 3.200000e+01 : f32
    %166 = vector.broadcast %cst_41 : f32 to vector<16x1xf32>
    %167 = arith.divf %165, %166 : vector<16x1xf32>
    %168 = vector.broadcast %167 : vector<16x1xf32> to vector<16x32xf32>
    %169 = arith.subf %163, %168 : vector<16x32xf32>
    %170 = arith.mulf %169, %169 : vector<16x32xf32>
    %cst_42 = arith.constant dense<0.000000e+00> : vector<16xf32>
    %171 = vector.multi_reduction <add>, %170, %cst_42 [1] : vector<16x32xf32> to vector<16xf32>
    %172 = vector.shape_cast %171 : vector<16xf32> to vector<16x1xf32>
    %cst_43 = arith.constant 3.200000e+01 : f32
    %173 = vector.broadcast %cst_43 : f32 to vector<16x1xf32>
    %174 = arith.divf %172, %173 : vector<16x1xf32>
    %175 = vector.broadcast %167 : vector<16x1xf32> to vector<16x32xf32>
    %176 = arith.subf %163, %175 : vector<16x32xf32>
    %cst_44 = arith.constant 9.99999996E-13 : f32
    %177 = vector.broadcast %cst_44 : f32 to vector<16x1xf32>
    %178 = arith.addf %174, %177 : vector<16x1xf32>
    %179 = math.rsqrt %178 : vector<16x1xf32>
    %180 = vector.broadcast %179 : vector<16x1xf32> to vector<16x32xf32>
    %181 = arith.mulf %176, %180 : vector<16x32xf32>
    %182 = vector.shape_cast %95 : vector<32xf32> to vector<1x32xf32>
    %183 = vector.broadcast %182 : vector<1x32xf32> to vector<16x32xf32>
    %184 = arith.mulf %181, %183 : vector<16x32xf32>
    %185 = vector.shape_cast %97 : vector<32xf32> to vector<1x32xf32>
    %186 = vector.broadcast %185 : vector<1x32xf32> to vector<16x32xf32>
    %187 = arith.addf %184, %186 : vector<16x32xf32>
    %c0_45 = arith.constant 0 : index
    %c0_46 = arith.constant 0 : index
    %c0_47 = arith.constant 0 : index
    %188 = vector.load %arg11[%c0_45, %c0_46, %c0_47] : memref<2x32x64xf32, #tpu.memory_space<vmem>>, vector<1x32x64xf32>
    %189 = vector.shape_cast %188 : vector<1x32x64xf32> to vector<32x64xf32>
    %cst_48 = arith.constant dense<0.000000e+00> : vector<16x64xf32>
    %190 = tpu.matmul %187, %189, %cst_48 {dimension_numbers = #tpu.dot_dimension_numbers<[1], [0], [0], [1], [0, 0, 1, 1], [], []>} : vector<16x32xf32>, vector<32x64xf32>, vector<16x64xf32> -> vector<16x64xf32>
    %191 = vector.shape_cast %91 : vector<64xf32> to vector<1x64xf32>
    %192 = vector.broadcast %191 : vector<1x64xf32> to vector<16x64xf32>
    %193 = arith.addf %190, %192 : vector<16x64xf32>
    %cst_49 = arith.constant 5.000000e-01 : f32
    %194 = vector.broadcast %cst_49 : f32 to vector<16x64xf32>
    %195 = arith.mulf %194, %193 : vector<16x64xf32>
    %196 = arith.mulf %193, %193 : vector<16x64xf32>
    %197 = arith.mulf %196, %193 : vector<16x64xf32>
    %cst_50 = arith.constant 4.471500e-02 : f32
    %198 = vector.broadcast %cst_50 : f32 to vector<16x64xf32>
    %199 = arith.mulf %198, %197 : vector<16x64xf32>
    %200 = arith.addf %193, %199 : vector<16x64xf32>
    %cst_51 = arith.constant 0.797884583 : f32
    %201 = vector.broadcast %cst_51 : f32 to vector<16x64xf32>
    %202 = arith.mulf %201, %200 : vector<16x64xf32>
    %203 = math.tanh %202 : vector<16x64xf32>
    %cst_52 = arith.constant 1.000000e+00 : f32
    %204 = vector.broadcast %cst_52 : f32 to vector<16x64xf32>
    %205 = arith.addf %204, %203 : vector<16x64xf32>
    %206 = arith.mulf %195, %205 : vector<16x64xf32>
    %c0_53 = arith.constant 0 : index
    %c0_54 = arith.constant 0 : index
    %c0_55 = arith.constant 0 : index
    %207 = vector.load %arg12[%c0_53, %c0_54, %c0_55] : memref<2x64x32xf32, #tpu.memory_space<vmem>>, vector<1x64x32xf32>
    %208 = vector.shape_cast %207 : vector<1x64x32xf32> to vector<64x32xf32>
    %cst_56 = arith.constant dense<0.000000e+00> : vector<16x32xf32>
    %209 = tpu.matmul %206, %208, %cst_56 {dimension_numbers = #tpu.dot_dimension_numbers<[1], [0], [0], [1], [0, 0, 1, 1], [], []>} : vector<16x64xf32>, vector<64x32xf32>, vector<16x32xf32> -> vector<16x32xf32>
    %210 = vector.shape_cast %93 : vector<32xf32> to vector<1x32xf32>
    %211 = vector.broadcast %210 : vector<1x32xf32> to vector<16x32xf32>
    %212 = arith.addf %209, %211 : vector<16x32xf32>
    %213 = arith.addf %212, %187 : vector<16x32xf32>
    %cst_57 = arith.constant dense<0.000000e+00> : vector<16xf32>
    %214 = vector.multi_reduction <add>, %213, %cst_57 [1] : vector<16x32xf32> to vector<16xf32>
    %215 = vector.shape_cast %214 : vector<16xf32> to vector<16x1xf32>
    %cst_58 = arith.constant 3.200000e+01 : f32
    %216 = vector.broadcast %cst_58 : f32 to vector<16x1xf32>
    %217 = arith.divf %215, %216 : vector<16x1xf32>
    %218 = vector.broadcast %217 : vector<16x1xf32> to vector<16x32xf32>
    %219 = arith.subf %213, %218 : vector<16x32xf32>
    %220 = arith.mulf %219, %219 : vector<16x32xf32>
    %cst_59 = arith.constant dense<0.000000e+00> : vector<16xf32>
    %221 = vector.multi_reduction <add>, %220, %cst_59 [1] : vector<16x32xf32> to vector<16xf32>
    %222 = vector.shape_cast %221 : vector<16xf32> to vector<16x1xf32>
    %cst_60 = arith.constant 3.200000e+01 : f32
    %223 = vector.broadcast %cst_60 : f32 to vector<16x1xf32>
    %224 = arith.divf %222, %223 : vector<16x1xf32>
    %225 = vector.broadcast %217 : vector<16x1xf32> to vector<16x32xf32>
    %226 = arith.subf %213, %225 : vector<16x32xf32>
    %cst_61 = arith.constant 9.99999996E-13 : f32
    %227 = vector.broadcast %cst_61 : f32 to vector<16x1xf32>
    %228 = arith.addf %224, %227 : vector<16x1xf32>
    %229 = math.rsqrt %228 : vector<16x1xf32>
    %230 = vector.broadcast %229 : vector<16x1xf32> to vector<16x32xf32>
    %231 = arith.mulf %226, %230 : vector<16x32xf32>
    %232 = vector.shape_cast %99 : vector<32xf32> to vector<1x32xf32>
    %233 = vector.broadcast %232 : vector<1x32xf32> to vector<16x32xf32>
    %234 = arith.mulf %231, %233 : vector<16x32xf32>
    %235 = vector.shape_cast %101 : vector<32xf32> to vector<1x32xf32>
    %236 = vector.broadcast %235 : vector<1x32xf32> to vector<16x32xf32>
    %237 = arith.addf %234, %236 : vector<16x32xf32>
    %c1 = arith.constant 1 : index
    %c0_62 = arith.constant 0 : index
    %c0_63 = arith.constant 0 : index
    %238 = vector.load %arg9[%c1, %c0_62, %c0_63] : memref<2x32x128xf32, #tpu.memory_space<vmem>>, vector<1x32x128xf32>
    %239 = vector.shape_cast %238 : vector<1x32x128xf32> to vector<32x128xf32>
    %c1_64 = arith.constant 1 : index
    %c0_65 = arith.constant 0 : index
    %c0_66 = arith.constant 0 : index
    %240 = vector.load %arg10[%c1_64, %c0_65, %c0_66] : memref<2x3x128xf32, #tpu.memory_space<vmem>>, vector<1x3x128xf32>
    %241 = vector.shape_cast %240 : vector<1x3x128xf32> to vector<3x128xf32>
    %242 = vector.extract_strided_slice %241 {offsets = [0, 0], sizes = [1, 96], strides = [1, 1]} : vector<3x128xf32> to vector<1x96xf32>
    %243 = vector.shape_cast %242 : vector<1x96xf32> to vector<96xf32>
    %244 = vector.extract_strided_slice %241 {offsets = [0, 96], sizes = [1, 32], strides = [1, 1]} : vector<3x128xf32> to vector<1x32xf32>
    %245 = vector.shape_cast %244 : vector<1x32xf32> to vector<32xf32>
    %246 = vector.extract_strided_slice %241 {offsets = [1, 0], sizes = [1, 64], strides = [1, 1]} : vector<3x128xf32> to vector<1x64xf32>
    %247 = vector.shape_cast %246 : vector<1x64xf32> to vector<64xf32>
    %248 = vector.extract_strided_slice %241 {offsets = [1, 64], sizes = [1, 32], strides = [1, 1]} : vector<3x128xf32> to vector<1x32xf32>
    %249 = vector.shape_cast %248 : vector<1x32xf32> to vector<32xf32>
    %250 = vector.extract_strided_slice %241 {offsets = [2, 0], sizes = [1, 32], strides = [1, 1]} : vector<3x128xf32> to vector<1x32xf32>
    %251 = vector.shape_cast %250 : vector<1x32xf32> to vector<32xf32>
    %252 = vector.extract_strided_slice %241 {offsets = [2, 32], sizes = [1, 32], strides = [1, 1]} : vector<3x128xf32> to vector<1x32xf32>
    %253 = vector.shape_cast %252 : vector<1x32xf32> to vector<32xf32>
    %254 = vector.extract_strided_slice %241 {offsets = [2, 64], sizes = [1, 32], strides = [1, 1]} : vector<3x128xf32> to vector<1x32xf32>
    %255 = vector.shape_cast %254 : vector<1x32xf32> to vector<32xf32>
    %256 = vector.extract_strided_slice %241 {offsets = [2, 96], sizes = [1, 32], strides = [1, 1]} : vector<3x128xf32> to vector<1x32xf32>
    %257 = vector.shape_cast %256 : vector<1x32xf32> to vector<32xf32>
    %258 = vector.extract_strided_slice %239 {offsets = [0, 0], sizes = [32, 96], strides = [1, 1]} : vector<32x128xf32> to vector<32x96xf32>
    %cst_67 = arith.constant dense<0.000000e+00> : vector<16x96xf32>
    %259 = tpu.matmul %237, %258, %cst_67 {dimension_numbers = #tpu.dot_dimension_numbers<[1], [0], [0], [1], [0, 0, 1, 1], [], []>} : vector<16x32xf32>, vector<32x96xf32>, vector<16x96xf32> -> vector<16x96xf32>
    %260 = vector.shape_cast %243 : vector<96xf32> to vector<1x96xf32>
    %261 = vector.broadcast %260 : vector<1x96xf32> to vector<16x96xf32>
    %262 = arith.addf %259, %261 : vector<16x96xf32>
    %263 = vector.extract_strided_slice %262 {offsets = [0, 0], sizes = [16, 8], strides = [1, 1]} : vector<16x96xf32> to vector<16x8xf32>
    %264 = vector.extract_strided_slice %262 {offsets = [0, 8], sizes = [16, 8], strides = [1, 1]} : vector<16x96xf32> to vector<16x8xf32>
    %265 = vector.extract_strided_slice %262 {offsets = [0, 16], sizes = [16, 8], strides = [1, 1]} : vector<16x96xf32> to vector<16x8xf32>
    %266 = vector.extract_strided_slice %262 {offsets = [0, 24], sizes = [16, 8], strides = [1, 1]} : vector<16x96xf32> to vector<16x8xf32>
    %267 = vector.shape_cast %263 : vector<16x8xf32> to vector<1x16x8xf32>
    %268 = vector.shape_cast %264 : vector<16x8xf32> to vector<1x16x8xf32>
    %269 = vector.shape_cast %265 : vector<16x8xf32> to vector<1x16x8xf32>
    %270 = vector.shape_cast %266 : vector<16x8xf32> to vector<1x16x8xf32>
    %271 = tpu.concatenate %267, %268, %269, %270 in 0 : vector<1x16x8xf32>, vector<1x16x8xf32>, vector<1x16x8xf32>, vector<1x16x8xf32> -> vector<4x16x8xf32>
    %272 = vector.extract_strided_slice %262 {offsets = [0, 32], sizes = [16, 8], strides = [1, 1]} : vector<16x96xf32> to vector<16x8xf32>
    %273 = vector.extract_strided_slice %262 {offsets = [0, 40], sizes = [16, 8], strides = [1, 1]} : vector<16x96xf32> to vector<16x8xf32>
    %274 = vector.extract_strided_slice %262 {offsets = [0, 48], sizes = [16, 8], strides = [1, 1]} : vector<16x96xf32> to vector<16x8xf32>
    %275 = vector.extract_strided_slice %262 {offsets = [0, 56], sizes = [16, 8], strides = [1, 1]} : vector<16x96xf32> to vector<16x8xf32>
    %276 = vector.shape_cast %272 : vector<16x8xf32> to vector<1x16x8xf32>
    %277 = vector.shape_cast %273 : vector<16x8xf32> to vector<1x16x8xf32>
    %278 = vector.shape_cast %274 : vector<16x8xf32> to vector<1x16x8xf32>
    %279 = vector.shape_cast %275 : vector<16x8xf32> to vector<1x16x8xf32>
    %280 = tpu.concatenate %276, %277, %278, %279 in 0 : vector<1x16x8xf32>, vector<1x16x8xf32>, vector<1x16x8xf32>, vector<1x16x8xf32> -> vector<4x16x8xf32>
    %281 = vector.extract_strided_slice %262 {offsets = [0, 64], sizes = [16, 8], strides = [1, 1]} : vector<16x96xf32> to vector<16x8xf32>
    %282 = vector.extract_strided_slice %262 {offsets = [0, 72], sizes = [16, 8], strides = [1, 1]} : vector<16x96xf32> to vector<16x8xf32>
    %283 = vector.extract_strided_slice %262 {offsets = [0, 80], sizes = [16, 8], strides = [1, 1]} : vector<16x96xf32> to vector<16x8xf32>
    %284 = vector.extract_strided_slice %262 {offsets = [0, 88], sizes = [16, 8], strides = [1, 1]} : vector<16x96xf32> to vector<16x8xf32>
    %285 = vector.shape_cast %281 : vector<16x8xf32> to vector<1x16x8xf32>
    %286 = vector.shape_cast %282 : vector<16x8xf32> to vector<1x16x8xf32>
    %287 = vector.shape_cast %283 : vector<16x8xf32> to vector<1x16x8xf32>
    %288 = vector.shape_cast %284 : vector<16x8xf32> to vector<1x16x8xf32>
    %289 = tpu.concatenate %285, %286, %287, %288 in 0 : vector<1x16x8xf32>, vector<1x16x8xf32>, vector<1x16x8xf32>, vector<1x16x8xf32> -> vector<4x16x8xf32>
    "tpu.trace_start"() <{level = 10 : i32, message = "hld,hmd->hlm"}> : () -> ()
    %cst_68 = arith.constant dense<0.000000e+00> : vector<4x16x16xf32>
    %290 = tpu.matmul %271, %280, %cst_68 {dimension_numbers = #tpu.dot_dimension_numbers<[2], [2], [1], [1], [0, 0, 0, 1, 1, 1], [0], [0]>} : vector<4x16x8xf32>, vector<4x16x8xf32>, vector<4x16x16xf32> -> vector<4x16x16xf32>
    "tpu.trace_stop"() : () -> ()
    %291 = vector.shape_cast %81 : vector<16x16xf32> to vector<1x16x16xf32>
    %292 = vector.broadcast %291 : vector<1x16x16xf32> to vector<4x16x16xf32>
    %293 = arith.addf %290, %292 : vector<4x16x16xf32>
    %cst_69 = arith.constant dense<0xFF800000> : vector<4x16xf32>
    %294 = vector.multi_reduction <maximumf>, %293, %cst_69 [2] : vector<4x16x16xf32> to vector<4x16xf32>
    %295 = vector.shape_cast %294 : vector<4x16xf32> to vector<4x16x1xf32>
    %296 = vector.broadcast %295 : vector<4x16x1xf32> to vector<4x16x16xf32>
    %297 = arith.subf %293, %296 : vector<4x16x16xf32>
    %298 = math.exp %297 : vector<4x16x16xf32>
    %cst_70 = arith.constant dense<0.000000e+00> : vector<4x16xf32>
    %299 = vector.multi_reduction <add>, %298, %cst_70 [2] : vector<4x16x16xf32> to vector<4x16xf32>
    %300 = vector.shape_cast %299 : vector<4x16xf32> to vector<4x16x1xf32>
    %301 = tpu.reciprocal %300 {approx = true} : vector<4x16x1xf32> -> vector<4x16x1xf32>
    %302 = vector.broadcast %301 : vector<4x16x1xf32> to vector<4x16x16xf32>
    %303 = arith.mulf %298, %302 : vector<4x16x16xf32>
    "tpu.trace_start"() <{level = 10 : i32, message = "hlm,hmd->hld"}> : () -> ()
    %cst_71 = arith.constant dense<0.000000e+00> : vector<4x16x8xf32>
    %304 = tpu.matmul %303, %289, %cst_71 {dimension_numbers = #tpu.dot_dimension_numbers<[2], [1], [1], [2], [0, 0, 0, 1, 1, 2], [0], [0]>} : vector<4x16x16xf32>, vector<4x16x8xf32>, vector<4x16x8xf32> -> vector<4x16x8xf32>
    "tpu.trace_stop"() : () -> ()
    %305 = vector.extract_strided_slice %304 {offsets = [0, 0, 0], sizes = [1, 16, 8], strides = [1, 1, 1]} : vector<4x16x8xf32> to vector<1x16x8xf32>
    %306 = vector.shape_cast %305 : vector<1x16x8xf32> to vector<16x8xf32>
    %307 = vector.extract_strided_slice %304 {offsets = [1, 0, 0], sizes = [1, 16, 8], strides = [1, 1, 1]} : vector<4x16x8xf32> to vector<1x16x8xf32>
    %308 = vector.shape_cast %307 : vector<1x16x8xf32> to vector<16x8xf32>
    %309 = vector.extract_strided_slice %304 {offsets = [2, 0, 0], sizes = [1, 16, 8], strides = [1, 1, 1]} : vector<4x16x8xf32> to vector<1x16x8xf32>
    %310 = vector.shape_cast %309 : vector<1x16x8xf32> to vector<16x8xf32>
    %311 = vector.extract_strided_slice %304 {offsets = [3, 0, 0], sizes = [1, 16, 8], strides = [1, 1, 1]} : vector<4x16x8xf32> to vector<1x16x8xf32>
    %312 = vector.shape_cast %311 : vector<1x16x8xf32> to vector<16x8xf32>
    %313 = tpu.concatenate %306, %308, %310, %312 in 1 : vector<16x8xf32>, vector<16x8xf32>, vector<16x8xf32>, vector<16x8xf32> -> vector<16x32xf32>
    %314 = vector.extract_strided_slice %239 {offsets = [0, 96], sizes = [32, 32], strides = [1, 1]} : vector<32x128xf32> to vector<32x32xf32>
    %cst_72 = arith.constant dense<0.000000e+00> : vector<16x32xf32>
    %315 = tpu.matmul %313, %314, %cst_72 {dimension_numbers = #tpu.dot_dimension_numbers<[1], [0], [0], [1], [0, 0, 1, 1], [], []>} : vector<16x32xf32>, vector<32x32xf32>, vector<16x32xf32> -> vector<16x32xf32>
    %316 = vector.shape_cast %245 : vector<32xf32> to vector<1x32xf32>
    %317 = vector.broadcast %316 : vector<1x32xf32> to vector<16x32xf32>
    %318 = arith.addf %315, %317 : vector<16x32xf32>
    %319 = arith.addf %318, %237 : vector<16x32xf32>
    %cst_73 = arith.constant dense<0.000000e+00> : vector<16xf32>
    %320 = vector.multi_reduction <add>, %319, %cst_73 [1] : vector<16x32xf32> to vector<16xf32>
    %321 = vector.shape_cast %320 : vector<16xf32> to vector<16x1xf32>
    %cst_74 = arith.constant 3.200000e+01 : f32
    %322 = vector.broadcast %cst_74 : f32 to vector<16x1xf32>
    %323 = arith.divf %321, %322 : vector<16x1xf32>
    %324 = vector.broadcast %323 : vector<16x1xf32> to vector<16x32xf32>
    %325 = arith.subf %319, %324 : vector<16x32xf32>
    %326 = arith.mulf %325, %325 : vector<16x32xf32>
    %cst_75 = arith.constant dense<0.000000e+00> : vector<16xf32>
    %327 = vector.multi_reduction <add>, %326, %cst_75 [1] : vector<16x32xf32> to vector<16xf32>
    %328 = vector.shape_cast %327 : vector<16xf32> to vector<16x1xf32>
    %cst_76 = arith.constant 3.200000e+01 : f32
    %329 = vector.broadcast %cst_76 : f32 to vector<16x1xf32>
    %330 = arith.divf %328, %329 : vector<16x1xf32>
    %331 = vector.broadcast %323 : vector<16x1xf32> to vector<16x32xf32>
    %332 = arith.subf %319, %331 : vector<16x32xf32>
    %cst_77 = arith.constant 9.99999996E-13 : f32
    %333 = vector.broadcast %cst_77 : f32 to vector<16x1xf32>
    %334 = arith.addf %330, %333 : vector<16x1xf32>
    %335 = math.rsqrt %334 : vector<16x1xf32>
    %336 = vector.broadcast %335 : vector<16x1xf32> to vector<16x32xf32>
    %337 = arith.mulf %332, %336 : vector<16x32xf32>
    %338 = vector.shape_cast %251 : vector<32xf32> to vector<1x32xf32>
    %339 = vector.broadcast %338 : vector<1x32xf32> to vector<16x32xf32>
    %340 = arith.mulf %337, %339 : vector<16x32xf32>
    %341 = vector.shape_cast %253 : vector<32xf32> to vector<1x32xf32>
    %342 = vector.broadcast %341 : vector<1x32xf32> to vector<16x32xf32>
    %343 = arith.addf %340, %342 : vector<16x32xf32>
    %c1_78 = arith.constant 1 : index
    %c0_79 = arith.constant 0 : index
    %c0_80 = arith.constant 0 : index
    %344 = vector.load %arg11[%c1_78, %c0_79, %c0_80] : memref<2x32x64xf32, #tpu.memory_space<vmem>>, vector<1x32x64xf32>
    %345 = vector.shape_cast %344 : vector<1x32x64xf32> to vector<32x64xf32>
    %cst_81 = arith.constant dense<0.000000e+00> : vector<16x64xf32>
    %346 = tpu.matmul %343, %345, %cst_81 {dimension_numbers = #tpu.dot_dimension_numbers<[1], [0], [0], [1], [0, 0, 1, 1], [], []>} : vector<16x32xf32>, vector<32x64xf32>, vector<16x64xf32> -> vector<16x64xf32>
    %347 = vector.shape_cast %247 : vector<64xf32> to vector<1x64xf32>
    %348 = vector.broadcast %347 : vector<1x64xf32> to vector<16x64xf32>
    %349 = arith.addf %346, %348 : vector<16x64xf32>
    %cst_82 = arith.constant 5.000000e-01 : f32
    %350 = vector.broadcast %cst_82 : f32 to vector<16x64xf32>
    %351 = arith.mulf %350, %349 : vector<16x64xf32>
    %352 = arith.mulf %349, %349 : vector<16x64xf32>
    %353 = arith.mulf %352, %349 : vector<16x64xf32>
    %cst_83 = arith.constant 4.471500e-02 : f32
    %354 = vector.broadcast %cst_83 : f32 to vector<16x64xf32>
    %355 = arith.mulf %354, %353 : vector<16x64xf32>
    %356 = arith.addf %349, %355 : vector<16x64xf32>
    %cst_84 = arith.constant 0.797884583 : f32
    %357 = vector.broadcast %cst_84 : f32 to vector<16x64xf32>
    %358 = arith.mulf %357, %356 : vector<16x64xf32>
    %359 = math.tanh %358 : vector<16x64xf32>
    %cst_85 = arith.constant 1.000000e+00 : f32
    %360 = vector.broadcast %cst_85 : f32 to vector<16x64xf32>
    %361 = arith.addf %360, %359 : vector<16x64xf32>
    %362 = arith.mulf %351, %361 : vector<16x64xf32>
    %c1_86 = arith.constant 1 : index
    %c0_87 = arith.constant 0 : index
    %c0_88 = arith.constant 0 : index
    %363 = vector.load %arg12[%c1_86, %c0_87, %c0_88] : memref<2x64x32xf32, #tpu.memory_space<vmem>>, vector<1x64x32xf32>
    %364 = vector.shape_cast %363 : vector<1x64x32xf32> to vector<64x32xf32>
    %cst_89 = arith.constant dense<0.000000e+00> : vector<16x32xf32>
    %365 = tpu.matmul %362, %364, %cst_89 {dimension_numbers = #tpu.dot_dimension_numbers<[1], [0], [0], [1], [0, 0, 1, 1], [], []>} : vector<16x64xf32>, vector<64x32xf32>, vector<16x32xf32> -> vector<16x32xf32>
    %366 = vector.shape_cast %249 : vector<32xf32> to vector<1x32xf32>
    %367 = vector.broadcast %366 : vector<1x32xf32> to vector<16x32xf32>
    %368 = arith.addf %365, %367 : vector<16x32xf32>
    %369 = arith.addf %368, %343 : vector<16x32xf32>
    %cst_90 = arith.constant dense<0.000000e+00> : vector<16xf32>
    %370 = vector.multi_reduction <add>, %369, %cst_90 [1] : vector<16x32xf32> to vector<16xf32>
    %371 = vector.shape_cast %370 : vector<16xf32> to vector<16x1xf32>
    %cst_91 = arith.constant 3.200000e+01 : f32
    %372 = vector.broadcast %cst_91 : f32 to vector<16x1xf32>
    %373 = arith.divf %371, %372 : vector<16x1xf32>
    %374 = vector.broadcast %373 : vector<16x1xf32> to vector<16x32xf32>
    %375 = arith.subf %369, %374 : vector<16x32xf32>
    %376 = arith.mulf %375, %375 : vector<16x32xf32>
    %cst_92 = arith.constant dense<0.000000e+00> : vector<16xf32>
    %377 = vector.multi_reduction <add>, %376, %cst_92 [1] : vector<16x32xf32> to vector<16xf32>
    %378 = vector.shape_cast %377 : vector<16xf32> to vector<16x1xf32>
    %cst_93 = arith.constant 3.200000e+01 : f32
    %379 = vector.broadcast %cst_93 : f32 to vector<16x1xf32>
    %380 = arith.divf %378, %379 : vector<16x1xf32>
    %381 = vector.broadcast %373 : vector<16x1xf32> to vector<16x32xf32>
    %382 = arith.subf %369, %381 : vector<16x32xf32>
    %cst_94 = arith.constant 9.99999996E-13 : f32
    %383 = vector.broadcast %cst_94 : f32 to vector<16x1xf32>
    %384 = arith.addf %380, %383 : vector<16x1xf32>
    %385 = math.rsqrt %384 : vector<16x1xf32>
    %386 = vector.broadcast %385 : vector<16x1xf32> to vector<16x32xf32>
    %387 = arith.mulf %382, %386 : vector<16x32xf32>
    %388 = vector.shape_cast %255 : vector<32xf32> to vector<1x32xf32>
    %389 = vector.broadcast %388 : vector<1x32xf32> to vector<16x32xf32>
    %390 = arith.mulf %387, %389 : vector<16x32xf32>
    %391 = vector.shape_cast %257 : vector<32xf32> to vector<1x32xf32>
    %392 = vector.broadcast %391 : vector<1x32xf32> to vector<16x32xf32>
    %393 = arith.addf %390, %392 : vector<16x32xf32>
    %c0_95 = arith.constant 0 : index
    %c0_96 = arith.constant 0 : index
    %394 = vector.load %arg13[%c0_95, %c0_96] : memref<32x32xf32, #tpu.memory_space<vmem>>, vector<32x32xf32>
    %cst_97 = arith.constant dense<0.000000e+00> : vector<16x32xf32>
    %395 = tpu.matmul %393, %394, %cst_97 {dimension_numbers = #tpu.dot_dimension_numbers<[1], [0], [0], [1], [0, 0, 1, 1], [], []>} : vector<16x32xf32>, vector<32x32xf32>, vector<16x32xf32> -> vector<16x32xf32>
    %396 = vector.shape_cast %12 : vector<32xf32> to vector<1x32xf32>
    %397 = vector.broadcast %396 : vector<1x32xf32> to vector<16x32xf32>
    %398 = arith.addf %395, %397 : vector<16x32xf32>
    %399 = math.tanh %398 : vector<16x32xf32>
    %c0_98 = arith.constant 0 : index
    %c0_99 = arith.constant 0 : index
    %400 = vector.load %arg14[%c0_98, %c0_99] : memref<32x128xf32, #tpu.memory_space<vmem>>, vector<32x128xf32>
    %cst_100 = arith.constant dense<0.000000e+00> : vector<16x128xf32>
    %401 = tpu.matmul %399, %400, %cst_100 {dimension_numbers = #tpu.dot_dimension_numbers<[1], [0], [0], [1], [0, 0, 1, 1], [], []>} : vector<16x32xf32>, vector<32x128xf32>, vector<16x128xf32> -> vector<16x128xf32>
    %402 = vector.shape_cast %16 : vector<128xf32> to vector<1x128xf32>
    %403 = vector.broadcast %402 : vector<1x128xf32> to vector<16x128xf32>
    %404 = arith.addf %401, %403 : vector<16x128xf32>
    %c0_101 = arith.constant 0 : index
    %c0_102 = arith.constant 0 : index
    %405 = vector.load %arg15[%c0_101, %c0_102] : memref<16x128xf32, #tpu.memory_space<vmem>>, vector<16x128xf32>
    tpu.vector_store %arg15[%c0_101, %c0_102], %404 {strides = array<i32>} : memref<16x128xf32, #tpu.memory_space<vmem>>, vector<16x128xf32>,
    return
  }
}

</mosaic_0001>

<llo_original>
// kernel: tpu_custom_call.1
$region0: #{tpu_custom_call.1}
  #allocation0 [shape = 'u32[]', space=smem, size = 0x4, offset = 0x4, fixed_abs, tag = 'smem constant byte address 0x4 - core index']
  #allocation1 [shape = 'u32[144,128]{1,0:T(1,128)}', space=vmem, size = 0x12000, scoped, tag = 'internal scratch']
  %s0 = inlined_call_operand.hbm [shape: f32[2,32], index: 0, kind: input, shape index: {}]
  %s1 = inlined_call_operand.vmem [shape: f32[16,16], index: 1, kind: input, shape index: {}]
  %s2 = inlined_call_operand.hbm [shape: f32[8,32], index: 2, kind: input, shape index: {}]
  %s3 = inlined_call_operand.vmem [shape: f32[16,16], index: 3, kind: input, shape index: {}]
  %s4 = inlined_call_operand.vmem [shape: f32[32,128], index: 4, kind: input, shape index: {}]
  %s5 = inlined_call_operand.vmem [shape: f32[128,32], index: 5, kind: input, shape index: {}]
  %s6 = inlined_call_operand.hbm [shape: f32[16,32], index: 6, kind: input, shape index: {}]
  %s7 = inlined_call_operand.vmem [shape: f32[32,32], index: 7, kind: input, shape index: {}]
  %s8 = inlined_call_operand.vmem [shape: f32[4,128], index: 8, kind: input, shape index: {}]
  %s9 = inlined_call_operand.vmem [shape: f32[2,32,128], index: 9, kind: input, shape index: {}]
  %s10 = inlined_call_operand.vmem [shape: f32[2,3,128], index: 10, kind: input, shape index: {}]
  %s11 = inlined_call_operand.vmem [shape: f32[2,32,64], index: 11, kind: input, shape index: {}]
  %s12 = inlined_call_operand.vmem [shape: f32[2,64,32], index: 12, kind: input, shape index: {}]
  %s13 = inlined_call_operand.vmem [shape: f32[32,32], index: 13, kind: input, shape index: {}]
  %s14 = inlined_call_operand.vmem [shape: f32[32,128], index: 14, kind: input, shape index: {}]
  %s15 = inlined_call_operand.hbm [shape: f32[16,128], index: 15, kind: output, shape index: {}]
  %s16 = sld [smem:[#allocation0]]
  $region82: #{tpu_custom_call.1} parent=0
    _
  %s18 = ssub.s32 1, %s16
  %s19 = scalar_select 0, %s18, %s16
  $region1: #{tpu_custom_call.1} parent=0
    #allocation2 [shape = 'u8[1024]{0}', space=vmem, size = 0x400, scoped, tag = 'input window, operand 0, single buffered']
    #allocation3 [shape = 's32[1]{0}', space=sflag, size = 0x4, scoped, tag = 'scoped memory for tpu_custom_call.1']
    #allocation4 [shape = 's32[1]{0}', space=sflag, size = 0x4, scoped, tag = 'scoped memory for tpu_custom_call.1']
    #allocation5 [shape = 'u8[4096]{0}', space=vmem, size = 0x1000, scoped, tag = 'input window, operand 2, single buffered']
    #allocation6 [shape = 's32[1]{0}', space=sflag, size = 0x4, scoped, tag = 'scoped memory for tpu_custom_call.1']
    #allocation7 [shape = 'u8[8192]{0}', space=vmem, size = 0x2000, scoped, tag = 'input window, operand 6, single buffered']
    #allocation8 [shape = 'u8[8192]{0}', space=vmem, size = 0x2000, scoped, tag = 'output window, operand 0, single buffered']
    %20 = vsyncpa [#allocation3], 0
    %21 = vsyncpa [#allocation6], 0
    %22 = vsyncpa [#allocation4], 0
    // Predicated region
    $region2: #{tpu_custom_call.1} parent=1 // pred_check
      _
    $region3: #{tpu_custom_call.1} parent=1 // pred_check_branch
      %24 = sbr.rel (0) target = $region5
    $region4: #{tpu_custom_call.1} parent=1 // pred_region
      %s26 = ssub.s32 32, 32
      %27 = vsyncadd [#allocation3], %s26
      %s29 = sshll.u32 [#allocation2], 4
      %s30 = int_to_ptr.vmem [resolvable:$true] %s29
      %32 = dma.hbm_to_vmem [thread:$0]  %s0, 32, %s30, [#allocation3]
    $region5: #{tpu_custom_call.1} parent=1 // pred_fallthru
      _
    // Predicated region
    $region6: #{tpu_custom_call.1} parent=1 // pred_check
      _
    $region7: #{tpu_custom_call.1} parent=1 // pred_check_branch
      %34 = sbr.rel (0) target = $region9
    $region8: #{tpu_custom_call.1} parent=1 // pred_region
      _
    $region9: #{tpu_custom_call.1} parent=1 // pred_fallthru
      _
    // Predicated region
    $region10: #{tpu_custom_call.1} parent=1 // pred_check
      _
    $region11: #{tpu_custom_call.1} parent=1 // pred_check_branch
      %36 = sbr.rel (0) target = $region13
    $region12: #{tpu_custom_call.1} parent=1 // pred_region
      %s38 = ssub.s32 128, 128
      %39 = vsyncadd [#allocation6], %s38
      %s41 = sshll.u32 [#allocation5], 4
      %s42 = int_to_ptr.vmem [resolvable:$true] %s41
      %44 = dma.hbm_to_vmem [thread:$0]  %s2, 128, %s42, [#allocation6]
    $region13: #{tpu_custom_call.1} parent=1 // pred_fallthru
      _
    // Predicated region
    $region14: #{tpu_custom_call.1} parent=1 // pred_check
      _
    $region15: #{tpu_custom_call.1} parent=1 // pred_check_branch
      %46 = sbr.rel (0) target = $region17
    $region16: #{tpu_custom_call.1} parent=1 // pred_region
      _
    $region17: #{tpu_custom_call.1} parent=1 // pred_fallthru
      _
    // Predicated region
    $region18: #{tpu_custom_call.1} parent=1 // pred_check
      _
    $region19: #{tpu_custom_call.1} parent=1 // pred_check_branch
      %48 = sbr.rel (0) target = $region21
    $region20: #{tpu_custom_call.1} parent=1 // pred_region
      _
    $region21: #{tpu_custom_call.1} parent=1 // pred_fallthru
      _
    // Predicated region
    $region22: #{tpu_custom_call.1} parent=1 // pred_check
      _
    $region23: #{tpu_custom_call.1} parent=1 // pred_check_branch
      %50 = sbr.rel (0) target = $region25
    $region24: #{tpu_custom_call.1} parent=1 // pred_region
      _
    $region25: #{tpu_custom_call.1} parent=1 // pred_fallthru
      _
    // Predicated region
    $region26: #{tpu_custom_call.1} parent=1 // pred_check
      _
    $region27: #{tpu_custom_call.1} parent=1 // pred_check_branch
      %52 = sbr.rel (0) target = $region29
    $region28: #{tpu_custom_call.1} parent=1 // pred_region
      %s54 = ssub.s32 256, 256
      %55 = vsyncadd [#allocation6], %s54
      %s56 = sshll.u32 [#allocation7], 4
      %s57 = int_to_ptr.vmem [resolvable:$true] %s56
      %62 = dma.hbm_to_vmem [thread:$0]  %s6, 256, %s57, [#allocation6], 128, 128, 8
    $region29: #{tpu_custom_call.1} parent=1 // pred_fallthru
      _
    // Predicated region
    $region30: #{tpu_custom_call.1} parent=1 // pred_check
      _
    $region31: #{tpu_custom_call.1} parent=1 // pred_check_branch
      %64 = sbr.rel (0) target = $region33
    $region32: #{tpu_custom_call.1} parent=1 // pred_region
      _
    $region33: #{tpu_custom_call.1} parent=1 // pred_fallthru
      _
    // Predicated region
    $region34: #{tpu_custom_call.1} parent=1 // pred_check
      _
    $region35: #{tpu_custom_call.1} parent=1 // pred_check_branch
      %66 = sbr.rel (0) target = $region37
    $region36: #{tpu_custom_call.1} parent=1 // pred_region
      _
    $region37: #{tpu_custom_call.1} parent=1 // pred_fallthru
      _
    // Predicated region
    $region38: #{tpu_custom_call.1} parent=1 // pred_check
      _
    $region39: #{tpu_custom_call.1} parent=1 // pred_check_branch
      %68 = sbr.rel (0) target = $region41
    $region40: #{tpu_custom_call.1} parent=1 // pred_region
      _
    $region41: #{tpu_custom_call.1} parent=1 // pred_fallthru
      _
    // Predicated region
    $region42: #{tpu_custom_call.1} parent=1 // pred_check
      _
    $region43: #{tpu_custom_call.1} parent=1 // pred_check_branch
      %70 = sbr.rel (0) target = $region45
    $region44: #{tpu_custom_call.1} parent=1 // pred_region
      _
    $region45: #{tpu_custom_call.1} parent=1 // pred_fallthru
      _
    // Predicated region
    $region46: #{tpu_custom_call.1} parent=1 // pred_check
      _
    $region47: #{tpu_custom_call.1} parent=1 // pred_check_branch
      %72 = sbr.rel (0) target = $region49
    $region48: #{tpu_custom_call.1} parent=1 // pred_region
      _
    $region49: #{tpu_custom_call.1} parent=1 // pred_fallthru
      _
    // Predicated region
    $region50: #{tpu_custom_call.1} parent=1 // pred_check
      _
    $region51: #{tpu_custom_call.1} parent=1 // pred_check_branch
      %74 = sbr.rel (0) target = $region53
    $region52: #{tpu_custom_call.1} parent=1 // pred_region
      _
    $region53: #{tpu_custom_call.1} parent=1 // pred_fallthru
      _
    // Predicated region
    $region54: #{tpu_custom_call.1} parent=1 // pred_check
      _
    $region55: #{tpu_custom_call.1} parent=1 // pred_check_branch
      %76 = sbr.rel (0) target = $region57
    $region56: #{tpu_custom_call.1} parent=1 // pred_region
      _
    $region57: #{tpu_custom_call.1} parent=1 // pred_fallthru
      _
    // Predicated region
    $region58: #{tpu_custom_call.1} parent=1 // pred_check
      _
    $region59: #{tpu_custom_call.1} parent=1 // pred_check_branch
      %78 = sbr.rel (0) target = $region61
    $region60: #{tpu_custom_call.1} parent=1 // pred_region
      _
    $region61: #{tpu_custom_call.1} parent=1 // pred_fallthru
      _
    // Predicated region
    $region62: #{tpu_custom_call.1} parent=1 // pred_check
      _
    $region63: #{tpu_custom_call.1} parent=1 // pred_check_branch
      %80 = sbr.rel (0) target = $region65
    $region64: #{tpu_custom_call.1} parent=1 // pred_region
      %81 = dma.done [#allocation3], 32
    $region65: #{tpu_custom_call.1} parent=1 // pred_fallthru
      _
    // Predicated region
    $region66: #{tpu_custom_call.1} parent=1 // pred_check
      _
    $region67: #{tpu_custom_call.1} parent=1 // pred_check_branch
      %83 = sbr.rel (0) target = $region69
    $region68: #{tpu_custom_call.1} parent=1 // pred_region
      %84 = dma.done [#allocation6], 128
    $region69: #{tpu_custom_call.1} parent=1 // pred_fallthru
      _
    // Predicated region
    $region70: #{tpu_custom_call.1} parent=1 // pred_check
      _
    $region71: #{tpu_custom_call.1} parent=1 // pred_check_branch
      %86 = sbr.rel (0) target = $region73
    $region72: #{tpu_custom_call.1} parent=1 // pred_region
      %87 = dma.done [#allocation6], 256
    $region73: #{tpu_custom_call.1} parent=1 // pred_fallthru
      _
    %v88 = vld [vmem:[%s8] sm:$0xf]
    %v89 = vld [vmem:[#allocation2] sm:$0x3]
    %v90 = vld [vmem:[%s4] sm:$0xff]
    %v91 = vld [vmem:[%s4 + $0x8] sm:$0xff]
    %v92 = vld [vmem:[%s4 + $0x10] sm:$0xff]
    %v93 = vld [vmem:[%s4 + $0x18] sm:$0xff]
    %v94 = vlaneseq
    %v95 = vshrl.u32 %v94, 7
    %v96 = vsub.s32 2, %v95
    %v97 = vrot.slane %v88, %v96
    %vm98 = vcmask 261120
    %v100 = vsel %vm98, %v89, 0
    %102 = vmatprep.subr.mxu0 0.0
    %103 = vmatpush1.msra.mxu0 %v90
    %104 = vmatprep.subr.mxu0 0.0
    %105 = vmatpush1.msra.mxu0 %v91
    %106 = vmatprep.subr.mxu0 0.0
    %107 = vmatpush1.msra.mxu0 %v92
    %108 = vmatprep.subr.mxu0 0.0
    %109 = vmatpush1.msra.mxu0 %v93
    %110 = vmatprep.subr.mxu0 0.0
    %111 = vmatpush1.msra.mxu0 0.0
    %112 = vmatprep.subr.mxu0 0.0
    %113 = vmatpush1.msra.mxu0 0.0
    %114 = vmatprep.subr.mxu0 0.0
    %115 = vmatpush1.msra.mxu0 0.0
    %116 = vmatprep.subr.mxu0 0.0
    %117 = vmatpush1.msra.mxu0 0.0
    %118 = vmatprep.subr.mxu0 0.0
    %119 = vmatpush1.msra.mxu0 0.0
    %120 = vmatprep.subr.mxu0 0.0
    %121 = vmatpush1.msra.mxu0 0.0
    %122 = vmatprep.subr.mxu0 0.0
    %123 = vmatpush1.msra.mxu0 0.0
    %124 = vmatprep.subr.mxu0 0.0
    %125 = vmatpush1.msra.mxu0 0.0
    %126 = vmatprep.subr.mxu0 0.0
    %127 = vmatpush1.msra.mxu0 0.0
    %128 = vmatprep.subr.mxu0 0.0
    %129 = vmatpush1.msra.mxu0 0.0
    %130 = vmatprep.subr.mxu0 0.0
    %131 = vmatpush1.msra.mxu0 0.0
    %132 = vmatprep.subr.mxu0 0.0
    %133 = vmatpush1.msra.mxu0 0.0
    %134 = vmatprep.subr.mxu0 0.0
    %135 = vmatpush1.msra.mxu0 0.0
    %136 = vmatprep.subr.mxu0 0.0
    %137 = vmatpush1.msra.mxu0 0.0
    %138 = vmatprep.subr.mxu0 0.0
    %139 = vmatpush1.msra.mxu0 0.0
    %140 = vmatprep.subr.mxu0 0.0
    %141 = vmatpush1.msra.mxu0 0.0
    %142 = vmatprep.subr.mxu0 0.0
    %143 = vmatpush1.msra.mxu0 0.0
    %144 = vmatprep.subr.mxu0 0.0
    %145 = vmatpush1.msra.mxu0 0.0
    %146 = vmatprep.subr.mxu0 0.0
    %147 = vmatpush1.msra.mxu0 0.0
    %148 = vmatprep.subr.mxu0 0.0
    %149 = vmatpush1.msra.mxu0 0.0
    %150 = vmatprep.subr.mxu0 0.0
    %151 = vmatpush1.msra.mxu0 0.0
    %152 = vmatprep.subr.mxu0 0.0
    %153 = vmatpush1.msra.mxu0 0.0
    %154 = vmatprep.subr.mxu0 0.0
    %155 = vmatpush1.msra.mxu0 0.0
    %156 = vmatprep.subr.mxu0 0.0
    %157 = vmatpush1.msra.mxu0 0.0
    %158 = vmatprep.subr.mxu0 0.0
    %159 = vmatpush1.msra.mxu0 0.0
    %160 = vmatprep.subr.mxu0 0.0
    %161 = vmatpush1.msra.mxu0 0.0
    %162 = vmatprep.subr.mxu0 0.0
    %163 = vmatpush1.msra.mxu0 0.0
    %164 = vmatprep.subr.mxu0 0.0
    %165 = vmatpush1.msra.mxu0 0.0
    %166 = vmatprep.mubr.f32.mxu0 0.0
    %167 = vmatmul.mubr.f32.gmra.mrb[0].mxu0 %v100
    %v168 = vpop.f32.mrb[0].mxu0
    %v169 = vadd.f32 %v97, %v168
    %v170 = vpop.f32.mrb[0].mxu0
    %171 = vdwg.mxu0
    %v172 = vmul.f32 %v169, 0.5
    %v173 = vtanh.pop %v172
    %v174 = vadd.f32 %v173, 1.0
    %v175 = vmul.f32 %v174, 0.5
    %v176 = vmul.f32 %v169, %v175
    %v177 = vld [vmem:[%s5] sm:$0xff]
    %v178 = vld [vmem:[%s5 + $0x8] sm:$0xff]
    %v179 = vld [vmem:[%s5 + $0x10] sm:$0xff]
    %v180 = vld [vmem:[%s5 + $0x18] sm:$0xff]
    %v181 = vld [vmem:[%s5 + $0x20] sm:$0xff]
    %v182 = vld [vmem:[%s5 + $0x28] sm:$0xff]
    %v183 = vld [vmem:[%s5 + $0x30] sm:$0xff]
    %v184 = vld [vmem:[%s5 + $0x38] sm:$0xff]
    %v185 = vld [vmem:[%s5 + $0x40] sm:$0xff]
    %v186 = vld [vmem:[%s5 + $0x48] sm:$0xff]
    %v187 = vld [vmem:[%s5 + $0x50] sm:$0xff]
    %v188 = vld [vmem:[%s5 + $0x58] sm:$0xff]
    %v189 = vld [vmem:[%s5 + $0x60] sm:$0xff]
    %v190 = vld [vmem:[%s5 + $0x68] sm:$0xff]
    %v191 = vld [vmem:[%s5 + $0x70] sm:$0xff]
    %v192 = vld [vmem:[%s5 + $0x78] sm:$0xff]
    %v193 = vlaneseq
    %v194 = vshrl.u32 %v193, 7
    %v195 = vsub.s32 0, %v194
    %v196 = vrot.slane %v88, %v195
    %197 = vmatprep.subr.mxu0 0.0
    %198 = vmatpush1.msra.mxu0 %v177
    %199 = vmatprep.subr.mxu0 0.0
    %200 = vmatpush1.msra.mxu0 %v178
    %201 = vmatprep.subr.mxu0 0.0
    %202 = vmatpush1.msra.mxu0 %v179
    %203 = vmatprep.subr.mxu0 0.0
    %204 = vmatpush1.msra.mxu0 %v180
    %205 = vmatprep.subr.mxu0 0.0
    %206 = vmatpush1.msra.mxu0 %v181
    %207 = vmatprep.subr.mxu0 0.0
    %208 = vmatpush1.msra.mxu0 %v182
    %209 = vmatprep.subr.mxu0 0.0
    %210 = vmatpush1.msra.mxu0 %v183
    %211 = vmatprep.subr.mxu0 0.0
    %212 = vmatpush1.msra.mxu0 %v184
    %213 = vmatprep.subr.mxu0 0.0
    %214 = vmatpush1.msra.mxu0 %v185
    %215 = vmatprep.subr.mxu0 0.0
    %216 = vmatpush1.msra.mxu0 %v186
    %217 = vmatprep.subr.mxu0 0.0
    %218 = vmatpush1.msra.mxu0 %v187
    %219 = vmatprep.subr.mxu0 0.0
    %220 = vmatpush1.msra.mxu0 %v188
    %221 = vmatprep.subr.mxu0 0.0
    %222 = vmatpush1.msra.mxu0 %v189
    %223 = vmatprep.subr.mxu0 0.0
    %224 = vmatpush1.msra.mxu0 %v190
    %225 = vmatprep.subr.mxu0 0.0
    %226 = vmatpush1.msra.mxu0 %v191
    %227 = vmatprep.subr.mxu0 0.0
    %228 = vmatpush1.msra.mxu0 %v192
    %229 = vmatprep.subr.mxu0 0.0
    %230 = vmatpush1.msra.mxu0 0.0
    %231 = vmatprep.subr.mxu0 0.0
    %232 = vmatpush1.msra.mxu0 0.0
    %233 = vmatprep.subr.mxu0 0.0
    %234 = vmatpush1.msra.mxu0 0.0
    %235 = vmatprep.subr.mxu0 0.0
    %236 = vmatpush1.msra.mxu0 0.0
    %237 = vmatprep.subr.mxu0 0.0
    %238 = vmatpush1.msra.mxu0 0.0
    %239 = vmatprep.subr.mxu0 0.0
    %240 = vmatpush1.msra.mxu0 0.0
    %241 = vmatprep.subr.mxu0 0.0
    %242 = vmatpush1.msra.mxu0 0.0
    %243 = vmatprep.subr.mxu0 0.0
    %244 = vmatpush1.msra.mxu0 0.0
    %245 = vmatprep.subr.mxu0 0.0
    %246 = vmatpush1.msra.mxu0 0.0
    %247 = vmatprep.subr.mxu0 0.0
    %248 = vmatpush1.msra.mxu0 0.0
    %249 = vmatprep.subr.mxu0 0.0
    %250 = vmatpush1.msra.mxu0 0.0
    %251 = vmatprep.subr.mxu0 0.0
    %252 = vmatpush1.msra.mxu0 0.0
    %253 = vmatprep.subr.mxu0 0.0
    %254 = vmatpush1.msra.mxu0 0.0
    %255 = vmatprep.subr.mxu0 0.0
    %256 = vmatpush1.msra.mxu0 0.0
    %257 = vmatprep.subr.mxu0 0.0
    %258 = vmatpush1.msra.mxu0 0.0
    %259 = vmatprep.subr.mxu0 0.0
    %260 = vmatpush1.msra.mxu0 0.0
    %261 = vmatprep.mubr.f32.mxu0 0.0
    %262 = vmatmul.mubr.f32.gmra.mrb[0].mxu0 %v176
    %v263 = vpop.f32.mrb[0].mxu0
    %v264 = vadd.f32 %v196, %v263
    %v265 = vpop.f32.mrb[0].mxu0
    %266 = vdwg.mxu0
    %v267 = vld [vmem:[%s1] sm:$0xff]
    %v268 = vld [vmem:[%s1 + $0x8] sm:$0xff]
    %v269 = vld [vmem:[#allocation7] sm:$0xff]
    %v270 = vld [vmem:[#allocation7 + $0x8] sm:$0xff]
    %272 = vrot.lane.b32.xlu0 %v196, 96
    %v273 = vpop.permute.xlu0 %272
    %vm275 = vcmask 130048
    %v277 = vsel %vm275, %v267, 0
    %v280 = vsel %vm275, %v268, 0
    %282 = vmatprep.subr.mxu0 0.0
    %283 = vmatpush1.msra.mxu0 %v269
    %284 = vmatprep.subr.mxu0 0.0
    %285 = vmatpush1.msra.mxu0 %v270
    %286 = vmatprep.subr.mxu0 0.0
    %287 = vmatpush1.msra.mxu0 0.0
    %288 = vmatprep.subr.mxu0 0.0
    %289 = vmatpush1.msra.mxu0 0.0
    %290 = vmatprep.subr.mxu0 0.0
    %291 = vmatpush1.msra.mxu0 0.0
    %292 = vmatprep.subr.mxu0 0.0
    %293 = vmatpush1.msra.mxu0 0.0
    %294 = vmatprep.subr.mxu0 0.0
    %295 = vmatpush1.msra.mxu0 0.0
    %296 = vmatprep.subr.mxu0 0.0
    %297 = vmatpush1.msra.mxu0 0.0
    %298 = vmatprep.subr.mxu0 0.0
    %299 = vmatpush1.msra.mxu0 0.0
    %300 = vmatprep.subr.mxu0 0.0
    %301 = vmatpush1.msra.mxu0 0.0
    %302 = vmatprep.subr.mxu0 0.0
    %303 = vmatpush1.msra.mxu0 0.0
    %304 = vmatprep.subr.mxu0 0.0
    %305 = vmatpush1.msra.mxu0 0.0
    %306 = vmatprep.subr.mxu0 0.0
    %307 = vmatpush1.msra.mxu0 0.0
    %308 = vmatprep.subr.mxu0 0.0
    %309 = vmatpush1.msra.mxu0 0.0
    %310 = vmatprep.subr.mxu0 0.0
    %311 = vmatpush1.msra.mxu0 0.0
    %312 = vmatprep.subr.mxu0 0.0
    %313 = vmatpush1.msra.mxu0 0.0
    %314 = vmatprep.subr.mxu0 0.0
    %315 = vmatpush1.msra.mxu0 0.0
    %316 = vmatprep.subr.mxu0 0.0
    %317 = vmatpush1.msra.mxu0 0.0
    %318 = vmatprep.subr.mxu0 0.0
    %319 = vmatpush1.msra.mxu0 0.0
    %320 = vmatprep.subr.mxu0 0.0
    %321 = vmatpush1.msra.mxu0 0.0
    %322 = vmatprep.subr.mxu0 0.0
    %323 = vmatpush1.msra.mxu0 0.0
    %324 = vmatprep.subr.mxu0 0.0
    %325 = vmatpush1.msra.mxu0 0.0
    %326 = vmatprep.subr.mxu0 0.0
    %327 = vmatpush1.msra.mxu0 0.0
    %328 = vmatprep.subr.mxu0 0.0
    %329 = vmatpush1.msra.mxu0 0.0
    %330 = vmatprep.subr.mxu0 0.0
    %331 = vmatpush1.msra.mxu0 0.0
    %332 = vmatprep.subr.mxu0 0.0
    %333 = vmatpush1.msra.mxu0 0.0
    %334 = vmatprep.subr.mxu0 0.0
    %335 = vmatpush1.msra.mxu0 0.0
    %336 = vmatprep.subr.mxu0 0.0
    %337 = vmatpush1.msra.mxu0 0.0
    %338 = vmatprep.subr.mxu0 0.0
    %339 = vmatpush1.msra.mxu0 0.0
    %340 = vmatprep.subr.mxu0 0.0
    %341 = vmatpush1.msra.mxu0 0.0
    %342 = vmatprep.subr.mxu0 0.0
    %343 = vmatpush1.msra.mxu0 0.0
    %344 = vmatprep.subr.mxu0 0.0
    %345 = vmatpush1.msra.mxu0 0.0
    %346 = vmatprep.mubr.f32.mxu0 0.0
    %347 = vmatmul.mubr.f32.gmra.mrb[0].mxu0 %v277
    %v348 = vpop.f32.mrb[0].mxu0
    %v349 = vadd.f32 %v273, %v348
    %v350 = vpop.f32.mrb[0].mxu0
    %351 = vmatprep.mubr.f32.mxu0 0.0
    %352 = vmatmul.mubr.f32.gmra.mrb[0].mxu0 %v280
    %v353 = vpop.f32.mrb[0].mxu0
    %v354 = vadd.f32 %v273, %v353
    %v355 = vpop.f32.mrb[0].mxu0
    %356 = vdwg.mxu0
    %v357 = vtanh.pop %v349
    %v358 = vtanh.pop %v354
    %v359 = vld [vmem:[%s7] sm:$0xff]
    %v360 = vld [vmem:[%s7 + $0x8] sm:$0xff]
    %v361 = vld [vmem:[%s7 + $0x10] sm:$0xff]
    %v362 = vld [vmem:[%s7 + $0x18] sm:$0xff]
    %363 = vrot.lane.b32.xlu0 %v196, 64
    %v364 = vpop.permute.xlu0 %363
    %v367 = vsel %vm98, %v357, 0
    %v370 = vsel %vm98, %v358, 0
    %372 = vmatprep.subr.mxu0 0.0
    %373 = vmatpush1.msra.mxu0 %v359
    %374 = vmatprep.subr.mxu0 0.0
    %375 = vmatpush1.msra.mxu0 %v360
    %376 = vmatprep.subr.mxu0 0.0
    %377 = vmatpush1.msra.mxu0 %v361
    %378 = vmatprep.subr.mxu0 0.0
    %379 = vmatpush1.msra.mxu0 %v362
    %380 = vmatprep.subr.mxu0 0.0
    %381 = vmatpush1.msra.mxu0 0.0
    %382 = vmatprep.subr.mxu0 0.0
    %383 = vmatpush1.msra.mxu0 0.0
    %384 = vmatprep.subr.mxu0 0.0
    %385 = vmatpush1.msra.mxu0 0.0
    %386 = vmatprep.subr.mxu0 0.0
    %387 = vmatpush1.msra.mxu0 0.0
    %388 = vmatprep.subr.mxu0 0.0
    %389 = vmatpush1.msra.mxu0 0.0
    %390 = vmatprep.subr.mxu0 0.0
    %391 = vmatpush1.msra.mxu0 0.0
    %392 = vmatprep.subr.mxu0 0.0
    %393 = vmatpush1.msra.mxu0 0.0
    %394 = vmatprep.subr.mxu0 0.0
    %395 = vmatpush1.msra.mxu0 0.0
    %396 = vmatprep.subr.mxu0 0.0
    %397 = vmatpush1.msra.mxu0 0.0
    %398 = vmatprep.subr.mxu0 0.0
    %399 = vmatpush1.msra.mxu0 0.0
    %400 = vmatprep.subr.mxu0 0.0
    %401 = vmatpush1.msra.mxu0 0.0
    %402 = vmatprep.subr.mxu0 0.0
    %403 = vmatpush1.msra.mxu0 0.0
    %404 = vmatprep.subr.mxu0 0.0
    %405 = vmatpush1.msra.mxu0 0.0
    %406 = vmatprep.subr.mxu0 0.0
    %407 = vmatpush1.msra.mxu0 0.0
    %408 = vmatprep.subr.mxu0 0.0
    %409 = vmatpush1.msra.mxu0 0.0
    %410 = vmatprep.subr.mxu0 0.0
    %411 = vmatpush1.msra.mxu0 0.0
    %412 = vmatprep.subr.mxu0 0.0
    %413 = vmatpush1.msra.mxu0 0.0
    %414 = vmatprep.subr.mxu0 0.0
    %415 = vmatpush1.msra.mxu0 0.0
    %416 = vmatprep.subr.mxu0 0.0
    %417 = vmatpush1.msra.mxu0 0.0
    %418 = vmatprep.subr.mxu0 0.0
    %419 = vmatpush1.msra.mxu0 0.0
    %420 = vmatprep.subr.mxu0 0.0
    %421 = vmatpush1.msra.mxu0 0.0
    %422 = vmatprep.subr.mxu0 0.0
    %423 = vmatpush1.msra.mxu0 0.0
    %424 = vmatprep.subr.mxu0 0.0
    %425 = vmatpush1.msra.mxu0 0.0
    %426 = vmatprep.subr.mxu0 0.0
    %427 = vmatpush1.msra.mxu0 0.0
    %428 = vmatprep.subr.mxu0 0.0
    %429 = vmatpush1.msra.mxu0 0.0
    %430 = vmatprep.subr.mxu0 0.0
    %431 = vmatpush1.msra.mxu0 0.0
    %432 = vmatprep.subr.mxu0 0.0
    %433 = vmatpush1.msra.mxu0 0.0
    %434 = vmatprep.subr.mxu0 0.0
    %435 = vmatpush1.msra.mxu0 0.0
    %436 = vmatprep.mubr.f32.mxu0 0.0
    %437 = vmatmul.mubr.f32.gmra.mrb[0].mxu0 %v367
    %v438 = vpop.f32.mrb[0].mxu0
    %v439 = vadd.f32 %v364, %v438
    %v440 = vpop.f32.mrb[0].mxu0
    %441 = vmatprep.mubr.f32.mxu0 0.0
    %442 = vmatmul.mubr.f32.gmra.mrb[0].mxu0 %v370
    %v443 = vpop.f32.mrb[0].mxu0
    %v444 = vadd.f32 %v364, %v443
    %v445 = vpop.f32.mrb[0].mxu0
    %446 = vdwg.mxu0
    %v447 = vld [vmem:[#allocation5] sm:$0xff]
    %v448 = vadd.f32 %v439, %v447
    %v449 = vadd.f32 %v444, %v447
    %v452 = vunpack.c.l.s4 1966171168
    %v453 = vunpack.c.0.s8 %v452
    %v454 = vlaneseq
    %v455 = vshrl.u32 %v454, 7
    %v456 = vsub.s32 %v453, %v455
    %v457 = vrot.slane %v264, %v456
    %v458 = vcombine.high %v457, %v457
    %v460 = vunpack.c.l.s4 1966171168
    %v461 = vunpack.c.0.s8 %v460
    %v462 = vlaneseq
    %v463 = vshrl.u32 %v462, 7
    %v464 = vsub.s32 %v461, %v463
    %v465 = vrot.slane %v457, %v464
    %v467 = vunpack.c.l.s4 1966171168
    %v468 = vunpack.c.0.s8 %v467
    %v469 = vlaneseq
    %v470 = vshrl.u32 %v469, 7
    %v471 = vsub.s32 %v468, %v470
    %v472 = vrot.slane %v458, %v471
    %v473 = vlaneseq
    %v474 = vshrl.u32 %v473, 7
    %v475 = vsub.s32 0, %v474
    %v476 = vrot.slane %v465, %v475
    %v477 = vlaneseq
    %v478 = vshrl.u32 %v477, 7
    %v479 = vsub.s32 0, %v478
    %v480 = vrot.slane %v472, %v479
    %v483 = vadd.f32 %v448, %v476
    %v484 = vadd.f32 %v449, %v480
    %v485 = vsel %vm98, %v483, 0.0
    %486 = vadd.xlane.f32.xlu0 %v485
    %v487 = vpop.xlane.xlu0 %486
    %v488 = vsel %vm98, %v484, 0.0
    %489 = vadd.xlane.f32.xlu0 %v488
    %v490 = vpop.xlane.xlu0 %489
    %v491 = vrcp.pop 32.0
    %v492 = vmul.f32 %v487, %v491
    %v493 = vmul.f32 %v490, %v491
    %v494 = vsub.f32 %v483, %v492
    %v495 = vsub.f32 %v484, %v493
    %v496 = vmul.f32 %v494, %v494
    %v497 = vmul.f32 %v495, %v495
    %v498 = vsel %vm98, %v496, 0.0
    %499 = vadd.xlane.f32.xlu0 %v498
    %v500 = vpop.xlane.xlu0 %499
    %v501 = vsel %vm98, %v497, 0.0
    %502 = vadd.xlane.f32.xlu0 %v501
    %v503 = vpop.xlane.xlu0 %502
    %v504 = vmul.f32 %v500, %v491
    %v505 = vmul.f32 %v503, %v491
    %v506 = vadd.f32 %v504, 1e-12
    %v507 = vadd.f32 %v505, 1e-12
    %v508 = vrsqrt.pop %v506
    %v509 = vrsqrt.pop %v507
    %v510 = vmul.f32 %v494, %v508
    %v511 = vmul.f32 %v495, %v509
    %512 = vrot.lane.b32.xlu0 %v196, 32
    %v513 = vpop.permute.xlu0 %512
    %v515 = vmul.f32 %v510, %v513
    %v516 = vmul.f32 %v511, %v513
    %v517 = vlaneseq
    %v518 = vshrl.u32 %v517, 7
    %v519 = vsub.s32 1, %v518
    %v520 = vrot.slane %v88, %v519
    %v521 = vadd.f32 %v515, %v520
    %v522 = vadd.f32 %v516, %v520
    %v523 = vld [vmem:[%s3] sm:$0xff]
    %v524 = vld [vmem:[%s3 + $0x8] sm:$0xff]
    %v525 = vld [vmem:[%s9] sm:$0xff]
    %v526 = vld [vmem:[%s9 + $0x8] sm:$0xff]
    %v527 = vld [vmem:[%s9 + $0x10] sm:$0xff]
    %v528 = vld [vmem:[%s9 + $0x18] sm:$0xff]
    %v529 = vld [vmem:[%s10] sm:$0x7]
    %v530 = vlaneseq
    %v531 = vshrl.u32 %v530, 7
    %v532 = vsub.s32 0, %v531
    %v533 = vrot.slane %v529, %v532
    %v535 = vsel %vm98, %v521, 0
    %v538 = vsel %vm98, %v522, 0
    %540 = vmatprep.subr.mxu0 0.0
    %541 = vmatpush1.msra.mxu0 %v525
    %542 = vmatprep.subr.mxu0 0.0
    %543 = vmatpush1.msra.mxu0 %v526
    %544 = vmatprep.subr.mxu0 0.0
    %545 = vmatpush1.msra.mxu0 %v527
    %546 = vmatprep.subr.mxu0 0.0
    %547 = vmatpush1.msra.mxu0 %v528
    %548 = vmatprep.subr.mxu0 0.0
    %549 = vmatpush1.msra.mxu0 0.0
    %550 = vmatprep.subr.mxu0 0.0
    %551 = vmatpush1.msra.mxu0 0.0
    %552 = vmatprep.subr.mxu0 0.0
    %553 = vmatpush1.msra.mxu0 0.0
    %554 = vmatprep.subr.mxu0 0.0
    %555 = vmatpush1.msra.mxu0 0.0
    %556 = vmatprep.subr.mxu0 0.0
    %557 = vmatpush1.msra.mxu0 0.0
    %558 = vmatprep.subr.mxu0 0.0
    %559 = vmatpush1.msra.mxu0 0.0
    %560 = vmatprep.subr.mxu0 0.0
    %561 = vmatpush1.msra.mxu0 0.0
    %562 = vmatprep.subr.mxu0 0.0
    %563 = vmatpush1.msra.mxu0 0.0
    %564 = vmatprep.subr.mxu0 0.0
    %565 = vmatpush1.msra.mxu0 0.0
    %566 = vmatprep.subr.mxu0 0.0
    %567 = vmatpush1.msra.mxu0 0.0
    %568 = vmatprep.subr.mxu0 0.0
    %569 = vmatpush1.msra.mxu0 0.0
    %570 = vmatprep.subr.mxu0 0.0
    %571 = vmatpush1.msra.mxu0 0.0
    %572 = vmatprep.subr.mxu0 0.0
    %573 = vmatpush1.msra.mxu0 0.0
    %574 = vmatprep.subr.mxu0 0.0
    %575 = vmatpush1.msra.mxu0 0.0
    %576 = vmatprep.subr.mxu0 0.0
    %577 = vmatpush1.msra.mxu0 0.0
    %578 = vmatprep.subr.mxu0 0.0
    %579 = vmatpush1.msra.mxu0 0.0
    %580 = vmatprep.subr.mxu0 0.0
    %581 = vmatpush1.msra.mxu0 0.0
    %582 = vmatprep.subr.mxu0 0.0
    %583 = vmatpush1.msra.mxu0 0.0
    %584 = vmatprep.subr.mxu0 0.0
    %585 = vmatpush1.msra.mxu0 0.0
    %586 = vmatprep.subr.mxu0 0.0
    %587 = vmatpush1.msra.mxu0 0.0
    %588 = vmatprep.subr.mxu0 0.0
    %589 = vmatpush1.msra.mxu0 0.0
    %590 = vmatprep.subr.mxu0 0.0
    %591 = vmatpush1.msra.mxu0 0.0
    %592 = vmatprep.subr.mxu0 0.0
    %593 = vmatpush1.msra.mxu0 0.0
    %594 = vmatprep.subr.mxu0 0.0
    %595 = vmatpush1.msra.mxu0 0.0
    %596 = vmatprep.subr.mxu0 0.0
    %597 = vmatpush1.msra.mxu0 0.0
    %598 = vmatprep.subr.mxu0 0.0
    %599 = vmatpush1.msra.mxu0 0.0
    %600 = vmatprep.subr.mxu0 0.0
    %601 = vmatpush1.msra.mxu0 0.0
    %602 = vmatprep.subr.mxu0 0.0
    %603 = vmatpush1.msra.mxu0 0.0
    %604 = vmatprep.mubr.f32.mxu0 0.0
    %605 = vmatmul.mubr.f32.gmra.mrb[0].mxu0 %v535
    %v606 = vpop.f32.mrb[0].mxu0
    %v607 = vadd.f32 %v533, %v606
    %v608 = vpop.f32.mrb[0].mxu0
    %609 = vmatprep.mubr.f32.mxu0 0.0
    %610 = vmatmul.mubr.f32.gmra.mrb[0].mxu0 %v538
    %v611 = vpop.f32.mrb[0].mxu0
    %v612 = vadd.f32 %v533, %v611
    %v613 = vpop.f32.mrb[0].mxu0
    %614 = vdwg.mxu0
    %617 = vrot.lane.b32.xlu0 %v607, 120
    %v618 = vpop.permute.xlu0 %617
    %619 = vrot.lane.b32.xlu0 %v612, 120
    %v620 = vpop.permute.xlu0 %619
    %621 = vrot.lane.b32.xlu0 %v607, 112
    %v622 = vpop.permute.xlu0 %621
    %623 = vrot.lane.b32.xlu0 %v612, 112
    %v624 = vpop.permute.xlu0 %623
    %625 = vrot.lane.b32.xlu0 %v607, 104
    %v626 = vpop.permute.xlu0 %625
    %627 = vrot.lane.b32.xlu0 %v612, 104
    %v628 = vpop.permute.xlu0 %627
    %629 = vrot.lane.b32.xlu0 %v607, 96
    %v630 = vpop.permute.xlu0 %629
    %631 = vrot.lane.b32.xlu0 %v612, 96
    %v632 = vpop.permute.xlu0 %631
    %vm633 = vcmask 64512
    %v634 = vsel %vm633, %v607, 0
    %v636 = vsel %vm633, %v612, 0
    %v638 = vsel %vm633, %v630, 0
    %v640 = vsel %vm633, %v632, 0
    %642 = vmatprep.subr.mxu0 0.0
    %643 = vmatpush1.xpose.msra.mxu0 %v638
    %644 = vmatprep.subr.mxu0 0.0
    %645 = vmatpush1.xpose.msra.mxu0 %v640
    %646 = vmatprep.subr.mxu0 0.0
    %647 = vmatpush1.xpose.msra.mxu0 0.0
    %648 = vmatprep.subr.mxu0 0.0
    %649 = vmatpush1.xpose.msra.mxu0 0.0
    %650 = vmatprep.subr.mxu0 0.0
    %651 = vmatpush1.xpose.msra.mxu0 0.0
    %652 = vmatprep.subr.mxu0 0.0
    %653 = vmatpush1.xpose.msra.mxu0 0.0
    %654 = vmatprep.subr.mxu0 0.0
    %655 = vmatpush1.xpose.msra.mxu0 0.0
    %656 = vmatprep.subr.mxu0 0.0
    %657 = vmatpush1.xpose.msra.mxu0 0.0
    %658 = vmatprep.subr.mxu0 0.0
    %659 = vmatpush1.xpose.msra.mxu0 0.0
    %660 = vmatprep.subr.mxu0 0.0
    %661 = vmatpush1.xpose.msra.mxu0 0.0
    %662 = vmatprep.subr.mxu0 0.0
    %663 = vmatpush1.xpose.msra.mxu0 0.0
    %664 = vmatprep.subr.mxu0 0.0
    %665 = vmatpush1.xpose.msra.mxu0 0.0
    %666 = vmatprep.subr.mxu0 0.0
    %667 = vmatpush1.xpose.msra.mxu0 0.0
    %668 = vmatprep.subr.mxu0 0.0
    %669 = vmatpush1.xpose.msra.mxu0 0.0
    %670 = vmatprep.subr.mxu0 0.0
    %671 = vmatpush1.xpose.msra.mxu0 0.0
    %672 = vmatprep.subr.mxu0 0.0
    %673 = vmatpush1.xpose.msra.mxu0 0.0
    %674 = vmatprep.subr.mxu0 0.0
    %675 = vmatpush1.xpose.msra.mxu0 0.0
    %676 = vmatprep.subr.mxu0 0.0
    %677 = vmatpush1.xpose.msra.mxu0 0.0
    %678 = vmatprep.subr.mxu0 0.0
    %679 = vmatpush1.xpose.msra.mxu0 0.0
    %680 = vmatprep.subr.mxu0 0.0
    %681 = vmatpush1.xpose.msra.mxu0 0.0
    %682 = vmatprep.subr.mxu0 0.0
    %683 = vmatpush1.xpose.msra.mxu0 0.0
    %684 = vmatprep.subr.mxu0 0.0
    %685 = vmatpush1.xpose.msra.mxu0 0.0
    %686 = vmatprep.subr.mxu0 0.0
    %687 = vmatpush1.xpose.msra.mxu0 0.0
    %688 = vmatprep.subr.mxu0 0.0
    %689 = vmatpush1.xpose.msra.mxu0 0.0
    %690 = vmatprep.subr.mxu0 0.0
    %691 = vmatpush1.xpose.msra.mxu0 0.0
    %692 = vmatprep.subr.mxu0 0.0
    %693 = vmatpush1.xpose.msra.mxu0 0.0
    %694 = vmatprep.subr.mxu0 0.0
    %695 = vmatpush1.xpose.msra.mxu0 0.0
    %696 = vmatprep.subr.mxu0 0.0
    %697 = vmatpush1.xpose.msra.mxu0 0.0
    %698 = vmatprep.subr.mxu0 0.0
    %699 = vmatpush1.xpose.msra.mxu0 0.0
    %700 = vmatprep.subr.mxu0 0.0
    %701 = vmatpush1.xpose.msra.mxu0 0.0
    %702 = vmatprep.subr.mxu0 0.0
    %703 = vmatpush1.xpose.msra.mxu0 0.0
    %704 = vmatprep.subr.mxu0 0.0
    %705 = vmatpush1.xpose.msra.mxu0 0.0
    %706 = vmatprep.mubr.f32.mxu0 0.0
    %707 = vmatmul.mubr.f32.gmra.mrb[0].mxu0 %v634
    %v708 = vpop.f32.mrb[0].mxu0
    %v709 = vadd.f32 %v523, %v708
    %v710 = vpop.f32.mrb[0].mxu0
    %711 = vmatprep.mubr.f32.mxu0 0.0
    %712 = vmatmul.mubr.f32.gmra.mrb[0].mxu0 %v636
    %v713 = vpop.f32.mrb[0].mxu0
    %v714 = vadd.f32 %v524, %v713
    %v715 = vpop.f32.mrb[0].mxu0
    %716 = vdwg.mxu0
    %717 = vrot.lane.b32.xlu0 %v618, 96
    %v718 = vpop.permute.xlu0 %717
    %719 = vrot.lane.b32.xlu0 %v620, 96
    %v720 = vpop.permute.xlu0 %719
    %v721 = vsel %vm633, %v618, 0
    %v723 = vsel %vm633, %v620, 0
    %v725 = vsel %vm633, %v718, 0
    %v727 = vsel %vm633, %v720, 0
    %729 = vmatprep.subr.mxu0 0.0
    %730 = vmatpush1.xpose.msra.mxu0 %v725
    %731 = vmatprep.subr.mxu0 0.0
    %732 = vmatpush1.xpose.msra.mxu0 %v727
    %733 = vmatprep.subr.mxu0 0.0
    %734 = vmatpush1.xpose.msra.mxu0 0.0
    %735 = vmatprep.subr.mxu0 0.0
    %736 = vmatpush1.xpose.msra.mxu0 0.0
    %737 = vmatprep.subr.mxu0 0.0
    %738 = vmatpush1.xpose.msra.mxu0 0.0
    %739 = vmatprep.subr.mxu0 0.0
    %740 = vmatpush1.xpose.msra.mxu0 0.0
    %741 = vmatprep.subr.mxu0 0.0
    %742 = vmatpush1.xpose.msra.mxu0 0.0
    %743 = vmatprep.subr.mxu0 0.0
    %744 = vmatpush1.xpose.msra.mxu0 0.0
    %745 = vmatprep.subr.mxu0 0.0
    %746 = vmatpush1.xpose.msra.mxu0 0.0
    %747 = vmatprep.subr.mxu0 0.0
    %748 = vmatpush1.xpose.msra.mxu0 0.0
    %749 = vmatprep.subr.mxu0 0.0
    %750 = vmatpush1.xpose.msra.mxu0 0.0
    %751 = vmatprep.subr.mxu0 0.0
    %752 = vmatpush1.xpose.msra.mxu0 0.0
    %753 = vmatprep.subr.mxu0 0.0
    %754 = vmatpush1.xpose.msra.mxu0 0.0
    %755 = vmatprep.subr.mxu0 0.0
    %756 = vmatpush1.xpose.msra.mxu0 0.0
    %757 = vmatprep.subr.mxu0 0.0
    %758 = vmatpush1.xpose.msra.mxu0 0.0
    %759 = vmatprep.subr.mxu0 0.0
    %760 = vmatpush1.xpose.msra.mxu0 0.0
    %761 = vmatprep.subr.mxu0 0.0
    %762 = vmatpush1.xpose.msra.mxu0 0.0
    %763 = vmatprep.subr.mxu0 0.0
    %764 = vmatpush1.xpose.msra.mxu0 0.0
    %765 = vmatprep.subr.mxu0 0.0
    %766 = vmatpush1.xpose.msra.mxu0 0.0
    %767 = vmatprep.subr.mxu0 0.0
    %768 = vmatpush1.xpose.msra.mxu0 0.0
    %769 = vmatprep.subr.mxu0 0.0
    %770 = vmatpush1.xpose.msra.mxu0 0.0
    %771 = vmatprep.subr.mxu0 0.0
    %772 = vmatpush1.xpose.msra.mxu0 0.0
    %773 = vmatprep.subr.mxu0 0.0
    %774 = vmatpush1.xpose.msra.mxu0 0.0
    %775 = vmatprep.subr.mxu0 0.0
    %776 = vmatpush1.xpose.msra.mxu0 0.0
    %777 = vmatprep.subr.mxu0 0.0
    %778 = vmatpush1.xpose.msra.mxu0 0.0
    %779 = vmatprep.subr.mxu0 0.0
    %780 = vmatpush1.xpose.msra.mxu0 0.0
    %781 = vmatprep.subr.mxu0 0.0
    %782 = vmatpush1.xpose.msra.mxu0 0.0
    %783 = vmatprep.subr.mxu0 0.0
    %784 = vmatpush1.xpose.msra.mxu0 0.0
    %785 = vmatprep.subr.mxu0 0.0
    %786 = vmatpush1.xpose.msra.mxu0 0.0
    %787 = vmatprep.subr.mxu0 0.0
    %788 = vmatpush1.xpose.msra.mxu0 0.0
    %789 = vmatprep.subr.mxu0 0.0
    %790 = vmatpush1.xpose.msra.mxu0 0.0
    %791 = vmatprep.subr.mxu0 0.0
    %792 = vmatpush1.xpose.msra.mxu0 0.0
    %793 = vmatprep.mubr.f32.mxu0 0.0
    %794 = vmatmul.mubr.f32.gmra.mrb[0].mxu0 %v721
    %v795 = vpop.f32.mrb[0].mxu0
    %v796 = vadd.f32 %v523, %v795
    %v797 = vpop.f32.mrb[0].mxu0
    %798 = vmatprep.mubr.f32.mxu0 0.0
    %799 = vmatmul.mubr.f32.gmra.mrb[0].mxu0 %v723
    %v800 = vpop.f32.mrb[0].mxu0
    %v801 = vadd.f32 %v524, %v800
    %v802 = vpop.f32.mrb[0].mxu0
    %803 = vdwg.mxu0
    %804 = vrot.lane.b32.xlu0 %v622, 96
    %v805 = vpop.permute.xlu0 %804
    %806 = vrot.lane.b32.xlu0 %v624, 96
    %v807 = vpop.permute.xlu0 %806
    %v808 = vsel %vm633, %v622, 0
    %v810 = vsel %vm633, %v624, 0
    %v812 = vsel %vm633, %v805, 0
    %v814 = vsel %vm633, %v807, 0
    %816 = vmatprep.subr.mxu0 0.0
    %817 = vmatpush1.xpose.msra.mxu0 %v812
    %818 = vmatprep.subr.mxu0 0.0
    %819 = vmatpush1.xpose.msra.mxu0 %v814
    %820 = vmatprep.subr.mxu0 0.0
    %821 = vmatpush1.xpose.msra.mxu0 0.0
    %822 = vmatprep.subr.mxu0 0.0
    %823 = vmatpush1.xpose.msra.mxu0 0.0
    %824 = vmatprep.subr.mxu0 0.0
    %825 = vmatpush1.xpose.msra.mxu0 0.0
    %826 = vmatprep.subr.mxu0 0.0
    %827 = vmatpush1.xpose.msra.mxu0 0.0
    %828 = vmatprep.subr.mxu0 0.0
    %829 = vmatpush1.xpose.msra.mxu0 0.0
    %830 = vmatprep.subr.mxu0 0.0
    %831 = vmatpush1.xpose.msra.mxu0 0.0
    %832 = vmatprep.subr.mxu0 0.0
    %833 = vmatpush1.xpose.msra.mxu0 0.0
    %834 = vmatprep.subr.mxu0 0.0
    %835 = vmatpush1.xpose.msra.mxu0 0.0
    %836 = vmatprep.subr.mxu0 0.0
    %837 = vmatpush1.xpose.msra.mxu0 0.0
    %838 = vmatprep.subr.mxu0 0.0
    %839 = vmatpush1.xpose.msra.mxu0 0.0
    %840 = vmatprep.subr.mxu0 0.0
    %841 = vmatpush1.xpose.msra.mxu0 0.0
    %842 = vmatprep.subr.mxu0 0.0
    %843 = vmatpush1.xpose.msra.mxu0 0.0
    %844 = vmatprep.subr.mxu0 0.0
    %845 = vmatpush1.xpose.msra.mxu0 0.0
    %846 = vmatprep.subr.mxu0 0.0
    %847 = vmatpush1.xpose.msra.mxu0 0.0
    %848 = vmatprep.subr.mxu0 0.0
    %849 = vmatpush1.xpose.msra.mxu0 0.0
    %850 = vmatprep.subr.mxu0 0.0
    %851 = vmatpush1.xpose.msra.mxu0 0.0
    %852 = vmatprep.subr.mxu0 0.0
    %853 = vmatpush1.xpose.msra.mxu0 0.0
    %854 = vmatprep.subr.mxu0 0.0
    %855 = vmatpush1.xpose.msra.mxu0 0.0
    %856 = vmatprep.subr.mxu0 0.0
    %857 = vmatpush1.xpose.msra.mxu0 0.0
    %858 = vmatprep.subr.mxu0 0.0
    %859 = vmatpush1.xpose.msra.mxu0 0.0
    %860 = vmatprep.subr.mxu0 0.0
    %861 = vmatpush1.xpose.msra.mxu0 0.0
    %862 = vmatprep.subr.mxu0 0.0
    %863 = vmatpush1.xpose.msra.mxu0 0.0
    %864 = vmatprep.subr.mxu0 0.0
    %865 = vmatpush1.xpose.msra.mxu0 0.0
    %866 = vmatprep.subr.mxu0 0.0
    %867 = vmatpush1.xpose.msra.mxu0 0.0
    %868 = vmatprep.subr.mxu0 0.0
    %869 = vmatpush1.xpose.msra.mxu0 0.0
    %870 = vmatprep.subr.mxu0 0.0
    %871 = vmatpush1.xpose.msra.mxu0 0.0
    %872 = vmatprep.subr.mxu0 0.0
    %873 = vmatpush1.xpose.msra.mxu0 0.0
    %874 = vmatprep.subr.mxu0 0.0
    %875 = vmatpush1.xpose.msra.mxu0 0.0
    %876 = vmatprep.subr.mxu0 0.0
    %877 = vmatpush1.xpose.msra.mxu0 0.0
    %878 = vmatprep.subr.mxu0 0.0
    %879 = vmatpush1.xpose.msra.mxu0 0.0
    %880 = vmatprep.mubr.f32.mxu0 0.0
    %881 = vmatmul.mubr.f32.gmra.mrb[0].mxu0 %v808
    %v882 = vpop.f32.mrb[0].mxu0
    %v883 = vadd.f32 %v523, %v882
    %v884 = vpop.f32.mrb[0].mxu0
    %885 = vmatprep.mubr.f32.mxu0 0.0
    %886 = vmatmul.mubr.f32.gmra.mrb[0].mxu0 %v810
    %v887 = vpop.f32.mrb[0].mxu0
    %v888 = vadd.f32 %v524, %v887
    %v889 = vpop.f32.mrb[0].mxu0
    %890 = vdwg.mxu0
    %891 = vrot.lane.b32.xlu0 %v626, 96
    %v892 = vpop.permute.xlu0 %891
    %893 = vrot.lane.b32.xlu0 %v628, 96
    %v894 = vpop.permute.xlu0 %893
    %v895 = vsel %vm633, %v626, 0
    %v897 = vsel %vm633, %v628, 0
    %v899 = vsel %vm633, %v892, 0
    %v901 = vsel %vm633, %v894, 0
    %903 = vmatprep.subr.mxu0 0.0
    %904 = vmatpush1.xpose.msra.mxu0 %v899
    %905 = vmatprep.subr.mxu0 0.0
    %906 = vmatpush1.xpose.msra.mxu0 %v901
    %907 = vmatprep.subr.mxu0 0.0
    %908 = vmatpush1.xpose.msra.mxu0 0.0
    %909 = vmatprep.subr.mxu0 0.0
    %910 = vmatpush1.xpose.msra.mxu0 0.0
    %911 = vmatprep.subr.mxu0 0.0
    %912 = vmatpush1.xpose.msra.mxu0 0.0
    %913 = vmatprep.subr.mxu0 0.0
    %914 = vmatpush1.xpose.msra.mxu0 0.0
    %915 = vmatprep.subr.mxu0 0.0
    %916 = vmatpush1.xpose.msra.mxu0 0.0
    %917 = vmatprep.subr.mxu0 0.0
    %918 = vmatpush1.xpose.msra.mxu0 0.0
    %919 = vmatprep.subr.mxu0 0.0
    %920 = vmatpush1.xpose.msra.mxu0 0.0
    %921 = vmatprep.subr.mxu0 0.0
    %922 = vmatpush1.xpose.msra.mxu0 0.0
    %923 = vmatprep.subr.mxu0 0.0
    %924 = vmatpush1.xpose.msra.mxu0 0.0
    %925 = vmatprep.subr.mxu0 0.0
    %926 = vmatpush1.xpose.msra.mxu0 0.0
    %927 = vmatprep.subr.mxu0 0.0
    %928 = vmatpush1.xpose.msra.mxu0 0.0
    %929 = vmatprep.subr.mxu0 0.0
    %930 = vmatpush1.xpose.msra.mxu0 0.0
    %931 = vmatprep.subr.mxu0 0.0
    %932 = vmatpush1.xpose.msra.mxu0 0.0
    %933 = vmatprep.subr.mxu0 0.0
    %934 = vmatpush1.xpose.msra.mxu0 0.0
    %935 = vmatprep.subr.mxu0 0.0
    %936 = vmatpush1.xpose.msra.mxu0 0.0
    %937 = vmatprep.subr.mxu0 0.0
    %938 = vmatpush1.xpose.msra.mxu0 0.0
    %939 = vmatprep.subr.mxu0 0.0
    %940 = vmatpush1.xpose.msra.mxu0 0.0
    %941 = vmatprep.subr.mxu0 0.0
    %942 = vmatpush1.xpose.msra.mxu0 0.0
    %943 = vmatprep.subr.mxu0 0.0
    %944 = vmatpush1.xpose.msra.mxu0 0.0
    %945 = vmatprep.subr.mxu0 0.0
    %946 = vmatpush1.xpose.msra.mxu0 0.0
    %947 = vmatprep.subr.mxu0 0.0
    %948 = vmatpush1.xpose.msra.mxu0 0.0
    %949 = vmatprep.subr.mxu0 0.0
    %950 = vmatpush1.xpose.msra.mxu0 0.0
    %951 = vmatprep.subr.mxu0 0.0
    %952 = vmatpush1.xpose.msra.mxu0 0.0
    %953 = vmatprep.subr.mxu0 0.0
    %954 = vmatpush1.xpose.msra.mxu0 0.0
    %955 = vmatprep.subr.mxu0 0.0
    %956 = vmatpush1.xpose.msra.mxu0 0.0
    %957 = vmatprep.subr.mxu0 0.0
    %958 = vmatpush1.xpose.msra.mxu0 0.0
    %959 = vmatprep.subr.mxu0 0.0
    %960 = vmatpush1.xpose.msra.mxu0 0.0
    %961 = vmatprep.subr.mxu0 0.0
    %962 = vmatpush1.xpose.msra.mxu0 0.0
    %963 = vmatprep.subr.mxu0 0.0
    %964 = vmatpush1.xpose.msra.mxu0 0.0
    %965 = vmatprep.subr.mxu0 0.0
    %966 = vmatpush1.xpose.msra.mxu0 0.0
    %967 = vmatprep.mubr.f32.mxu0 0.0
    %968 = vmatmul.mubr.f32.gmra.mrb[0].mxu0 %v895
    %v969 = vpop.f32.mrb[0].mxu0
    %v970 = vadd.f32 %v523, %v969
    %v971 = vpop.f32.mrb[0].mxu0
    %972 = vmatprep.mubr.f32.mxu0 0.0
    %973 = vmatmul.mubr.f32.gmra.mrb[0].mxu0 %v897
    %v974 = vpop.f32.mrb[0].mxu0
    %v975 = vadd.f32 %v524, %v974
    %v976 = vpop.f32.mrb[0].mxu0
    %977 = vdwg.mxu0
    %v978 = vsel %vm275, %v709, -inf
    %979 = vmax.xlane.f32.xlu0 %v978
    %v980 = vpop.xlane.xlu0 %979
    %v981 = vsel %vm275, %v714, -inf
    %982 = vmax.xlane.f32.xlu0 %v981
    %v983 = vpop.xlane.xlu0 %982
    %v984 = vsel %vm275, %v796, -inf
    %985 = vmax.xlane.f32.xlu0 %v984
    %v986 = vpop.xlane.xlu0 %985
    %v987 = vsel %vm275, %v801, -inf
    %988 = vmax.xlane.f32.xlu0 %v987
    %v989 = vpop.xlane.xlu0 %988
    %v990 = vsel %vm275, %v883, -inf
    %991 = vmax.xlane.f32.xlu0 %v990
    %v992 = vpop.xlane.xlu0 %991
    %v993 = vsel %vm275, %v888, -inf
    %994 = vmax.xlane.f32.xlu0 %v993
    %v995 = vpop.xlane.xlu0 %994
    %v996 = vsel %vm275, %v970, -inf
    %997 = vmax.xlane.f32.xlu0 %v996
    %v998 = vpop.xlane.xlu0 %997
    %v999 = vsel %vm275, %v975, -inf
    %1000 = vmax.xlane.f32.xlu0 %v999
    %v1001 = vpop.xlane.xlu0 %1000
    %v1002 = vsub.f32 %v709, %v980
    %v1003 = vsub.f32 %v714, %v983
    %v1004 = vsub.f32 %v796, %v986
    %v1005 = vsub.f32 %v801, %v989
    %v1006 = vsub.f32 %v883, %v992
    %v1007 = vsub.f32 %v888, %v995
    %v1008 = vsub.f32 %v970, %v998
    %v1009 = vsub.f32 %v975, %v1001
    %v1010 = vmul.f32 %v1002, 1.442695
    %v1011 = vpow.pop %v1010
    %v1012 = vmul.f32 %v1003, 1.442695
    %v1013 = vpow.pop %v1012
    %v1014 = vmul.f32 %v1004, 1.442695
    %v1015 = vpow.pop %v1014
    %v1016 = vmul.f32 %v1005, 1.442695
    %v1017 = vpow.pop %v1016
    %v1018 = vmul.f32 %v1006, 1.442695
    %v1019 = vpow.pop %v1018
    %v1020 = vmul.f32 %v1007, 1.442695
    %v1021 = vpow.pop %v1020
    %v1022 = vmul.f32 %v1008, 1.442695
    %v1023 = vpow.pop %v1022
    %v1024 = vmul.f32 %v1009, 1.442695
    %v1025 = vpow.pop %v1024
    %v1026 = vsel %vm275, %v1011, 0.0
    %1027 = vadd.xlane.f32.xlu0 %v1026
    %v1028 = vpop.xlane.xlu0 %1027
    %v1029 = vsel %vm275, %v1013, 0.0
    %1030 = vadd.xlane.f32.xlu0 %v1029
    %v1031 = vpop.xlane.xlu0 %1030
    %v1032 = vsel %vm275, %v1015, 0.0
    %1033 = vadd.xlane.f32.xlu0 %v1032
    %v1034 = vpop.xlane.xlu0 %1033
    %v1035 = vsel %vm275, %v1017, 0.0
    %1036 = vadd.xlane.f32.xlu0 %v1035
    %v1037 = vpop.xlane.xlu0 %1036
    %v1038 = vsel %vm275, %v1019, 0.0
    %1039 = vadd.xlane.f32.xlu0 %v1038
    %v1040 = vpop.xlane.xlu0 %1039
    %v1041 = vsel %vm275, %v1021, 0.0
    %1042 = vadd.xlane.f32.xlu0 %v1041
    %v1043 = vpop.xlane.xlu0 %1042
    %v1044 = vsel %vm275, %v1023, 0.0
    %1045 = vadd.xlane.f32.xlu0 %v1044
    %v1046 = vpop.xlane.xlu0 %1045
    %v1047 = vsel %vm275, %v1025, 0.0
    %1048 = vadd.xlane.f32.xlu0 %v1047
    %v1049 = vpop.xlane.xlu0 %1048
    %v1050 = vrcp.pop %v1028
    %v1051 = vrcp.pop %v1031
    %v1052 = vrcp.pop %v1034
    %v1053 = vrcp.pop %v1037
    %v1054 = vrcp.pop %v1040
    %v1055 = vrcp.pop %v1043
    %v1056 = vrcp.pop %v1046
    %v1057 = vrcp.pop %v1049
    %v1058 = vmul.f32 %v1011, %v1050
    %v1059 = vmul.f32 %v1013, %v1051
    %v1060 = vmul.f32 %v1015, %v1052
    %v1061 = vmul.f32 %v1017, %v1053
    %v1062 = vmul.f32 %v1019, %v1054
    %v1063 = vmul.f32 %v1021, %v1055
    %v1064 = vmul.f32 %v1023, %v1056
    %v1065 = vmul.f32 %v1025, %v1057
    %1066 = vrot.lane.b32.xlu0 %v607, 64
    %v1067 = vpop.permute.xlu0 %1066
    %1068 = vrot.lane.b32.xlu0 %v612, 64
    %v1069 = vpop.permute.xlu0 %1068
    %v1073 = vsel %vm275, %v1058, 0
    %v1076 = vsel %vm275, %v1059, 0
    %1078 = vmatprep.subr.mxu0 0.0
    %1079 = vmatpush1.msra.mxu0 %v1067
    %1080 = vmatprep.subr.mxu0 0.0
    %1081 = vmatpush1.msra.mxu0 %v1069
    %1082 = vmatprep.subr.mxu0 0.0
    %1083 = vmatpush1.msra.mxu0 0.0
    %1084 = vmatprep.subr.mxu0 0.0
    %1085 = vmatpush1.msra.mxu0 0.0
    %1086 = vmatprep.subr.mxu0 0.0
    %1087 = vmatpush1.msra.mxu0 0.0
    %1088 = vmatprep.subr.mxu0 0.0
    %1089 = vmatpush1.msra.mxu0 0.0
    %1090 = vmatprep.subr.mxu0 0.0
    %1091 = vmatpush1.msra.mxu0 0.0
    %1092 = vmatprep.subr.mxu0 0.0
    %1093 = vmatpush1.msra.mxu0 0.0
    %1094 = vmatprep.subr.mxu0 0.0
    %1095 = vmatpush1.msra.mxu0 0.0
    %1096 = vmatprep.subr.mxu0 0.0
    %1097 = vmatpush1.msra.mxu0 0.0
    %1098 = vmatprep.subr.mxu0 0.0
    %1099 = vmatpush1.msra.mxu0 0.0
    %1100 = vmatprep.subr.mxu0 0.0
    %1101 = vmatpush1.msra.mxu0 0.0
    %1102 = vmatprep.subr.mxu0 0.0
    %1103 = vmatpush1.msra.mxu0 0.0
    %1104 = vmatprep.subr.mxu0 0.0
    %1105 = vmatpush1.msra.mxu0 0.0
    %1106 = vmatprep.subr.mxu0 0.0
    %1107 = vmatpush1.msra.mxu0 0.0
    %1108 = vmatprep.subr.mxu0 0.0
    %1109 = vmatpush1.msra.mxu0 0.0
    %1110 = vmatprep.subr.mxu0 0.0
    %1111 = vmatpush1.msra.mxu0 0.0
    %1112 = vmatprep.subr.mxu0 0.0
    %1113 = vmatpush1.msra.mxu0 0.0
    %1114 = vmatprep.subr.mxu0 0.0
    %1115 = vmatpush1.msra.mxu0 0.0
    %1116 = vmatprep.subr.mxu0 0.0
    %1117 = vmatpush1.msra.mxu0 0.0
    %1118 = vmatprep.subr.mxu0 0.0
    %1119 = vmatpush1.msra.mxu0 0.0
    %1120 = vmatprep.subr.mxu0 0.0
    %1121 = vmatpush1.msra.mxu0 0.0
    %1122 = vmatprep.subr.mxu0 0.0
    %1123 = vmatpush1.msra.mxu0 0.0
    %1124 = vmatprep.subr.mxu0 0.0
    %1125 = vmatpush1.msra.mxu0 0.0
    %1126 = vmatprep.subr.mxu0 0.0
    %1127 = vmatpush1.msra.mxu0 0.0
    %1128 = vmatprep.subr.mxu0 0.0
    %1129 = vmatpush1.msra.mxu0 0.0
    %1130 = vmatprep.subr.mxu0 0.0
    %1131 = vmatpush1.msra.mxu0 0.0
    %1132 = vmatprep.subr.mxu0 0.0
    %1133 = vmatpush1.msra.mxu0 0.0
    %1134 = vmatprep.subr.mxu0 0.0
    %1135 = vmatpush1.msra.mxu0 0.0
    %1136 = vmatprep.subr.mxu0 0.0
    %1137 = vmatpush1.msra.mxu0 0.0
    %1138 = vmatprep.subr.mxu0 0.0
    %1139 = vmatpush1.msra.mxu0 0.0
    %1140 = vmatprep.subr.mxu0 0.0
    %1141 = vmatpush1.msra.mxu0 0.0
    %1142 = vmatprep.mubr.f32.mxu0 0.0
    %1143 = vmatmul.mubr.f32.gmra.mrb[0].mxu0 %v1073
    %v1144 = vpop.f32.mrb[0].mxu0
    %v1145 = vadd.f32 0.0, %v1144
    %v1146 = vpop.f32.mrb[0].mxu0
    %1147 = vmatprep.mubr.f32.mxu0 0.0
    %1148 = vmatmul.mubr.f32.gmra.mrb[0].mxu0 %v1076
    %v1149 = vpop.f32.mrb[0].mxu0
    %v1150 = vadd.f32 0.0, %v1149
    %v1151 = vpop.f32.mrb[0].mxu0
    %1152 = vdwg.mxu0
    %1153 = vrot.lane.b32.xlu0 %v618, 64
    %v1154 = vpop.permute.xlu0 %1153
    %1155 = vrot.lane.b32.xlu0 %v620, 64
    %v1156 = vpop.permute.xlu0 %1155
    %v1160 = vsel %vm275, %v1060, 0
    %v1163 = vsel %vm275, %v1061, 0
    %1165 = vmatprep.subr.mxu0 0.0
    %1166 = vmatpush1.msra.mxu0 %v1154
    %1167 = vmatprep.subr.mxu0 0.0
    %1168 = vmatpush1.msra.mxu0 %v1156
    %1169 = vmatprep.subr.mxu0 0.0
    %1170 = vmatpush1.msra.mxu0 0.0
    %1171 = vmatprep.subr.mxu0 0.0
    %1172 = vmatpush1.msra.mxu0 0.0
    %1173 = vmatprep.subr.mxu0 0.0
    %1174 = vmatpush1.msra.mxu0 0.0
    %1175 = vmatprep.subr.mxu0 0.0
    %1176 = vmatpush1.msra.mxu0 0.0
    %1177 = vmatprep.subr.mxu0 0.0
    %1178 = vmatpush1.msra.mxu0 0.0
    %1179 = vmatprep.subr.mxu0 0.0
    %1180 = vmatpush1.msra.mxu0 0.0
    %1181 = vmatprep.subr.mxu0 0.0
    %1182 = vmatpush1.msra.mxu0 0.0
    %1183 = vmatprep.subr.mxu0 0.0
    %1184 = vmatpush1.msra.mxu0 0.0
    %1185 = vmatprep.subr.mxu0 0.0
    %1186 = vmatpush1.msra.mxu0 0.0
    %1187 = vmatprep.subr.mxu0 0.0
    %1188 = vmatpush1.msra.mxu0 0.0
    %1189 = vmatprep.subr.mxu0 0.0
    %1190 = vmatpush1.msra.mxu0 0.0
    %1191 = vmatprep.subr.mxu0 0.0
    %1192 = vmatpush1.msra.mxu0 0.0
    %1193 = vmatprep.subr.mxu0 0.0
    %1194 = vmatpush1.msra.mxu0 0.0
    %1195 = vmatprep.subr.mxu0 0.0
    %1196 = vmatpush1.msra.mxu0 0.0
    %1197 = vmatprep.subr.mxu0 0.0
    %1198 = vmatpush1.msra.mxu0 0.0
    %1199 = vmatprep.subr.mxu0 0.0
    %1200 = vmatpush1.msra.mxu0 0.0
    %1201 = vmatprep.subr.mxu0 0.0
    %1202 = vmatpush1.msra.mxu0 0.0
    %1203 = vmatprep.subr.mxu0 0.0
    %1204 = vmatpush1.msra.mxu0 0.0
    %1205 = vmatprep.subr.mxu0 0.0
    %1206 = vmatpush1.msra.mxu0 0.0
    %1207 = vmatprep.subr.mxu0 0.0
    %1208 = vmatpush1.msra.mxu0 0.0
    %1209 = vmatprep.subr.mxu0 0.0
    %1210 = vmatpush1.msra.mxu0 0.0
    %1211 = vmatprep.subr.mxu0 0.0
    %1212 = vmatpush1.msra.mxu0 0.0
    %1213 = vmatprep.subr.mxu0 0.0
    %1214 = vmatpush1.msra.mxu0 0.0
    %1215 = vmatprep.subr.mxu0 0.0
    %1216 = vmatpush1.msra.mxu0 0.0
    %1217 = vmatprep.subr.mxu0 0.0
    %1218 = vmatpush1.msra.mxu0 0.0
    %1219 = vmatprep.subr.mxu0 0.0
    %1220 = vmatpush1.msra.mxu0 0.0
    %1221 = vmatprep.subr.mxu0 0.0
    %1222 = vmatpush1.msra.mxu0 0.0
    %1223 = vmatprep.subr.mxu0 0.0
    %1224 = vmatpush1.msra.mxu0 0.0
    %1225 = vmatprep.subr.mxu0 0.0
    %1226 = vmatpush1.msra.mxu0 0.0
    %1227 = vmatprep.subr.mxu0 0.0
    %1228 = vmatpush1.msra.mxu0 0.0
    %1229 = vmatprep.mubr.f32.mxu0 0.0
    %1230 = vmatmul.mubr.f32.gmra.mrb[0].mxu0 %v1160
    %v1231 = vpop.f32.mrb[0].mxu0
    %v1232 = vadd.f32 0.0, %v1231
    %v1233 = vpop.f32.mrb[0].mxu0
    %1234 = vmatprep.mubr.f32.mxu0 0.0
    %1235 = vmatmul.mubr.f32.gmra.mrb[0].mxu0 %v1163
    %v1236 = vpop.f32.mrb[0].mxu0
    %v1237 = vadd.f32 0.0, %v1236
    %v1238 = vpop.f32.mrb[0].mxu0
    %1239 = vdwg.mxu0
    %1240 = vrot.lane.b32.xlu0 %v622, 64
    %v1241 = vpop.permute.xlu0 %1240
    %1242 = vrot.lane.b32.xlu0 %v624, 64
    %v1243 = vpop.permute.xlu0 %1242
    %v1247 = vsel %vm275, %v1062, 0
    %v1250 = vsel %vm275, %v1063, 0
    %1252 = vmatprep.subr.mxu0 0.0
    %1253 = vmatpush1.msra.mxu0 %v1241
    %1254 = vmatprep.subr.mxu0 0.0
    %1255 = vmatpush1.msra.mxu0 %v1243
    %1256 = vmatprep.subr.mxu0 0.0
    %1257 = vmatpush1.msra.mxu0 0.0
    %1258 = vmatprep.subr.mxu0 0.0
    %1259 = vmatpush1.msra.mxu0 0.0
    %1260 = vmatprep.subr.mxu0 0.0
    %1261 = vmatpush1.msra.mxu0 0.0
    %1262 = vmatprep.subr.mxu0 0.0
    %1263 = vmatpush1.msra.mxu0 0.0
    %1264 = vmatprep.subr.mxu0 0.0
    %1265 = vmatpush1.msra.mxu0 0.0
    %1266 = vmatprep.subr.mxu0 0.0
    %1267 = vmatpush1.msra.mxu0 0.0
    %1268 = vmatprep.subr.mxu0 0.0
    %1269 = vmatpush1.msra.mxu0 0.0
    %1270 = vmatprep.subr.mxu0 0.0
    %1271 = vmatpush1.msra.mxu0 0.0
    %1272 = vmatprep.subr.mxu0 0.0
    %1273 = vmatpush1.msra.mxu0 0.0
    %1274 = vmatprep.subr.mxu0 0.0
    %1275 = vmatpush1.msra.mxu0 0.0
    %1276 = vmatprep.subr.mxu0 0.0
    %1277 = vmatpush1.msra.mxu0 0.0
    %1278 = vmatprep.subr.mxu0 0.0
    %1279 = vmatpush1.msra.mxu0 0.0
    %1280 = vmatprep.subr.mxu0 0.0
    %1281 = vmatpush1.msra.mxu0 0.0
    %1282 = vmatprep.subr.mxu0 0.0
    %1283 = vmatpush1.msra.mxu0 0.0
    %1284 = vmatprep.subr.mxu0 0.0
    %1285 = vmatpush1.msra.mxu0 0.0
    %1286 = vmatprep.subr.mxu0 0.0
    %1287 = vmatpush1.msra.mxu0 0.0
    %1288 = vmatprep.subr.mxu0 0.0
    %1289 = vmatpush1.msra.mxu0 0.0
    %1290 = vmatprep.subr.mxu0 0.0
    %1291 = vmatpush1.msra.mxu0 0.0
    %1292 = vmatprep.subr.mxu0 0.0
    %1293 = vmatpush1.msra.mxu0 0.0
    %1294 = vmatprep.subr.mxu0 0.0
    %1295 = vmatpush1.msra.mxu0 0.0
    %1296 = vmatprep.subr.mxu0 0.0
    %1297 = vmatpush1.msra.mxu0 0.0
    %1298 = vmatprep.subr.mxu0 0.0
    %1299 = vmatpush1.msra.mxu0 0.0
    %1300 = vmatprep.subr.mxu0 0.0
    %1301 = vmatpush1.msra.mxu0 0.0
    %1302 = vmatprep.subr.mxu0 0.0
    %1303 = vmatpush1.msra.mxu0 0.0
    %1304 = vmatprep.subr.mxu0 0.0
    %1305 = vmatpush1.msra.mxu0 0.0
    %1306 = vmatprep.subr.mxu0 0.0
    %1307 = vmatpush1.msra.mxu0 0.0
    %1308 = vmatprep.subr.mxu0 0.0
    %1309 = vmatpush1.msra.mxu0 0.0
    %1310 = vmatprep.subr.mxu0 0.0
    %1311 = vmatpush1.msra.mxu0 0.0
    %1312 = vmatprep.subr.mxu0 0.0
    %1313 = vmatpush1.msra.mxu0 0.0
    %1314 = vmatprep.subr.mxu0 0.0
    %1315 = vmatpush1.msra.mxu0 0.0
    %1316 = vmatprep.mubr.f32.mxu0 0.0
    %1317 = vmatmul.mubr.f32.gmra.mrb[0].mxu0 %v1247
    %v1318 = vpop.f32.mrb[0].mxu0
    %v1319 = vadd.f32 0.0, %v1318
    %v1320 = vpop.f32.mrb[0].mxu0
    %1321 = vmatprep.mubr.f32.mxu0 0.0
    %1322 = vmatmul.mubr.f32.gmra.mrb[0].mxu0 %v1250
    %v1323 = vpop.f32.mrb[0].mxu0
    %v1324 = vadd.f32 0.0, %v1323
    %v1325 = vpop.f32.mrb[0].mxu0
    %1326 = vdwg.mxu0
    %1327 = vrot.lane.b32.xlu0 %v626, 64
    %v1328 = vpop.permute.xlu0 %1327
    %1329 = vrot.lane.b32.xlu0 %v628, 64
    %v1330 = vpop.permute.xlu0 %1329
    %v1334 = vsel %vm275, %v1064, 0
    %v1337 = vsel %vm275, %v1065, 0
    %1339 = vmatprep.subr.mxu0 0.0
    %1340 = vmatpush1.msra.mxu0 %v1328
    %1341 = vmatprep.subr.mxu0 0.0
    %1342 = vmatpush1.msra.mxu0 %v1330
    %1343 = vmatprep.subr.mxu0 0.0
    %1344 = vmatpush1.msra.mxu0 0.0
    %1345 = vmatprep.subr.mxu0 0.0
    %1346 = vmatpush1.msra.mxu0 0.0
    %1347 = vmatprep.subr.mxu0 0.0
    %1348 = vmatpush1.msra.mxu0 0.0
    %1349 = vmatprep.subr.mxu0 0.0
    %1350 = vmatpush1.msra.mxu0 0.0
    %1351 = vmatprep.subr.mxu0 0.0
    %1352 = vmatpush1.msra.mxu0 0.0
    %1353 = vmatprep.subr.mxu0 0.0
    %1354 = vmatpush1.msra.mxu0 0.0
    %1355 = vmatprep.subr.mxu0 0.0
    %1356 = vmatpush1.msra.mxu0 0.0
    %1357 = vmatprep.subr.mxu0 0.0
    %1358 = vmatpush1.msra.mxu0 0.0
    %1359 = vmatprep.subr.mxu0 0.0
    %1360 = vmatpush1.msra.mxu0 0.0
    %1361 = vmatprep.subr.mxu0 0.0
    %1362 = vmatpush1.msra.mxu0 0.0
    %1363 = vmatprep.subr.mxu0 0.0
    %1364 = vmatpush1.msra.mxu0 0.0
    %1365 = vmatprep.subr.mxu0 0.0
    %1366 = vmatpush1.msra.mxu0 0.0
    %1367 = vmatprep.subr.mxu0 0.0
    %1368 = vmatpush1.msra.mxu0 0.0
    %1369 = vmatprep.subr.mxu0 0.0
    %1370 = vmatpush1.msra.mxu0 0.0
    %1371 = vmatprep.subr.mxu0 0.0
    %1372 = vmatpush1.msra.mxu0 0.0
    %1373 = vmatprep.subr.mxu0 0.0
    %1374 = vmatpush1.msra.mxu0 0.0
    %1375 = vmatprep.subr.mxu0 0.0
    %1376 = vmatpush1.msra.mxu0 0.0
    %1377 = vmatprep.subr.mxu0 0.0
    %1378 = vmatpush1.msra.mxu0 0.0
    %1379 = vmatprep.subr.mxu0 0.0
    %1380 = vmatpush1.msra.mxu0 0.0
    %1381 = vmatprep.subr.mxu0 0.0
    %1382 = vmatpush1.msra.mxu0 0.0
    %1383 = vmatprep.subr.mxu0 0.0
    %1384 = vmatpush1.msra.mxu0 0.0
    %1385 = vmatprep.subr.mxu0 0.0
    %1386 = vmatpush1.msra.mxu0 0.0
    %1387 = vmatprep.subr.mxu0 0.0
    %1388 = vmatpush1.msra.mxu0 0.0
    %1389 = vmatprep.subr.mxu0 0.0
    %1390 = vmatpush1.msra.mxu0 0.0
    %1391 = vmatprep.subr.mxu0 0.0
    %1392 = vmatpush1.msra.mxu0 0.0
    %1393 = vmatprep.subr.mxu0 0.0
    %1394 = vmatpush1.msra.mxu0 0.0
    %1395 = vmatprep.subr.mxu0 0.0
    %1396 = vmatpush1.msra.mxu0 0.0
    %1397 = vmatprep.subr.mxu0 0.0
    %1398 = vmatpush1.msra.mxu0 0.0
    %1399 = vmatprep.subr.mxu0 0.0
    %1400 = vmatpush1.msra.mxu0 0.0
    %1401 = vmatprep.subr.mxu0 0.0
    %1402 = vmatpush1.msra.mxu0 0.0
    %1403 = vmatprep.mubr.f32.mxu0 0.0
    %1404 = vmatmul.mubr.f32.gmra.mrb[0].mxu0 %v1334
    %v1405 = vpop.f32.mrb[0].mxu0
    %v1406 = vadd.f32 0.0, %v1405
    %v1407 = vpop.f32.mrb[0].mxu0
    %1408 = vmatprep.mubr.f32.mxu0 0.0
    %1409 = vmatmul.mubr.f32.gmra.mrb[0].mxu0 %v1337
    %v1410 = vpop.f32.mrb[0].mxu0
    %v1411 = vadd.f32 0.0, %v1410
    %v1412 = vpop.f32.mrb[0].mxu0
    %1413 = vdwg.mxu0
    %1416 = vrot.lane.b32.xlu0 %v1232, 8
    %v1417 = vpop.permute.xlu0 %1416
    %1418 = vrot.lane.b32.xlu0 %v1237, 8
    %v1419 = vpop.permute.xlu0 %1418
    %1424 = vrot.lane.b32.xlu0 %v1319, 16
    %v1425 = vpop.permute.xlu0 %1424
    %1426 = vrot.lane.b32.xlu0 %v1324, 16
    %v1427 = vpop.permute.xlu0 %1426
    %1432 = vrot.lane.b32.xlu0 %v1406, 24
    %v1433 = vpop.permute.xlu0 %1432
    %1434 = vrot.lane.b32.xlu0 %v1411, 24
    %v1435 = vpop.permute.xlu0 %1434
    %v1438 = vsel %vm633, %v1145, %v1417
    %v1439 = vsel %vm633, %v1150, %v1419
    %v1440 = vsel %vm275, %v1438, %v1425
    %v1441 = vsel %vm275, %v1439, %v1427
    %vm1442 = vcmask 195584
    %v1443 = vsel %vm1442, %v1440, %v1433
    %v1444 = vsel %vm1442, %v1441, %v1435
    %1449 = vrot.lane.b32.xlu0 %v525, 32
    %v1450 = vpop.permute.xlu0 %1449
    %1451 = vrot.lane.b32.xlu0 %v526, 32
    %v1452 = vpop.permute.xlu0 %1451
    %1453 = vrot.lane.b32.xlu0 %v527, 32
    %v1454 = vpop.permute.xlu0 %1453
    %1455 = vrot.lane.b32.xlu0 %v528, 32
    %v1456 = vpop.permute.xlu0 %1455
    %1462 = vrot.lane.b32.xlu0 %v533, 32
    %v1463 = vpop.permute.xlu0 %1462
    %v1466 = vsel %vm98, %v1443, 0
    %v1469 = vsel %vm98, %v1444, 0
    %1471 = vmatprep.subr.mxu0 0.0
    %1472 = vmatpush1.msra.mxu0 %v1450
    %1473 = vmatprep.subr.mxu0 0.0
    %1474 = vmatpush1.msra.mxu0 %v1452
    %1475 = vmatprep.subr.mxu0 0.0
    %1476 = vmatpush1.msra.mxu0 %v1454
    %1477 = vmatprep.subr.mxu0 0.0
    %1478 = vmatpush1.msra.mxu0 %v1456
    %1479 = vmatprep.subr.mxu0 0.0
    %1480 = vmatpush1.msra.mxu0 0.0
    %1481 = vmatprep.subr.mxu0 0.0
    %1482 = vmatpush1.msra.mxu0 0.0
    %1483 = vmatprep.subr.mxu0 0.0
    %1484 = vmatpush1.msra.mxu0 0.0
    %1485 = vmatprep.subr.mxu0 0.0
    %1486 = vmatpush1.msra.mxu0 0.0
    %1487 = vmatprep.subr.mxu0 0.0
    %1488 = vmatpush1.msra.mxu0 0.0
    %1489 = vmatprep.subr.mxu0 0.0
    %1490 = vmatpush1.msra.mxu0 0.0
    %1491 = vmatprep.subr.mxu0 0.0
    %1492 = vmatpush1.msra.mxu0 0.0
    %1493 = vmatprep.subr.mxu0 0.0
    %1494 = vmatpush1.msra.mxu0 0.0
    %1495 = vmatprep.subr.mxu0 0.0
    %1496 = vmatpush1.msra.mxu0 0.0
    %1497 = vmatprep.subr.mxu0 0.0
    %1498 = vmatpush1.msra.mxu0 0.0
    %1499 = vmatprep.subr.mxu0 0.0
    %1500 = vmatpush1.msra.mxu0 0.0
    %1501 = vmatprep.subr.mxu0 0.0
    %1502 = vmatpush1.msra.mxu0 0.0
    %1503 = vmatprep.subr.mxu0 0.0
    %1504 = vmatpush1.msra.mxu0 0.0
    %1505 = vmatprep.subr.mxu0 0.0
    %1506 = vmatpush1.msra.mxu0 0.0
    %1507 = vmatprep.subr.mxu0 0.0
    %1508 = vmatpush1.msra.mxu0 0.0
    %1509 = vmatprep.subr.mxu0 0.0
    %1510 = vmatpush1.msra.mxu0 0.0
    %1511 = vmatprep.subr.mxu0 0.0
    %1512 = vmatpush1.msra.mxu0 0.0
    %1513 = vmatprep.subr.mxu0 0.0
    %1514 = vmatpush1.msra.mxu0 0.0
    %1515 = vmatprep.subr.mxu0 0.0
    %1516 = vmatpush1.msra.mxu0 0.0
    %1517 = vmatprep.subr.mxu0 0.0
    %1518 = vmatpush1.msra.mxu0 0.0
    %1519 = vmatprep.subr.mxu0 0.0
    %1520 = vmatpush1.msra.mxu0 0.0
    %1521 = vmatprep.subr.mxu0 0.0
    %1522 = vmatpush1.msra.mxu0 0.0
    %1523 = vmatprep.subr.mxu0 0.0
    %1524 = vmatpush1.msra.mxu0 0.0
    %1525 = vmatprep.subr.mxu0 0.0
    %1526 = vmatpush1.msra.mxu0 0.0
    %1527 = vmatprep.subr.mxu0 0.0
    %1528 = vmatpush1.msra.mxu0 0.0
    %1529 = vmatprep.subr.mxu0 0.0
    %1530 = vmatpush1.msra.mxu0 0.0
    %1531 = vmatprep.subr.mxu0 0.0
    %1532 = vmatpush1.msra.mxu0 0.0
    %1533 = vmatprep.subr.mxu0 0.0
    %1534 = vmatpush1.msra.mxu0 0.0
    %1535 = vmatprep.mubr.f32.mxu0 0.0
    %1536 = vmatmul.mubr.f32.gmra.mrb[0].mxu0 %v1466
    %v1537 = vpop.f32.mrb[0].mxu0
    %v1538 = vadd.f32 %v1463, %v1537
    %v1539 = vpop.f32.mrb[0].mxu0
    %1540 = vmatprep.mubr.f32.mxu0 0.0
    %1541 = vmatmul.mubr.f32.gmra.mrb[0].mxu0 %v1469
    %v1542 = vpop.f32.mrb[0].mxu0
    %v1543 = vadd.f32 %v1463, %v1542
    %v1544 = vpop.f32.mrb[0].mxu0
    %1545 = vdwg.mxu0
    %v1546 = vadd.f32 %v1538, %v521
    %v1547 = vadd.f32 %v1543, %v522
    %v1548 = vsel %vm98, %v1546, 0.0
    %1549 = vadd.xlane.f32.xlu0 %v1548
    %v1550 = vpop.xlane.xlu0 %1549
    %v1551 = vsel %vm98, %v1547, 0.0
    %1552 = vadd.xlane.f32.xlu0 %v1551
    %v1553 = vpop.xlane.xlu0 %1552
    %v1554 = vmul.f32 %v1550, %v491
    %v1555 = vmul.f32 %v1553, %v491
    %v1556 = vsub.f32 %v1546, %v1554
    %v1557 = vsub.f32 %v1547, %v1555
    %v1558 = vmul.f32 %v1556, %v1556
    %v1559 = vmul.f32 %v1557, %v1557
    %v1560 = vsel %vm98, %v1558, 0.0
    %1561 = vadd.xlane.f32.xlu0 %v1560
    %v1562 = vpop.xlane.xlu0 %1561
    %v1563 = vsel %vm98, %v1559, 0.0
    %1564 = vadd.xlane.f32.xlu0 %v1563
    %v1565 = vpop.xlane.xlu0 %1564
    %v1566 = vmul.f32 %v1562, %v491
    %v1567 = vmul.f32 %v1565, %v491
    %v1568 = vadd.f32 %v1566, 1e-12
    %v1569 = vadd.f32 %v1567, 1e-12
    %v1570 = vrsqrt.pop %v1568
    %v1571 = vrsqrt.pop %v1569
    %v1572 = vmul.f32 %v1556, %v1570
    %v1573 = vmul.f32 %v1557, %v1571
    %v1574 = vlaneseq
    %v1575 = vshrl.u32 %v1574, 7
    %v1576 = vsub.s32 2, %v1575
    %v1577 = vrot.slane %v529, %v1576
    %v1578 = vmul.f32 %v1572, %v1577
    %v1579 = vmul.f32 %v1573, %v1577
    %1581 = vrot.lane.b32.xlu0 %v1577, 96
    %v1582 = vpop.permute.xlu0 %1581
    %v1584 = vadd.f32 %v1578, %v1582
    %v1585 = vadd.f32 %v1579, %v1582
    %v1586 = vld [vmem:[%s11] sm:$0xff]
    %v1587 = vld [vmem:[%s11 + $0x8] sm:$0xff]
    %v1588 = vld [vmem:[%s11 + $0x10] sm:$0xff]
    %v1589 = vld [vmem:[%s11 + $0x18] sm:$0xff]
    %v1590 = vlaneseq
    %v1591 = vshrl.u32 %v1590, 7
    %v1592 = vsub.s32 1, %v1591
    %v1593 = vrot.slane %v529, %v1592
    %v1595 = vsel %vm98, %v1584, 0
    %v1598 = vsel %vm98, %v1585, 0
    %1600 = vmatprep.subr.mxu0 0.0
    %1601 = vmatpush1.msra.mxu0 %v1586
    %1602 = vmatprep.subr.mxu0 0.0
    %1603 = vmatpush1.msra.mxu0 %v1587
    %1604 = vmatprep.subr.mxu0 0.0
    %1605 = vmatpush1.msra.mxu0 %v1588
    %1606 = vmatprep.subr.mxu0 0.0
    %1607 = vmatpush1.msra.mxu0 %v1589
    %1608 = vmatprep.subr.mxu0 0.0
    %1609 = vmatpush1.msra.mxu0 0.0
    %1610 = vmatprep.subr.mxu0 0.0
    %1611 = vmatpush1.msra.mxu0 0.0
    %1612 = vmatprep.subr.mxu0 0.0
    %1613 = vmatpush1.msra.mxu0 0.0
    %1614 = vmatprep.subr.mxu0 0.0
    %1615 = vmatpush1.msra.mxu0 0.0
    %1616 = vmatprep.subr.mxu0 0.0
    %1617 = vmatpush1.msra.mxu0 0.0
    %1618 = vmatprep.subr.mxu0 0.0
    %1619 = vmatpush1.msra.mxu0 0.0
    %1620 = vmatprep.subr.mxu0 0.0
    %1621 = vmatpush1.msra.mxu0 0.0
    %1622 = vmatprep.subr.mxu0 0.0
    %1623 = vmatpush1.msra.mxu0 0.0
    %1624 = vmatprep.subr.mxu0 0.0
    %1625 = vmatpush1.msra.mxu0 0.0
    %1626 = vmatprep.subr.mxu0 0.0
    %1627 = vmatpush1.msra.mxu0 0.0
    %1628 = vmatprep.subr.mxu0 0.0
    %1629 = vmatpush1.msra.mxu0 0.0
    %1630 = vmatprep.subr.mxu0 0.0
    %1631 = vmatpush1.msra.mxu0 0.0
    %1632 = vmatprep.subr.mxu0 0.0
    %1633 = vmatpush1.msra.mxu0 0.0
    %1634 = vmatprep.subr.mxu0 0.0
    %1635 = vmatpush1.msra.mxu0 0.0
    %1636 = vmatprep.subr.mxu0 0.0
    %1637 = vmatpush1.msra.mxu0 0.0
    %1638 = vmatprep.subr.mxu0 0.0
    %1639 = vmatpush1.msra.mxu0 0.0
    %1640 = vmatprep.subr.mxu0 0.0
    %1641 = vmatpush1.msra.mxu0 0.0
    %1642 = vmatprep.subr.mxu0 0.0
    %1643 = vmatpush1.msra.mxu0 0.0
    %1644 = vmatprep.subr.mxu0 0.0
    %1645 = vmatpush1.msra.mxu0 0.0
    %1646 = vmatprep.subr.mxu0 0.0
    %1647 = vmatpush1.msra.mxu0 0.0
    %1648 = vmatprep.subr.mxu0 0.0
    %1649 = vmatpush1.msra.mxu0 0.0
    %1650 = vmatprep.subr.mxu0 0.0
    %1651 = vmatpush1.msra.mxu0 0.0
    %1652 = vmatprep.subr.mxu0 0.0
    %1653 = vmatpush1.msra.mxu0 0.0
    %1654 = vmatprep.subr.mxu0 0.0
    %1655 = vmatpush1.msra.mxu0 0.0
    %1656 = vmatprep.subr.mxu0 0.0
    %1657 = vmatpush1.msra.mxu0 0.0
    %1658 = vmatprep.subr.mxu0 0.0
    %1659 = vmatpush1.msra.mxu0 0.0
    %1660 = vmatprep.subr.mxu0 0.0
    %1661 = vmatpush1.msra.mxu0 0.0
    %1662 = vmatprep.subr.mxu0 0.0
    %1663 = vmatpush1.msra.mxu0 0.0
    %1664 = vmatprep.mubr.f32.mxu0 0.0
    %1665 = vmatmul.mubr.f32.gmra.mrb[0].mxu0 %v1595
    %v1666 = vpop.f32.mrb[0].mxu0
    %v1667 = vadd.f32 %v1593, %v1666
    %v1668 = vpop.f32.mrb[0].mxu0
    %1669 = vmatprep.mubr.f32.mxu0 0.0
    %1670 = vmatmul.mubr.f32.gmra.mrb[0].mxu0 %v1598
    %v1671 = vpop.f32.mrb[0].mxu0
    %v1672 = vadd.f32 %v1593, %v1671
    %v1673 = vpop.f32.mrb[0].mxu0
    %1674 = vdwg.mxu0
    %v1675 = vmul.f32 %v1667, 0.5
    %v1676 = vmul.f32 %v1672, 0.5
    %v1677 = vmul.f32 %v1667, %v1667
    %v1678 = vmul.f32 %v1672, %v1672
    %v1679 = vmul.f32 %v1677, %v1667
    %v1680 = vmul.f32 %v1678, %v1672
    %v1681 = vmul.f32 %v1679, 0.044715
    %v1682 = vmul.f32 %v1680, 0.044715
    %v1683 = vadd.f32 %v1667, %v1681
    %v1684 = vadd.f32 %v1672, %v1682
    %v1685 = vmul.f32 %v1683, 0.7978846
    %v1686 = vmul.f32 %v1684, 0.7978846
    %v1687 = vtanh.pop %v1685
    %v1688 = vtanh.pop %v1686
    %v1689 = vadd.f32 %v1687, 1.0
    %v1690 = vadd.f32 %v1688, 1.0
    %v1691 = vmul.f32 %v1675, %v1689
    %v1692 = vmul.f32 %v1676, %v1690
    %v1693 = vld [vmem:[%s12] sm:$0xff]
    %v1694 = vld [vmem:[%s12 + $0x8] sm:$0xff]
    %v1695 = vld [vmem:[%s12 + $0x10] sm:$0xff]
    %v1696 = vld [vmem:[%s12 + $0x18] sm:$0xff]
    %v1697 = vld [vmem:[%s12 + $0x20] sm:$0xff]
    %v1698 = vld [vmem:[%s12 + $0x28] sm:$0xff]
    %v1699 = vld [vmem:[%s12 + $0x30] sm:$0xff]
    %v1700 = vld [vmem:[%s12 + $0x38] sm:$0xff]
    %1702 = vrot.lane.b32.xlu0 %v1593, 64
    %v1703 = vpop.permute.xlu0 %1702
    %vm1705 = vcmask 523264
    %v1707 = vsel %vm1705, %v1691, 0
    %v1710 = vsel %vm1705, %v1692, 0
    %1712 = vmatprep.subr.mxu0 0.0
    %1713 = vmatpush1.msra.mxu0 %v1693
    %1714 = vmatprep.subr.mxu0 0.0
    %1715 = vmatpush1.msra.mxu0 %v1694
    %1716 = vmatprep.subr.mxu0 0.0
    %1717 = vmatpush1.msra.mxu0 %v1695
    %1718 = vmatprep.subr.mxu0 0.0
    %1719 = vmatpush1.msra.mxu0 %v1696
    %1720 = vmatprep.subr.mxu0 0.0
    %1721 = vmatpush1.msra.mxu0 %v1697
    %1722 = vmatprep.subr.mxu0 0.0
    %1723 = vmatpush1.msra.mxu0 %v1698
    %1724 = vmatprep.subr.mxu0 0.0
    %1725 = vmatpush1.msra.mxu0 %v1699
    %1726 = vmatprep.subr.mxu0 0.0
    %1727 = vmatpush1.msra.mxu0 %v1700
    %1728 = vmatprep.subr.mxu0 0.0
    %1729 = vmatpush1.msra.mxu0 0.0
    %1730 = vmatprep.subr.mxu0 0.0
    %1731 = vmatpush1.msra.mxu0 0.0
    %1732 = vmatprep.subr.mxu0 0.0
    %1733 = vmatpush1.msra.mxu0 0.0
    %1734 = vmatprep.subr.mxu0 0.0
    %1735 = vmatpush1.msra.mxu0 0.0
    %1736 = vmatprep.subr.mxu0 0.0
    %1737 = vmatpush1.msra.mxu0 0.0
    %1738 = vmatprep.subr.mxu0 0.0
    %1739 = vmatpush1.msra.mxu0 0.0
    %1740 = vmatprep.subr.mxu0 0.0
    %1741 = vmatpush1.msra.mxu0 0.0
    %1742 = vmatprep.subr.mxu0 0.0
    %1743 = vmatpush1.msra.mxu0 0.0
    %1744 = vmatprep.subr.mxu0 0.0
    %1745 = vmatpush1.msra.mxu0 0.0
    %1746 = vmatprep.subr.mxu0 0.0
    %1747 = vmatpush1.msra.mxu0 0.0
    %1748 = vmatprep.subr.mxu0 0.0
    %1749 = vmatpush1.msra.mxu0 0.0
    %1750 = vmatprep.subr.mxu0 0.0
    %1751 = vmatpush1.msra.mxu0 0.0
    %1752 = vmatprep.subr.mxu0 0.0
    %1753 = vmatpush1.msra.mxu0 0.0
    %1754 = vmatprep.subr.mxu0 0.0
    %1755 = vmatpush1.msra.mxu0 0.0
    %1756 = vmatprep.subr.mxu0 0.0
    %1757 = vmatpush1.msra.mxu0 0.0
    %1758 = vmatprep.subr.mxu0 0.0
    %1759 = vmatpush1.msra.mxu0 0.0
    %1760 = vmatprep.subr.mxu0 0.0
    %1761 = vmatpush1.msra.mxu0 0.0
    %1762 = vmatprep.subr.mxu0 0.0
    %1763 = vmatpush1.msra.mxu0 0.0
    %1764 = vmatprep.subr.mxu0 0.0
    %1765 = vmatpush1.msra.mxu0 0.0
    %1766 = vmatprep.subr.mxu0 0.0
    %1767 = vmatpush1.msra.mxu0 0.0
    %1768 = vmatprep.subr.mxu0 0.0
    %1769 = vmatpush1.msra.mxu0 0.0
    %1770 = vmatprep.subr.mxu0 0.0
    %1771 = vmatpush1.msra.mxu0 0.0
    %1772 = vmatprep.subr.mxu0 0.0
    %1773 = vmatpush1.msra.mxu0 0.0
    %1774 = vmatprep.subr.mxu0 0.0
    %1775 = vmatpush1.msra.mxu0 0.0
    %1776 = vmatprep.mubr.f32.mxu0 0.0
    %1777 = vmatmul.mubr.f32.gmra.mrb[0].mxu0 %v1707
    %v1778 = vpop.f32.mrb[0].mxu0
    %v1779 = vadd.f32 %v1703, %v1778
    %v1780 = vpop.f32.mrb[0].mxu0
    %1781 = vmatprep.mubr.f32.mxu0 0.0
    %1782 = vmatmul.mubr.f32.gmra.mrb[0].mxu0 %v1710
    %v1783 = vpop.f32.mrb[0].mxu0
    %v1784 = vadd.f32 %v1703, %v1783
    %v1785 = vpop.f32.mrb[0].mxu0
    %1786 = vdwg.mxu0
    %v1787 = vadd.f32 %v1779, %v1584
    %v1788 = vadd.f32 %v1784, %v1585
    %v1789 = vsel %vm98, %v1787, 0.0
    %1790 = vadd.xlane.f32.xlu0 %v1789
    %v1791 = vpop.xlane.xlu0 %1790
    %v1792 = vsel %vm98, %v1788, 0.0
    %1793 = vadd.xlane.f32.xlu0 %v1792
    %v1794 = vpop.xlane.xlu0 %1793
    %v1795 = vmul.f32 %v1791, %v491
    %v1796 = vmul.f32 %v1794, %v491
    %v1797 = vsub.f32 %v1787, %v1795
    %v1798 = vsub.f32 %v1788, %v1796
    %v1799 = vmul.f32 %v1797, %v1797
    %v1800 = vmul.f32 %v1798, %v1798
    %v1801 = vsel %vm98, %v1799, 0.0
    %1802 = vadd.xlane.f32.xlu0 %v1801
    %v1803 = vpop.xlane.xlu0 %1802
    %v1804 = vsel %vm98, %v1800, 0.0
    %1805 = vadd.xlane.f32.xlu0 %v1804
    %v1806 = vpop.xlane.xlu0 %1805
    %v1807 = vmul.f32 %v1803, %v491
    %v1808 = vmul.f32 %v1806, %v491
    %v1809 = vadd.f32 %v1807, 1e-12
    %v1810 = vadd.f32 %v1808, 1e-12
    %v1811 = vrsqrt.pop %v1809
    %v1812 = vrsqrt.pop %v1810
    %v1813 = vmul.f32 %v1797, %v1811
    %v1814 = vmul.f32 %v1798, %v1812
    %1815 = vrot.lane.b32.xlu0 %v1577, 64
    %v1816 = vpop.permute.xlu0 %1815
    %v1818 = vmul.f32 %v1813, %v1816
    %v1819 = vmul.f32 %v1814, %v1816
    %1820 = vrot.lane.b32.xlu0 %v1577, 32
    %v1821 = vpop.permute.xlu0 %1820
    %v1823 = vadd.f32 %v1818, %v1821
    %v1824 = vadd.f32 %v1819, %v1821
    %s1825 = scalar_lea.vmem %s9, 32
    %v1826 = vld [vmem:[%s1825] sm:$0xff]
    %v1827 = vld [vmem:[%s1825 + $0x8] sm:$0xff]
    %v1828 = vld [vmem:[%s1825 + $0x10] sm:$0xff]
    %v1829 = vld [vmem:[%s1825 + $0x18] sm:$0xff]
    %s1830 = scalar_lea.vmem %s10, 4
    %v1831 = vld [vmem:[%s1830] sm:$0x7]
    %v1832 = vlaneseq
    %v1833 = vshrl.u32 %v1832, 7
    %v1834 = vsub.s32 0, %v1833
    %v1835 = vrot.slane %v1831, %v1834
    %v1837 = vsel %vm98, %v1823, 0
    %v1840 = vsel %vm98, %v1824, 0
    %1842 = vmatprep.subr.mxu0 0.0
    %1843 = vmatpush1.msra.mxu0 %v1826
    %1844 = vmatprep.subr.mxu0 0.0
    %1845 = vmatpush1.msra.mxu0 %v1827
    %1846 = vmatprep.subr.mxu0 0.0
    %1847 = vmatpush1.msra.mxu0 %v1828
    %1848 = vmatprep.subr.mxu0 0.0
    %1849 = vmatpush1.msra.mxu0 %v1829
    %1850 = vmatprep.subr.mxu0 0.0
    %1851 = vmatpush1.msra.mxu0 0.0
    %1852 = vmatprep.subr.mxu0 0.0
    %1853 = vmatpush1.msra.mxu0 0.0
    %1854 = vmatprep.subr.mxu0 0.0
    %1855 = vmatpush1.msra.mxu0 0.0
    %1856 = vmatprep.subr.mxu0 0.0
    %1857 = vmatpush1.msra.mxu0 0.0
    %1858 = vmatprep.subr.mxu0 0.0
    %1859 = vmatpush1.msra.mxu0 0.0
    %1860 = vmatprep.subr.mxu0 0.0
    %1861 = vmatpush1.msra.mxu0 0.0
    %1862 = vmatprep.subr.mxu0 0.0
    %1863 = vmatpush1.msra.mxu0 0.0
    %1864 = vmatprep.subr.mxu0 0.0
    %1865 = vmatpush1.msra.mxu0 0.0
    %1866 = vmatprep.subr.mxu0 0.0
    %1867 = vmatpush1.msra.mxu0 0.0
    %1868 = vmatprep.subr.mxu0 0.0
    %1869 = vmatpush1.msra.mxu0 0.0
    %1870 = vmatprep.subr.mxu0 0.0
    %1871 = vmatpush1.msra.mxu0 0.0
    %1872 = vmatprep.subr.mxu0 0.0
    %1873 = vmatpush1.msra.mxu0 0.0
    %1874 = vmatprep.subr.mxu0 0.0
    %1875 = vmatpush1.msra.mxu0 0.0
    %1876 = vmatprep.subr.mxu0 0.0
    %1877 = vmatpush1.msra.mxu0 0.0
    %1878 = vmatprep.subr.mxu0 0.0
    %1879 = vmatpush1.msra.mxu0 0.0
    %1880 = vmatprep.subr.mxu0 0.0
    %1881 = vmatpush1.msra.mxu0 0.0
    %1882 = vmatprep.subr.mxu0 0.0
    %1883 = vmatpush1.msra.mxu0 0.0
    %1884 = vmatprep.subr.mxu0 0.0
    %1885 = vmatpush1.msra.mxu0 0.0
    %1886 = vmatprep.subr.mxu0 0.0
    %1887 = vmatpush1.msra.mxu0 0.0
    %1888 = vmatprep.subr.mxu0 0.0
    %1889 = vmatpush1.msra.mxu0 0.0
    %1890 = vmatprep.subr.mxu0 0.0
    %1891 = vmatpush1.msra.mxu0 0.0
    %1892 = vmatprep.subr.mxu0 0.0
    %1893 = vmatpush1.msra.mxu0 0.0
    %1894 = vmatprep.subr.mxu0 0.0
    %1895 = vmatpush1.msra.mxu0 0.0
    %1896 = vmatprep.subr.mxu0 0.0
    %1897 = vmatpush1.msra.mxu0 0.0
    %1898 = vmatprep.subr.mxu0 0.0
    %1899 = vmatpush1.msra.mxu0 0.0
    %1900 = vmatprep.subr.mxu0 0.0
    %1901 = vmatpush1.msra.mxu0 0.0
    %1902 = vmatprep.subr.mxu0 0.0
    %1903 = vmatpush1.msra.mxu0 0.0
    %1904 = vmatprep.subr.mxu0 0.0
    %1905 = vmatpush1.msra.mxu0 0.0
    %1906 = vmatprep.mubr.f32.mxu0 0.0
    %1907 = vmatmul.mubr.f32.gmra.mrb[0].mxu0 %v1837
    %v1908 = vpop.f32.mrb[0].mxu0
    %v1909 = vadd.f32 %v1835, %v1908
    %v1910 = vpop.f32.mrb[0].mxu0
    %1911 = vmatprep.mubr.f32.mxu0 0.0
    %1912 = vmatmul.mubr.f32.gmra.mrb[0].mxu0 %v1840
    %v1913 = vpop.f32.mrb[0].mxu0
    %v1914 = vadd.f32 %v1835, %v1913
    %v1915 = vpop.f32.mrb[0].mxu0
    %1916 = vdwg.mxu0
    %1919 = vrot.lane.b32.xlu0 %v1909, 120
    %v1920 = vpop.permute.xlu0 %1919
    %1921 = vrot.lane.b32.xlu0 %v1914, 120
    %v1922 = vpop.permute.xlu0 %1921
    %1923 = vrot.lane.b32.xlu0 %v1909, 112
    %v1924 = vpop.permute.xlu0 %1923
    %1925 = vrot.lane.b32.xlu0 %v1914, 112
    %v1926 = vpop.permute.xlu0 %1925
    %1927 = vrot.lane.b32.xlu0 %v1909, 104
    %v1928 = vpop.permute.xlu0 %1927
    %1929 = vrot.lane.b32.xlu0 %v1914, 104
    %v1930 = vpop.permute.xlu0 %1929
    %1931 = vrot.lane.b32.xlu0 %v1909, 96
    %v1932 = vpop.permute.xlu0 %1931
    %1933 = vrot.lane.b32.xlu0 %v1914, 96
    %v1934 = vpop.permute.xlu0 %1933
    %v1935 = vsel %vm633, %v1909, 0
    %v1937 = vsel %vm633, %v1914, 0
    %v1939 = vsel %vm633, %v1932, 0
    %v1941 = vsel %vm633, %v1934, 0
    %1943 = vmatprep.subr.mxu0 0.0
    %1944 = vmatpush1.xpose.msra.mxu0 %v1939
    %1945 = vmatprep.subr.mxu0 0.0
    %1946 = vmatpush1.xpose.msra.mxu0 %v1941
    %1947 = vmatprep.subr.mxu0 0.0
    %1948 = vmatpush1.xpose.msra.mxu0 0.0
    %1949 = vmatprep.subr.mxu0 0.0
    %1950 = vmatpush1.xpose.msra.mxu0 0.0
    %1951 = vmatprep.subr.mxu0 0.0
    %1952 = vmatpush1.xpose.msra.mxu0 0.0
    %1953 = vmatprep.subr.mxu0 0.0
    %1954 = vmatpush1.xpose.msra.mxu0 0.0
    %1955 = vmatprep.subr.mxu0 0.0
    %1956 = vmatpush1.xpose.msra.mxu0 0.0
    %1957 = vmatprep.subr.mxu0 0.0
    %1958 = vmatpush1.xpose.msra.mxu0 0.0
    %1959 = vmatprep.subr.mxu0 0.0
    %1960 = vmatpush1.xpose.msra.mxu0 0.0
    %1961 = vmatprep.subr.mxu0 0.0
    %1962 = vmatpush1.xpose.msra.mxu0 0.0
    %1963 = vmatprep.subr.mxu0 0.0
    %1964 = vmatpush1.xpose.msra.mxu0 0.0
    %1965 = vmatprep.subr.mxu0 0.0
    %1966 = vmatpush1.xpose.msra.mxu0 0.0
    %1967 = vmatprep.subr.mxu0 0.0
    %1968 = vmatpush1.xpose.msra.mxu0 0.0
    %1969 = vmatprep.subr.mxu0 0.0
    %1970 = vmatpush1.xpose.msra.mxu0 0.0
    %1971 = vmatprep.subr.mxu0 0.0
    %1972 = vmatpush1.xpose.msra.mxu0 0.0
    %1973 = vmatprep.subr.mxu0 0.0
    %1974 = vmatpush1.xpose.msra.mxu0 0.0
    %1975 = vmatprep.subr.mxu0 0.0
    %1976 = vmatpush1.xpose.msra.mxu0 0.0
    %1977 = vmatprep.subr.mxu0 0.0
    %1978 = vmatpush1.xpose.msra.mxu0 0.0
    %1979 = vmatprep.subr.mxu0 0.0
    %1980 = vmatpush1.xpose.msra.mxu0 0.0
    %1981 = vmatprep.subr.mxu0 0.0
    %1982 = vmatpush1.xpose.msra.mxu0 0.0
    %1983 = vmatprep.subr.mxu0 0.0
    %1984 = vmatpush1.xpose.msra.mxu0 0.0
    %1985 = vmatprep.subr.mxu0 0.0
    %1986 = vmatpush1.xpose.msra.mxu0 0.0
    %1987 = vmatprep.subr.mxu0 0.0
    %1988 = vmatpush1.xpose.msra.mxu0 0.0
    %1989 = vmatprep.subr.mxu0 0.0
    %1990 = vmatpush1.xpose.msra.mxu0 0.0
    %1991 = vmatprep.subr.mxu0 0.0
    %1992 = vmatpush1.xpose.msra.mxu0 0.0
    %1993 = vmatprep.subr.mxu0 0.0
    %1994 = vmatpush1.xpose.msra.mxu0 0.0
    %1995 = vmatprep.subr.mxu0 0.0
    %1996 = vmatpush1.xpose.msra.mxu0 0.0
    %1997 = vmatprep.subr.mxu0 0.0
    %1998 = vmatpush1.xpose.msra.mxu0 0.0
    %1999 = vmatprep.subr.mxu0 0.0
    %2000 = vmatpush1.xpose.msra.mxu0 0.0
    %2001 = vmatprep.subr.mxu0 0.0
    %2002 = vmatpush1.xpose.msra.mxu0 0.0
    %2003 = vmatprep.subr.mxu0 0.0
    %2004 = vmatpush1.xpose.msra.mxu0 0.0
    %2005 = vmatprep.subr.mxu0 0.0
    %2006 = vmatpush1.xpose.msra.mxu0 0.0
    %2007 = vmatprep.mubr.f32.mxu0 0.0
    %2008 = vmatmul.mubr.f32.gmra.mrb[0].mxu0 %v1935
    %v2009 = vpop.f32.mrb[0].mxu0
    %v2010 = vadd.f32 %v523, %v2009
    %v2011 = vpop.f32.mrb[0].mxu0
    %2012 = vmatprep.mubr.f32.mxu0 0.0
    %2013 = vmatmul.mubr.f32.gmra.mrb[0].mxu0 %v1937
    %v2014 = vpop.f32.mrb[0].mxu0
    %v2015 = vadd.f32 %v524, %v2014
    %v2016 = vpop.f32.mrb[0].mxu0
    %2017 = vdwg.mxu0
    %2018 = vrot.lane.b32.xlu0 %v1920, 96
    %v2019 = vpop.permute.xlu0 %2018
    %2020 = vrot.lane.b32.xlu0 %v1922, 96
    %v2021 = vpop.permute.xlu0 %2020
    %v2022 = vsel %vm633, %v1920, 0
    %v2024 = vsel %vm633, %v1922, 0
    %v2026 = vsel %vm633, %v2019, 0
    %v2028 = vsel %vm633, %v2021, 0
    %2030 = vmatprep.subr.mxu0 0.0
    %2031 = vmatpush1.xpose.msra.mxu0 %v2026
    %2032 = vmatprep.subr.mxu0 0.0
    %2033 = vmatpush1.xpose.msra.mxu0 %v2028
    %2034 = vmatprep.subr.mxu0 0.0
    %2035 = vmatpush1.xpose.msra.mxu0 0.0
    %2036 = vmatprep.subr.mxu0 0.0
    %2037 = vmatpush1.xpose.msra.mxu0 0.0
    %2038 = vmatprep.subr.mxu0 0.0
    %2039 = vmatpush1.xpose.msra.mxu0 0.0
    %2040 = vmatprep.subr.mxu0 0.0
    %2041 = vmatpush1.xpose.msra.mxu0 0.0
    %2042 = vmatprep.subr.mxu0 0.0
    %2043 = vmatpush1.xpose.msra.mxu0 0.0
    %2044 = vmatprep.subr.mxu0 0.0
    %2045 = vmatpush1.xpose.msra.mxu0 0.0
    %2046 = vmatprep.subr.mxu0 0.0
    %2047 = vmatpush1.xpose.msra.mxu0 0.0
    %2048 = vmatprep.subr.mxu0 0.0
    %2049 = vmatpush1.xpose.msra.mxu0 0.0
    %2050 = vmatprep.subr.mxu0 0.0
    %2051 = vmatpush1.xpose.msra.mxu0 0.0
    %2052 = vmatprep.subr.mxu0 0.0
    %2053 = vmatpush1.xpose.msra.mxu0 0.0
    %2054 = vmatprep.subr.mxu0 0.0
    %2055 = vmatpush1.xpose.msra.mxu0 0.0
    %2056 = vmatprep.subr.mxu0 0.0
    %2057 = vmatpush1.xpose.msra.mxu0 0.0
    %2058 = vmatprep.subr.mxu0 0.0
    %2059 = vmatpush1.xpose.msra.mxu0 0.0
    %2060 = vmatprep.subr.mxu0 0.0
    %2061 = vmatpush1.xpose.msra.mxu0 0.0
    %2062 = vmatprep.subr.mxu0 0.0
    %2063 = vmatpush1.xpose.msra.mxu0 0.0
    %2064 = vmatprep.subr.mxu0 0.0
    %2065 = vmatpush1.xpose.msra.mxu0 0.0
    %2066 = vmatprep.subr.mxu0 0.0
    %2067 = vmatpush1.xpose.msra.mxu0 0.0
    %2068 = vmatprep.subr.mxu0 0.0
    %2069 = vmatpush1.xpose.msra.mxu0 0.0
    %2070 = vmatprep.subr.mxu0 0.0
    %2071 = vmatpush1.xpose.msra.mxu0 0.0
    %2072 = vmatprep.subr.mxu0 0.0
    %2073 = vmatpush1.xpose.msra.mxu0 0.0
    %2074 = vmatprep.subr.mxu0 0.0
    %2075 = vmatpush1.xpose.msra.mxu0 0.0
    %2076 = vmatprep.subr.mxu0 0.0
    %2077 = vmatpush1.xpose.msra.mxu0 0.0
    %2078 = vmatprep.subr.mxu0 0.0
    %2079 = vmatpush1.xpose.msra.mxu0 0.0
    %2080 = vmatprep.subr.mxu0 0.0
    %2081 = vmatpush1.xpose.msra.mxu0 0.0
    %2082 = vmatprep.subr.mxu0 0.0
    %2083 = vmatpush1.xpose.msra.mxu0 0.0
    %2084 = vmatprep.subr.mxu0 0.0
    %2085 = vmatpush1.xpose.msra.mxu0 0.0
    %2086 = vmatprep.subr.mxu0 0.0
    %2087 = vmatpush1.xpose.msra.mxu0 0.0
    %2088 = vmatprep.subr.mxu0 0.0
    %2089 = vmatpush1.xpose.msra.mxu0 0.0
    %2090 = vmatprep.subr.mxu0 0.0
    %2091 = vmatpush1.xpose.msra.mxu0 0.0
    %2092 = vmatprep.subr.mxu0 0.0
    %2093 = vmatpush1.xpose.msra.mxu0 0.0
    %2094 = vmatprep.mubr.f32.mxu0 0.0
    %2095 = vmatmul.mubr.f32.gmra.mrb[0].mxu0 %v2022
    %v2096 = vpop.f32.mrb[0].mxu0
    %v2097 = vadd.f32 %v523, %v2096
    %v2098 = vpop.f32.mrb[0].mxu0
    %2099 = vmatprep.mubr.f32.mxu0 0.0
    %2100 = vmatmul.mubr.f32.gmra.mrb[0].mxu0 %v2024
    %v2101 = vpop.f32.mrb[0].mxu0
    %v2102 = vadd.f32 %v524, %v2101
    %v2103 = vpop.f32.mrb[0].mxu0
    %2104 = vdwg.mxu0
    %2105 = vrot.lane.b32.xlu0 %v1924, 96
    %v2106 = vpop.permute.xlu0 %2105
    %2107 = vrot.lane.b32.xlu0 %v1926, 96
    %v2108 = vpop.permute.xlu0 %2107
    %v2109 = vsel %vm633, %v1924, 0
    %v2111 = vsel %vm633, %v1926, 0
    %v2113 = vsel %vm633, %v2106, 0
    %v2115 = vsel %vm633, %v2108, 0
    %2117 = vmatprep.subr.mxu0 0.0
    %2118 = vmatpush1.xpose.msra.mxu0 %v2113
    %2119 = vmatprep.subr.mxu0 0.0
    %2120 = vmatpush1.xpose.msra.mxu0 %v2115
    %2121 = vmatprep.subr.mxu0 0.0
    %2122 = vmatpush1.xpose.msra.mxu0 0.0
    %2123 = vmatprep.subr.mxu0 0.0
    %2124 = vmatpush1.xpose.msra.mxu0 0.0
    %2125 = vmatprep.subr.mxu0 0.0
    %2126 = vmatpush1.xpose.msra.mxu0 0.0
    %2127 = vmatprep.subr.mxu0 0.0
    %2128 = vmatpush1.xpose.msra.mxu0 0.0
    %2129 = vmatprep.subr.mxu0 0.0
    %2130 = vmatpush1.xpose.msra.mxu0 0.0
    %2131 = vmatprep.subr.mxu0 0.0
    %2132 = vmatpush1.xpose.msra.mxu0 0.0
    %2133 = vmatprep.subr.mxu0 0.0
    %2134 = vmatpush1.xpose.msra.mxu0 0.0
    %2135 = vmatprep.subr.mxu0 0.0
    %2136 = vmatpush1.xpose.msra.mxu0 0.0
    %2137 = vmatprep.subr.mxu0 0.0
    %2138 = vmatpush1.xpose.msra.mxu0 0.0
    %2139 = vmatprep.subr.mxu0 0.0
    %2140 = vmatpush1.xpose.msra.mxu0 0.0
    %2141 = vmatprep.subr.mxu0 0.0
    %2142 = vmatpush1.xpose.msra.mxu0 0.0
    %2143 = vmatprep.subr.mxu0 0.0
    %2144 = vmatpush1.xpose.msra.mxu0 0.0
    %2145 = vmatprep.subr.mxu0 0.0
    %2146 = vmatpush1.xpose.msra.mxu0 0.0
    %2147 = vmatprep.subr.mxu0 0.0
    %2148 = vmatpush1.xpose.msra.mxu0 0.0
    %2149 = vmatprep.subr.mxu0 0.0
    %2150 = vmatpush1.xpose.msra.mxu0 0.0
    %2151 = vmatprep.subr.mxu0 0.0
    %2152 = vmatpush1.xpose.msra.mxu0 0.0
    %2153 = vmatprep.subr.mxu0 0.0
    %2154 = vmatpush1.xpose.msra.mxu0 0.0
    %2155 = vmatprep.subr.mxu0 0.0
    %2156 = vmatpush1.xpose.msra.mxu0 0.0
    %2157 = vmatprep.subr.mxu0 0.0
    %2158 = vmatpush1.xpose.msra.mxu0 0.0
    %2159 = vmatprep.subr.mxu0 0.0
    %2160 = vmatpush1.xpose.msra.mxu0 0.0
    %2161 = vmatprep.subr.mxu0 0.0
    %2162 = vmatpush1.xpose.msra.mxu0 0.0
    %2163 = vmatprep.subr.mxu0 0.0
    %2164 = vmatpush1.xpose.msra.mxu0 0.0
    %2165 = vmatprep.subr.mxu0 0.0
    %2166 = vmatpush1.xpose.msra.mxu0 0.0
    %2167 = vmatprep.subr.mxu0 0.0
    %2168 = vmatpush1.xpose.msra.mxu0 0.0
    %2169 = vmatprep.subr.mxu0 0.0
    %2170 = vmatpush1.xpose.msra.mxu0 0.0
    %2171 = vmatprep.subr.mxu0 0.0
    %2172 = vmatpush1.xpose.msra.mxu0 0.0
    %2173 = vmatprep.subr.mxu0 0.0
    %2174 = vmatpush1.xpose.msra.mxu0 0.0
    %2175 = vmatprep.subr.mxu0 0.0
    %2176 = vmatpush1.xpose.msra.mxu0 0.0
    %2177 = vmatprep.subr.mxu0 0.0
    %2178 = vmatpush1.xpose.msra.mxu0 0.0
    %2179 = vmatprep.subr.mxu0 0.0
    %2180 = vmatpush1.xpose.msra.mxu0 0.0
    %2181 = vmatprep.mubr.f32.mxu0 0.0
    %2182 = vmatmul.mubr.f32.gmra.mrb[0].mxu0 %v2109
    %v2183 = vpop.f32.mrb[0].mxu0
    %v2184 = vadd.f32 %v523, %v2183
    %v2185 = vpop.f32.mrb[0].mxu0
    %2186 = vmatprep.mubr.f32.mxu0 0.0
    %2187 = vmatmul.mubr.f32.gmra.mrb[0].mxu0 %v2111
    %v2188 = vpop.f32.mrb[0].mxu0
    %v2189 = vadd.f32 %v524, %v2188
    %v2190 = vpop.f32.mrb[0].mxu0
    %2191 = vdwg.mxu0
    %2192 = vrot.lane.b32.xlu0 %v1928, 96
    %v2193 = vpop.permute.xlu0 %2192
    %2194 = vrot.lane.b32.xlu0 %v1930, 96
    %v2195 = vpop.permute.xlu0 %2194
    %v2196 = vsel %vm633, %v1928, 0
    %v2198 = vsel %vm633, %v1930, 0
    %v2200 = vsel %vm633, %v2193, 0
    %v2202 = vsel %vm633, %v2195, 0
    %2204 = vmatprep.subr.mxu0 0.0
    %2205 = vmatpush1.xpose.msra.mxu0 %v2200
    %2206 = vmatprep.subr.mxu0 0.0
    %2207 = vmatpush1.xpose.msra.mxu0 %v2202
    %2208 = vmatprep.subr.mxu0 0.0
    %2209 = vmatpush1.xpose.msra.mxu0 0.0
    %2210 = vmatprep.subr.mxu0 0.0
    %2211 = vmatpush1.xpose.msra.mxu0 0.0
    %2212 = vmatprep.subr.mxu0 0.0
    %2213 = vmatpush1.xpose.msra.mxu0 0.0
    %2214 = vmatprep.subr.mxu0 0.0
    %2215 = vmatpush1.xpose.msra.mxu0 0.0
    %2216 = vmatprep.subr.mxu0 0.0
    %2217 = vmatpush1.xpose.msra.mxu0 0.0
    %2218 = vmatprep.subr.mxu0 0.0
    %2219 = vmatpush1.xpose.msra.mxu0 0.0
    %2220 = vmatprep.subr.mxu0 0.0
    %2221 = vmatpush1.xpose.msra.mxu0 0.0
    %2222 = vmatprep.subr.mxu0 0.0
    %2223 = vmatpush1.xpose.msra.mxu0 0.0
    %2224 = vmatprep.subr.mxu0 0.0
    %2225 = vmatpush1.xpose.msra.mxu0 0.0
    %2226 = vmatprep.subr.mxu0 0.0
    %2227 = vmatpush1.xpose.msra.mxu0 0.0
    %2228 = vmatprep.subr.mxu0 0.0
    %2229 = vmatpush1.xpose.msra.mxu0 0.0
    %2230 = vmatprep.subr.mxu0 0.0
    %2231 = vmatpush1.xpose.msra.mxu0 0.0
    %2232 = vmatprep.subr.mxu0 0.0
    %2233 = vmatpush1.xpose.msra.mxu0 0.0
    %2234 = vmatprep.subr.mxu0 0.0
    %2235 = vmatpush1.xpose.msra.mxu0 0.0
    %2236 = vmatprep.subr.mxu0 0.0
    %2237 = vmatpush1.xpose.msra.mxu0 0.0
    %2238 = vmatprep.subr.mxu0 0.0
    %2239 = vmatpush1.xpose.msra.mxu0 0.0
    %2240 = vmatprep.subr.mxu0 0.0
    %2241 = vmatpush1.xpose.msra.mxu0 0.0
    %2242 = vmatprep.subr.mxu0 0.0
    %2243 = vmatpush1.xpose.msra.mxu0 0.0
    %2244 = vmatprep.subr.mxu0 0.0
    %2245 = vmatpush1.xpose.msra.mxu0 0.0
    %2246 = vmatprep.subr.mxu0 0.0
    %2247 = vmatpush1.xpose.msra.mxu0 0.0
    %2248 = vmatprep.subr.mxu0 0.0
    %2249 = vmatpush1.xpose.msra.mxu0 0.0
    %2250 = vmatprep.subr.mxu0 0.0
    %2251 = vmatpush1.xpose.msra.mxu0 0.0
    %2252 = vmatprep.subr.mxu0 0.0
    %2253 = vmatpush1.xpose.msra.mxu0 0.0
    %2254 = vmatprep.subr.mxu0 0.0
    %2255 = vmatpush1.xpose.msra.mxu0 0.0
    %2256 = vmatprep.subr.mxu0 0.0
    %2257 = vmatpush1.xpose.msra.mxu0 0.0
    %2258 = vmatprep.subr.mxu0 0.0
    %2259 = vmatpush1.xpose.msra.mxu0 0.0
    %2260 = vmatprep.subr.mxu0 0.0
    %2261 = vmatpush1.xpose.msra.mxu0 0.0
    %2262 = vmatprep.subr.mxu0 0.0
    %2263 = vmatpush1.xpose.msra.mxu0 0.0
    %2264 = vmatprep.subr.mxu0 0.0
    %2265 = vmatpush1.xpose.msra.mxu0 0.0
    %2266 = vmatprep.subr.mxu0 0.0
    %2267 = vmatpush1.xpose.msra.mxu0 0.0
    %2268 = vmatprep.mubr.f32.mxu0 0.0
    %2269 = vmatmul.mubr.f32.gmra.mrb[0].mxu0 %v2196
    %v2270 = vpop.f32.mrb[0].mxu0
    %v2271 = vadd.f32 %v523, %v2270
    %v2272 = vpop.f32.mrb[0].mxu0
    %2273 = vmatprep.mubr.f32.mxu0 0.0
    %2274 = vmatmul.mubr.f32.gmra.mrb[0].mxu0 %v2198
    %v2275 = vpop.f32.mrb[0].mxu0
    %v2276 = vadd.f32 %v524, %v2275
    %v2277 = vpop.f32.mrb[0].mxu0
    %2278 = vdwg.mxu0
    %v2279 = vsel %vm275, %v2010, -inf
    %2280 = vmax.xlane.f32.xlu0 %v2279
    %v2281 = vpop.xlane.xlu0 %2280
    %v2282 = vsel %vm275, %v2015, -inf
    %2283 = vmax.xlane.f32.xlu0 %v2282
    %v2284 = vpop.xlane.xlu0 %2283
    %v2285 = vsel %vm275, %v2097, -inf
    %2286 = vmax.xlane.f32.xlu0 %v2285
    %v2287 = vpop.xlane.xlu0 %2286
    %v2288 = vsel %vm275, %v2102, -inf
    %2289 = vmax.xlane.f32.xlu0 %v2288
    %v2290 = vpop.xlane.xlu0 %2289
    %v2291 = vsel %vm275, %v2184, -inf
    %2292 = vmax.xlane.f32.xlu0 %v2291
    %v2293 = vpop.xlane.xlu0 %2292
    %v2294 = vsel %vm275, %v2189, -inf
    %2295 = vmax.xlane.f32.xlu0 %v2294
    %v2296 = vpop.xlane.xlu0 %2295
    %v2297 = vsel %vm275, %v2271, -inf
    %2298 = vmax.xlane.f32.xlu0 %v2297
    %v2299 = vpop.xlane.xlu0 %2298
    %v2300 = vsel %vm275, %v2276, -inf
    %2301 = vmax.xlane.f32.xlu0 %v2300
    %v2302 = vpop.xlane.xlu0 %2301
    %v2303 = vsub.f32 %v2010, %v2281
    %v2304 = vsub.f32 %v2015, %v2284
    %v2305 = vsub.f32 %v2097, %v2287
    %v2306 = vsub.f32 %v2102, %v2290
    %v2307 = vsub.f32 %v2184, %v2293
    %v2308 = vsub.f32 %v2189, %v2296
    %v2309 = vsub.f32 %v2271, %v2299
    %v2310 = vsub.f32 %v2276, %v2302
    %v2311 = vmul.f32 %v2303, 1.442695
    %v2312 = vpow.pop %v2311
    %v2313 = vmul.f32 %v2304, 1.442695
    %v2314 = vpow.pop %v2313
    %v2315 = vmul.f32 %v2305, 1.442695
    %v2316 = vpow.pop %v2315
    %v2317 = vmul.f32 %v2306, 1.442695
    %v2318 = vpow.pop %v2317
    %v2319 = vmul.f32 %v2307, 1.442695
    %v2320 = vpow.pop %v2319
    %v2321 = vmul.f32 %v2308, 1.442695
    %v2322 = vpow.pop %v2321
    %v2323 = vmul.f32 %v2309, 1.442695
    %v2324 = vpow.pop %v2323
    %v2325 = vmul.f32 %v2310, 1.442695
    %v2326 = vpow.pop %v2325
    %v2327 = vsel %vm275, %v2312, 0.0
    %2328 = vadd.xlane.f32.xlu0 %v2327
    %v2329 = vpop.xlane.xlu0 %2328
    %v2330 = vsel %vm275, %v2314, 0.0
    %2331 = vadd.xlane.f32.xlu0 %v2330
    %v2332 = vpop.xlane.xlu0 %2331
    %v2333 = vsel %vm275, %v2316, 0.0
    %2334 = vadd.xlane.f32.xlu0 %v2333
    %v2335 = vpop.xlane.xlu0 %2334
    %v2336 = vsel %vm275, %v2318, 0.0
    %2337 = vadd.xlane.f32.xlu0 %v2336
    %v2338 = vpop.xlane.xlu0 %2337
    %v2339 = vsel %vm275, %v2320, 0.0
    %2340 = vadd.xlane.f32.xlu0 %v2339
    %v2341 = vpop.xlane.xlu0 %2340
    %v2342 = vsel %vm275, %v2322, 0.0
    %2343 = vadd.xlane.f32.xlu0 %v2342
    %v2344 = vpop.xlane.xlu0 %2343
    %v2345 = vsel %vm275, %v2324, 0.0
    %2346 = vadd.xlane.f32.xlu0 %v2345
    %v2347 = vpop.xlane.xlu0 %2346
    %v2348 = vsel %vm275, %v2326, 0.0
    %2349 = vadd.xlane.f32.xlu0 %v2348
    %v2350 = vpop.xlane.xlu0 %2349
    %v2351 = vrcp.pop %v2329
    %v2352 = vrcp.pop %v2332
    %v2353 = vrcp.pop %v2335
    %v2354 = vrcp.pop %v2338
    %v2355 = vrcp.pop %v2341
    %v2356 = vrcp.pop %v2344
    %v2357 = vrcp.pop %v2347
    %v2358 = vrcp.pop %v2350
    %v2359 = vmul.f32 %v2312, %v2351
    %v2360 = vmul.f32 %v2314, %v2352
    %v2361 = vmul.f32 %v2316, %v2353
    %v2362 = vmul.f32 %v2318, %v2354
    %v2363 = vmul.f32 %v2320, %v2355
    %v2364 = vmul.f32 %v2322, %v2356
    %v2365 = vmul.f32 %v2324, %v2357
    %v2366 = vmul.f32 %v2326, %v2358
    %2367 = vrot.lane.b32.xlu0 %v1909, 64
    %v2368 = vpop.permute.xlu0 %2367
    %2369 = vrot.lane.b32.xlu0 %v1914, 64
    %v2370 = vpop.permute.xlu0 %2369
    %v2374 = vsel %vm275, %v2359, 0
    %v2377 = vsel %vm275, %v2360, 0
    %2379 = vmatprep.subr.mxu0 0.0
    %2380 = vmatpush1.msra.mxu0 %v2368
    %2381 = vmatprep.subr.mxu0 0.0
    %2382 = vmatpush1.msra.mxu0 %v2370
    %2383 = vmatprep.subr.mxu0 0.0
    %2384 = vmatpush1.msra.mxu0 0.0
    %2385 = vmatprep.subr.mxu0 0.0
    %2386 = vmatpush1.msra.mxu0 0.0
    %2387 = vmatprep.subr.mxu0 0.0
    %2388 = vmatpush1.msra.mxu0 0.0
    %2389 = vmatprep.subr.mxu0 0.0
    %2390 = vmatpush1.msra.mxu0 0.0
    %2391 = vmatprep.subr.mxu0 0.0
    %2392 = vmatpush1.msra.mxu0 0.0
    %2393 = vmatprep.subr.mxu0 0.0
    %2394 = vmatpush1.msra.mxu0 0.0
    %2395 = vmatprep.subr.mxu0 0.0
    %2396 = vmatpush1.msra.mxu0 0.0
    %2397 = vmatprep.subr.mxu0 0.0
    %2398 = vmatpush1.msra.mxu0 0.0
    %2399 = vmatprep.subr.mxu0 0.0
    %2400 = vmatpush1.msra.mxu0 0.0
    %2401 = vmatprep.subr.mxu0 0.0
    %2402 = vmatpush1.msra.mxu0 0.0
    %2403 = vmatprep.subr.mxu0 0.0
    %2404 = vmatpush1.msra.mxu0 0.0
    %2405 = vmatprep.subr.mxu0 0.0
    %2406 = vmatpush1.msra.mxu0 0.0
    %2407 = vmatprep.subr.mxu0 0.0
    %2408 = vmatpush1.msra.mxu0 0.0
    %2409 = vmatprep.subr.mxu0 0.0
    %2410 = vmatpush1.msra.mxu0 0.0
    %2411 = vmatprep.subr.mxu0 0.0
    %2412 = vmatpush1.msra.mxu0 0.0
    %2413 = vmatprep.subr.mxu0 0.0
    %2414 = vmatpush1.msra.mxu0 0.0
    %2415 = vmatprep.subr.mxu0 0.0
    %2416 = vmatpush1.msra.mxu0 0.0
    %2417 = vmatprep.subr.mxu0 0.0
    %2418 = vmatpush1.msra.mxu0 0.0
    %2419 = vmatprep.subr.mxu0 0.0
    %2420 = vmatpush1.msra.mxu0 0.0
    %2421 = vmatprep.subr.mxu0 0.0
    %2422 = vmatpush1.msra.mxu0 0.0
    %2423 = vmatprep.subr.mxu0 0.0
    %2424 = vmatpush1.msra.mxu0 0.0
    %2425 = vmatprep.subr.mxu0 0.0
    %2426 = vmatpush1.msra.mxu0 0.0
    %2427 = vmatprep.subr.mxu0 0.0
    %2428 = vmatpush1.msra.mxu0 0.0
    %2429 = vmatprep.subr.mxu0 0.0
    %2430 = vmatpush1.msra.mxu0 0.0
    %2431 = vmatprep.subr.mxu0 0.0
    %2432 = vmatpush1.msra.mxu0 0.0
    %2433 = vmatprep.subr.mxu0 0.0
    %2434 = vmatpush1.msra.mxu0 0.0
    %2435 = vmatprep.subr.mxu0 0.0
    %2436 = vmatpush1.msra.mxu0 0.0
    %2437 = vmatprep.subr.mxu0 0.0
    %2438 = vmatpush1.msra.mxu0 0.0
    %2439 = vmatprep.subr.mxu0 0.0
    %2440 = vmatpush1.msra.mxu0 0.0
    %2441 = vmatprep.subr.mxu0 0.0
    %2442 = vmatpush1.msra.mxu0 0.0
    %2443 = vmatprep.mubr.f32.mxu0 0.0
    %2444 = vmatmul.mubr.f32.gmra.mrb[0].mxu0 %v2374
    %v2445 = vpop.f32.mrb[0].mxu0
    %v2446 = vadd.f32 0.0, %v2445
    %v2447 = vpop.f32.mrb[0].mxu0
    %2448 = vmatprep.mubr.f32.mxu0 0.0
    %2449 = vmatmul.mubr.f32.gmra.mrb[0].mxu0 %v2377
    %v2450 = vpop.f32.mrb[0].mxu0
    %v2451 = vadd.f32 0.0, %v2450
    %v2452 = vpop.f32.mrb[0].mxu0
    %2453 = vdwg.mxu0
    %2454 = vrot.lane.b32.xlu0 %v1920, 64
    %v2455 = vpop.permute.xlu0 %2454
    %2456 = vrot.lane.b32.xlu0 %v1922, 64
    %v2457 = vpop.permute.xlu0 %2456
    %v2461 = vsel %vm275, %v2361, 0
    %v2464 = vsel %vm275, %v2362, 0
    %2466 = vmatprep.subr.mxu0 0.0
    %2467 = vmatpush1.msra.mxu0 %v2455
    %2468 = vmatprep.subr.mxu0 0.0
    %2469 = vmatpush1.msra.mxu0 %v2457
    %2470 = vmatprep.subr.mxu0 0.0
    %2471 = vmatpush1.msra.mxu0 0.0
    %2472 = vmatprep.subr.mxu0 0.0
    %2473 = vmatpush1.msra.mxu0 0.0
    %2474 = vmatprep.subr.mxu0 0.0
    %2475 = vmatpush1.msra.mxu0 0.0
    %2476 = vmatprep.subr.mxu0 0.0
    %2477 = vmatpush1.msra.mxu0 0.0
    %2478 = vmatprep.subr.mxu0 0.0
    %2479 = vmatpush1.msra.mxu0 0.0
    %2480 = vmatprep.subr.mxu0 0.0
    %2481 = vmatpush1.msra.mxu0 0.0
    %2482 = vmatprep.subr.mxu0 0.0
    %2483 = vmatpush1.msra.mxu0 0.0
    %2484 = vmatprep.subr.mxu0 0.0
    %2485 = vmatpush1.msra.mxu0 0.0
    %2486 = vmatprep.subr.mxu0 0.0
    %2487 = vmatpush1.msra.mxu0 0.0
    %2488 = vmatprep.subr.mxu0 0.0
    %2489 = vmatpush1.msra.mxu0 0.0
    %2490 = vmatprep.subr.mxu0 0.0
    %2491 = vmatpush1.msra.mxu0 0.0
    %2492 = vmatprep.subr.mxu0 0.0
    %2493 = vmatpush1.msra.mxu0 0.0
    %2494 = vmatprep.subr.mxu0 0.0
    %2495 = vmatpush1.msra.mxu0 0.0
    %2496 = vmatprep.subr.mxu0 0.0
    %2497 = vmatpush1.msra.mxu0 0.0
    %2498 = vmatprep.subr.mxu0 0.0
    %2499 = vmatpush1.msra.mxu0 0.0
    %2500 = vmatprep.subr.mxu0 0.0
    %2501 = vmatpush1.msra.mxu0 0.0
    %2502 = vmatprep.subr.mxu0 0.0
    %2503 = vmatpush1.msra.mxu0 0.0
    %2504 = vmatprep.subr.mxu0 0.0
    %2505 = vmatpush1.msra.mxu0 0.0
    %2506 = vmatprep.subr.mxu0 0.0
    %2507 = vmatpush1.msra.mxu0 0.0
    %2508 = vmatprep.subr.mxu0 0.0
    %2509 = vmatpush1.msra.mxu0 0.0
    %2510 = vmatprep.subr.mxu0 0.0
    %2511 = vmatpush1.msra.mxu0 0.0
    %2512 = vmatprep.subr.mxu0 0.0
    %2513 = vmatpush1.msra.mxu0 0.0
    %2514 = vmatprep.subr.mxu0 0.0
    %2515 = vmatpush1.msra.mxu0 0.0
    %2516 = vmatprep.subr.mxu0 0.0
    %2517 = vmatpush1.msra.mxu0 0.0
    %2518 = vmatprep.subr.mxu0 0.0
    %2519 = vmatpush1.msra.mxu0 0.0
    %2520 = vmatprep.subr.mxu0 0.0
    %2521 = vmatpush1.msra.mxu0 0.0
    %2522 = vmatprep.subr.mxu0 0.0
    %2523 = vmatpush1.msra.mxu0 0.0
    %2524 = vmatprep.subr.mxu0 0.0
    %2525 = vmatpush1.msra.mxu0 0.0
    %2526 = vmatprep.subr.mxu0 0.0
    %2527 = vmatpush1.msra.mxu0 0.0
    %2528 = vmatprep.subr.mxu0 0.0
    %2529 = vmatpush1.msra.mxu0 0.0
    %2530 = vmatprep.mubr.f32.mxu0 0.0
    %2531 = vmatmul.mubr.f32.gmra.mrb[0].mxu0 %v2461
    %v2532 = vpop.f32.mrb[0].mxu0
    %v2533 = vadd.f32 0.0, %v2532
    %v2534 = vpop.f32.mrb[0].mxu0
    %2535 = vmatprep.mubr.f32.mxu0 0.0
    %2536 = vmatmul.mubr.f32.gmra.mrb[0].mxu0 %v2464
    %v2537 = vpop.f32.mrb[0].mxu0
    %v2538 = vadd.f32 0.0, %v2537
    %v2539 = vpop.f32.mrb[0].mxu0
    %2540 = vdwg.mxu0
    %2541 = vrot.lane.b32.xlu0 %v1924, 64
    %v2542 = vpop.permute.xlu0 %2541
    %2543 = vrot.lane.b32.xlu0 %v1926, 64
    %v2544 = vpop.permute.xlu0 %2543
    %v2548 = vsel %vm275, %v2363, 0
    %v2551 = vsel %vm275, %v2364, 0
    %2553 = vmatprep.subr.mxu0 0.0
    %2554 = vmatpush1.msra.mxu0 %v2542
    %2555 = vmatprep.subr.mxu0 0.0
    %2556 = vmatpush1.msra.mxu0 %v2544
    %2557 = vmatprep.subr.mxu0 0.0
    %2558 = vmatpush1.msra.mxu0 0.0
    %2559 = vmatprep.subr.mxu0 0.0
    %2560 = vmatpush1.msra.mxu0 0.0
    %2561 = vmatprep.subr.mxu0 0.0
    %2562 = vmatpush1.msra.mxu0 0.0
    %2563 = vmatprep.subr.mxu0 0.0
    %2564 = vmatpush1.msra.mxu0 0.0
    %2565 = vmatprep.subr.mxu0 0.0
    %2566 = vmatpush1.msra.mxu0 0.0
    %2567 = vmatprep.subr.mxu0 0.0
    %2568 = vmatpush1.msra.mxu0 0.0
    %2569 = vmatprep.subr.mxu0 0.0
    %2570 = vmatpush1.msra.mxu0 0.0
    %2571 = vmatprep.subr.mxu0 0.0
    %2572 = vmatpush1.msra.mxu0 0.0
    %2573 = vmatprep.subr.mxu0 0.0
    %2574 = vmatpush1.msra.mxu0 0.0
    %2575 = vmatprep.subr.mxu0 0.0
    %2576 = vmatpush1.msra.mxu0 0.0
    %2577 = vmatprep.subr.mxu0 0.0
    %2578 = vmatpush1.msra.mxu0 0.0
    %2579 = vmatprep.subr.mxu0 0.0
    %2580 = vmatpush1.msra.mxu0 0.0
    %2581 = vmatprep.subr.mxu0 0.0
    %2582 = vmatpush1.msra.mxu0 0.0
    %2583 = vmatprep.subr.mxu0 0.0
    %2584 = vmatpush1.msra.mxu0 0.0
    %2585 = vmatprep.subr.mxu0 0.0
    %2586 = vmatpush1.msra.mxu0 0.0
    %2587 = vmatprep.subr.mxu0 0.0
    %2588 = vmatpush1.msra.mxu0 0.0
    %2589 = vmatprep.subr.mxu0 0.0
    %2590 = vmatpush1.msra.mxu0 0.0
    %2591 = vmatprep.subr.mxu0 0.0
    %2592 = vmatpush1.msra.mxu0 0.0
    %2593 = vmatprep.subr.mxu0 0.0
    %2594 = vmatpush1.msra.mxu0 0.0
    %2595 = vmatprep.subr.mxu0 0.0
    %2596 = vmatpush1.msra.mxu0 0.0
    %2597 = vmatprep.subr.mxu0 0.0
    %2598 = vmatpush1.msra.mxu0 0.0
    %2599 = vmatprep.subr.mxu0 0.0
    %2600 = vmatpush1.msra.mxu0 0.0
    %2601 = vmatprep.subr.mxu0 0.0
    %2602 = vmatpush1.msra.mxu0 0.0
    %2603 = vmatprep.subr.mxu0 0.0
    %2604 = vmatpush1.msra.mxu0 0.0
    %2605 = vmatprep.subr.mxu0 0.0
    %2606 = vmatpush1.msra.mxu0 0.0
    %2607 = vmatprep.subr.mxu0 0.0
    %2608 = vmatpush1.msra.mxu0 0.0
    %2609 = vmatprep.subr.mxu0 0.0
    %2610 = vmatpush1.msra.mxu0 0.0
    %2611 = vmatprep.subr.mxu0 0.0
    %2612 = vmatpush1.msra.mxu0 0.0
    %2613 = vmatprep.subr.mxu0 0.0
    %2614 = vmatpush1.msra.mxu0 0.0
    %2615 = vmatprep.subr.mxu0 0.0
    %2616 = vmatpush1.msra.mxu0 0.0
    %2617 = vmatprep.mubr.f32.mxu0 0.0
    %2618 = vmatmul.mubr.f32.gmra.mrb[0].mxu0 %v2548
    %v2619 = vpop.f32.mrb[0].mxu0
    %v2620 = vadd.f32 0.0, %v2619
    %v2621 = vpop.f32.mrb[0].mxu0
    %2622 = vmatprep.mubr.f32.mxu0 0.0
    %2623 = vmatmul.mubr.f32.gmra.mrb[0].mxu0 %v2551
    %v2624 = vpop.f32.mrb[0].mxu0
    %v2625 = vadd.f32 0.0, %v2624
    %v2626 = vpop.f32.mrb[0].mxu0
    %2627 = vdwg.mxu0
    %2628 = vrot.lane.b32.xlu0 %v1928, 64
    %v2629 = vpop.permute.xlu0 %2628
    %2630 = vrot.lane.b32.xlu0 %v1930, 64
    %v2631 = vpop.permute.xlu0 %2630
    %v2635 = vsel %vm275, %v2365, 0
    %v2638 = vsel %vm275, %v2366, 0
    %2640 = vmatprep.subr.mxu0 0.0
    %2641 = vmatpush1.msra.mxu0 %v2629
    %2642 = vmatprep.subr.mxu0 0.0
    %2643 = vmatpush1.msra.mxu0 %v2631
    %2644 = vmatprep.subr.mxu0 0.0
    %2645 = vmatpush1.msra.mxu0 0.0
    %2646 = vmatprep.subr.mxu0 0.0
    %2647 = vmatpush1.msra.mxu0 0.0
    %2648 = vmatprep.subr.mxu0 0.0
    %2649 = vmatpush1.msra.mxu0 0.0
    %2650 = vmatprep.subr.mxu0 0.0
    %2651 = vmatpush1.msra.mxu0 0.0
    %2652 = vmatprep.subr.mxu0 0.0
    %2653 = vmatpush1.msra.mxu0 0.0
    %2654 = vmatprep.subr.mxu0 0.0
    %2655 = vmatpush1.msra.mxu0 0.0
    %2656 = vmatprep.subr.mxu0 0.0
    %2657 = vmatpush1.msra.mxu0 0.0
    %2658 = vmatprep.subr.mxu0 0.0
    %2659 = vmatpush1.msra.mxu0 0.0
    %2660 = vmatprep.subr.mxu0 0.0
    %2661 = vmatpush1.msra.mxu0 0.0
    %2662 = vmatprep.subr.mxu0 0.0
    %2663 = vmatpush1.msra.mxu0 0.0
    %2664 = vmatprep.subr.mxu0 0.0
    %2665 = vmatpush1.msra.mxu0 0.0
    %2666 = vmatprep.subr.mxu0 0.0
    %2667 = vmatpush1.msra.mxu0 0.0
    %2668 = vmatprep.subr.mxu0 0.0
    %2669 = vmatpush1.msra.mxu0 0.0
    %2670 = vmatprep.subr.mxu0 0.0
    %2671 = vmatpush1.msra.mxu0 0.0
    %2672 = vmatprep.subr.mxu0 0.0
    %2673 = vmatpush1.msra.mxu0 0.0
    %2674 = vmatprep.subr.mxu0 0.0
    %2675 = vmatpush1.msra.mxu0 0.0
    %2676 = vmatprep.subr.mxu0 0.0
    %2677 = vmatpush1.msra.mxu0 0.0
    %2678 = vmatprep.subr.mxu0 0.0
    %2679 = vmatpush1.msra.mxu0 0.0
    %2680 = vmatprep.subr.mxu0 0.0
    %2681 = vmatpush1.msra.mxu0 0.0
    %2682 = vmatprep.subr.mxu0 0.0
    %2683 = vmatpush1.msra.mxu0 0.0
    %2684 = vmatprep.subr.mxu0 0.0
    %2685 = vmatpush1.msra.mxu0 0.0
    %2686 = vmatprep.subr.mxu0 0.0
    %2687 = vmatpush1.msra.mxu0 0.0
    %2688 = vmatprep.subr.mxu0 0.0
    %2689 = vmatpush1.msra.mxu0 0.0
    %2690 = vmatprep.subr.mxu0 0.0
    %2691 = vmatpush1.msra.mxu0 0.0
    %2692 = vmatprep.subr.mxu0 0.0
    %2693 = vmatpush1.msra.mxu0 0.0
    %2694 = vmatprep.subr.mxu0 0.0
    %2695 = vmatpush1.msra.mxu0 0.0
    %2696 = vmatprep.subr.mxu0 0.0
    %2697 = vmatpush1.msra.mxu0 0.0
    %2698 = vmatprep.subr.mxu0 0.0
    %2699 = vmatpush1.msra.mxu0 0.0
    %2700 = vmatprep.subr.mxu0 0.0
    %2701 = vmatpush1.msra.mxu0 0.0
    %2702 = vmatprep.subr.mxu0 0.0
    %2703 = vmatpush1.msra.mxu0 0.0
    %2704 = vmatprep.mubr.f32.mxu0 0.0
    %2705 = vmatmul.mubr.f32.gmra.mrb[0].mxu0 %v2635
    %v2706 = vpop.f32.mrb[0].mxu0
    %v2707 = vadd.f32 0.0, %v2706
    %v2708 = vpop.f32.mrb[0].mxu0
    %2709 = vmatprep.mubr.f32.mxu0 0.0
    %2710 = vmatmul.mubr.f32.gmra.mrb[0].mxu0 %v2638
    %v2711 = vpop.f32.mrb[0].mxu0
    %v2712 = vadd.f32 0.0, %v2711
    %v2713 = vpop.f32.mrb[0].mxu0
    %2714 = vdwg.mxu0
    %2717 = vrot.lane.b32.xlu0 %v2533, 8
    %v2718 = vpop.permute.xlu0 %2717
    %2719 = vrot.lane.b32.xlu0 %v2538, 8
    %v2720 = vpop.permute.xlu0 %2719
    %2725 = vrot.lane.b32.xlu0 %v2620, 16
    %v2726 = vpop.permute.xlu0 %2725
    %2727 = vrot.lane.b32.xlu0 %v2625, 16
    %v2728 = vpop.permute.xlu0 %2727
    %2733 = vrot.lane.b32.xlu0 %v2707, 24
    %v2734 = vpop.permute.xlu0 %2733
    %2735 = vrot.lane.b32.xlu0 %v2712, 24
    %v2736 = vpop.permute.xlu0 %2735
    %v2739 = vsel %vm633, %v2446, %v2718
    %v2740 = vsel %vm633, %v2451, %v2720
    %v2741 = vsel %vm275, %v2739, %v2726
    %v2742 = vsel %vm275, %v2740, %v2728
    %v2743 = vsel %vm1442, %v2741, %v2734
    %v2744 = vsel %vm1442, %v2742, %v2736
    %2749 = vrot.lane.b32.xlu0 %v1826, 32
    %v2750 = vpop.permute.xlu0 %2749
    %2751 = vrot.lane.b32.xlu0 %v1827, 32
    %v2752 = vpop.permute.xlu0 %2751
    %2753 = vrot.lane.b32.xlu0 %v1828, 32
    %v2754 = vpop.permute.xlu0 %2753
    %2755 = vrot.lane.b32.xlu0 %v1829, 32
    %v2756 = vpop.permute.xlu0 %2755
    %2762 = vrot.lane.b32.xlu0 %v1835, 32
    %v2763 = vpop.permute.xlu0 %2762
    %v2766 = vsel %vm98, %v2743, 0
    %v2769 = vsel %vm98, %v2744, 0
    %2771 = vmatprep.subr.mxu0 0.0
    %2772 = vmatpush1.msra.mxu0 %v2750
    %2773 = vmatprep.subr.mxu0 0.0
    %2774 = vmatpush1.msra.mxu0 %v2752
    %2775 = vmatprep.subr.mxu0 0.0
    %2776 = vmatpush1.msra.mxu0 %v2754
    %2777 = vmatprep.subr.mxu0 0.0
    %2778 = vmatpush1.msra.mxu0 %v2756
    %2779 = vmatprep.subr.mxu0 0.0
    %2780 = vmatpush1.msra.mxu0 0.0
    %2781 = vmatprep.subr.mxu0 0.0
    %2782 = vmatpush1.msra.mxu0 0.0
    %2783 = vmatprep.subr.mxu0 0.0
    %2784 = vmatpush1.msra.mxu0 0.0
    %2785 = vmatprep.subr.mxu0 0.0
    %2786 = vmatpush1.msra.mxu0 0.0
    %2787 = vmatprep.subr.mxu0 0.0
    %2788 = vmatpush1.msra.mxu0 0.0
    %2789 = vmatprep.subr.mxu0 0.0
    %2790 = vmatpush1.msra.mxu0 0.0
    %2791 = vmatprep.subr.mxu0 0.0
    %2792 = vmatpush1.msra.mxu0 0.0
    %2793 = vmatprep.subr.mxu0 0.0
    %2794 = vmatpush1.msra.mxu0 0.0
    %2795 = vmatprep.subr.mxu0 0.0
    %2796 = vmatpush1.msra.mxu0 0.0
    %2797 = vmatprep.subr.mxu0 0.0
    %2798 = vmatpush1.msra.mxu0 0.0
    %2799 = vmatprep.subr.mxu0 0.0
    %2800 = vmatpush1.msra.mxu0 0.0
    %2801 = vmatprep.subr.mxu0 0.0
    %2802 = vmatpush1.msra.mxu0 0.0
    %2803 = vmatprep.subr.mxu0 0.0
    %2804 = vmatpush1.msra.mxu0 0.0
    %2805 = vmatprep.subr.mxu0 0.0
    %2806 = vmatpush1.msra.mxu0 0.0
    %2807 = vmatprep.subr.mxu0 0.0
    %2808 = vmatpush1.msra.mxu0 0.0
    %2809 = vmatprep.subr.mxu0 0.0
    %2810 = vmatpush1.msra.mxu0 0.0
    %2811 = vmatprep.subr.mxu0 0.0
    %2812 = vmatpush1.msra.mxu0 0.0
    %2813 = vmatprep.subr.mxu0 0.0
    %2814 = vmatpush1.msra.mxu0 0.0
    %2815 = vmatprep.subr.mxu0 0.0
    %2816 = vmatpush1.msra.mxu0 0.0
    %2817 = vmatprep.subr.mxu0 0.0
    %2818 = vmatpush1.msra.mxu0 0.0
    %2819 = vmatprep.subr.mxu0 0.0
    %2820 = vmatpush1.msra.mxu0 0.0
    %2821 = vmatprep.subr.mxu0 0.0
    %2822 = vmatpush1.msra.mxu0 0.0
    %2823 = vmatprep.subr.mxu0 0.0
    %2824 = vmatpush1.msra.mxu0 0.0
    %2825 = vmatprep.subr.mxu0 0.0
    %2826 = vmatpush1.msra.mxu0 0.0
    %2827 = vmatprep.subr.mxu0 0.0
    %2828 = vmatpush1.msra.mxu0 0.0
    %2829 = vmatprep.subr.mxu0 0.0
    %2830 = vmatpush1.msra.mxu0 0.0
    %2831 = vmatprep.subr.mxu0 0.0
    %2832 = vmatpush1.msra.mxu0 0.0
    %2833 = vmatprep.subr.mxu0 0.0
    %2834 = vmatpush1.msra.mxu0 0.0
    %2835 = vmatprep.mubr.f32.mxu0 0.0
    %2836 = vmatmul.mubr.f32.gmra.mrb[0].mxu0 %v2766
    %v2837 = vpop.f32.mrb[0].mxu0
    %v2838 = vadd.f32 %v2763, %v2837
    %v2839 = vpop.f32.mrb[0].mxu0
    %2840 = vmatprep.mubr.f32.mxu0 0.0
    %2841 = vmatmul.mubr.f32.gmra.mrb[0].mxu0 %v2769
    %v2842 = vpop.f32.mrb[0].mxu0
    %v2843 = vadd.f32 %v2763, %v2842
    %v2844 = vpop.f32.mrb[0].mxu0
    %2845 = vdwg.mxu0
    %v2846 = vadd.f32 %v2838, %v1823
    %v2847 = vadd.f32 %v2843, %v1824
    %v2848 = vsel %vm98, %v2846, 0.0
    %2849 = vadd.xlane.f32.xlu0 %v2848
    %v2850 = vpop.xlane.xlu0 %2849
    %v2851 = vsel %vm98, %v2847, 0.0
    %2852 = vadd.xlane.f32.xlu0 %v2851
    %v2853 = vpop.xlane.xlu0 %2852
    %v2854 = vmul.f32 %v2850, %v491
    %v2855 = vmul.f32 %v2853, %v491
    %v2856 = vsub.f32 %v2846, %v2854
    %v2857 = vsub.f32 %v2847, %v2855
    %v2858 = vmul.f32 %v2856, %v2856
    %v2859 = vmul.f32 %v2857, %v2857
    %v2860 = vsel %vm98, %v2858, 0.0
    %2861 = vadd.xlane.f32.xlu0 %v2860
    %v2862 = vpop.xlane.xlu0 %2861
    %v2863 = vsel %vm98, %v2859, 0.0
    %2864 = vadd.xlane.f32.xlu0 %v2863
    %v2865 = vpop.xlane.xlu0 %2864
    %v2866 = vmul.f32 %v2862, %v491
    %v2867 = vmul.f32 %v2865, %v491
    %v2868 = vadd.f32 %v2866, 1e-12
    %v2869 = vadd.f32 %v2867, 1e-12
    %v2870 = vrsqrt.pop %v2868
    %v2871 = vrsqrt.pop %v2869
    %v2872 = vmul.f32 %v2856, %v2870
    %v2873 = vmul.f32 %v2857, %v2871
    %v2874 = vlaneseq
    %v2875 = vshrl.u32 %v2874, 7
    %v2876 = vsub.s32 2, %v2875
    %v2877 = vrot.slane %v1831, %v2876
    %v2878 = vmul.f32 %v2872, %v2877
    %v2879 = vmul.f32 %v2873, %v2877
    %2881 = vrot.lane.b32.xlu0 %v2877, 96
    %v2882 = vpop.permute.xlu0 %2881
    %v2884 = vadd.f32 %v2878, %v2882
    %v2885 = vadd.f32 %v2879, %v2882
    %s2886 = scalar_lea.vmem %s11, 32
    %v2887 = vld [vmem:[%s2886] sm:$0xff]
    %v2888 = vld [vmem:[%s2886 + $0x8] sm:$0xff]
    %v2889 = vld [vmem:[%s2886 + $0x10] sm:$0xff]
    %v2890 = vld [vmem:[%s2886 + $0x18] sm:$0xff]
    %v2891 = vlaneseq
    %v2892 = vshrl.u32 %v2891, 7
    %v2893 = vsub.s32 1, %v2892
    %v2894 = vrot.slane %v1831, %v2893
    %v2896 = vsel %vm98, %v2884, 0
    %v2899 = vsel %vm98, %v2885, 0
    %2901 = vmatprep.subr.mxu0 0.0
    %2902 = vmatpush1.msra.mxu0 %v2887
    %2903 = vmatprep.subr.mxu0 0.0
    %2904 = vmatpush1.msra.mxu0 %v2888
    %2905 = vmatprep.subr.mxu0 0.0
    %2906 = vmatpush1.msra.mxu0 %v2889
    %2907 = vmatprep.subr.mxu0 0.0
    %2908 = vmatpush1.msra.mxu0 %v2890
    %2909 = vmatprep.subr.mxu0 0.0
    %2910 = vmatpush1.msra.mxu0 0.0
    %2911 = vmatprep.subr.mxu0 0.0
    %2912 = vmatpush1.msra.mxu0 0.0
    %2913 = vmatprep.subr.mxu0 0.0
    %2914 = vmatpush1.msra.mxu0 0.0
    %2915 = vmatprep.subr.mxu0 0.0
    %2916 = vmatpush1.msra.mxu0 0.0
    %2917 = vmatprep.subr.mxu0 0.0
    %2918 = vmatpush1.msra.mxu0 0.0
    %2919 = vmatprep.subr.mxu0 0.0
    %2920 = vmatpush1.msra.mxu0 0.0
    %2921 = vmatprep.subr.mxu0 0.0
    %2922 = vmatpush1.msra.mxu0 0.0
    %2923 = vmatprep.subr.mxu0 0.0
    %2924 = vmatpush1.msra.mxu0 0.0
    %2925 = vmatprep.subr.mxu0 0.0
    %2926 = vmatpush1.msra.mxu0 0.0
    %2927 = vmatprep.subr.mxu0 0.0
    %2928 = vmatpush1.msra.mxu0 0.0
    %2929 = vmatprep.subr.mxu0 0.0
    %2930 = vmatpush1.msra.mxu0 0.0
    %2931 = vmatprep.subr.mxu0 0.0
    %2932 = vmatpush1.msra.mxu0 0.0
    %2933 = vmatprep.subr.mxu0 0.0
    %2934 = vmatpush1.msra.mxu0 0.0
    %2935 = vmatprep.subr.mxu0 0.0
    %2936 = vmatpush1.msra.mxu0 0.0
    %2937 = vmatprep.subr.mxu0 0.0
    %2938 = vmatpush1.msra.mxu0 0.0
    %2939 = vmatprep.subr.mxu0 0.0
    %2940 = vmatpush1.msra.mxu0 0.0
    %2941 = vmatprep.subr.mxu0 0.0
    %2942 = vmatpush1.msra.mxu0 0.0
    %2943 = vmatprep.subr.mxu0 0.0
    %2944 = vmatpush1.msra.mxu0 0.0
    %2945 = vmatprep.subr.mxu0 0.0
    %2946 = vmatpush1.msra.mxu0 0.0
    %2947 = vmatprep.subr.mxu0 0.0
    %2948 = vmatpush1.msra.mxu0 0.0
    %2949 = vmatprep.subr.mxu0 0.0
    %2950 = vmatpush1.msra.mxu0 0.0
    %2951 = vmatprep.subr.mxu0 0.0
    %2952 = vmatpush1.msra.mxu0 0.0
    %2953 = vmatprep.subr.mxu0 0.0
    %2954 = vmatpush1.msra.mxu0 0.0
    %2955 = vmatprep.subr.mxu0 0.0
    %2956 = vmatpush1.msra.mxu0 0.0
    %2957 = vmatprep.subr.mxu0 0.0
    %2958 = vmatpush1.msra.mxu0 0.0
    %2959 = vmatprep.subr.mxu0 0.0
    %2960 = vmatpush1.msra.mxu0 0.0
    %2961 = vmatprep.subr.mxu0 0.0
    %2962 = vmatpush1.msra.mxu0 0.0
    %2963 = vmatprep.subr.mxu0 0.0
    %2964 = vmatpush1.msra.mxu0 0.0
    %2965 = vmatprep.mubr.f32.mxu0 0.0
    %2966 = vmatmul.mubr.f32.gmra.mrb[0].mxu0 %v2896
    %v2967 = vpop.f32.mrb[0].mxu0
    %v2968 = vadd.f32 %v2894, %v2967
    %v2969 = vpop.f32.mrb[0].mxu0
    %2970 = vmatprep.mubr.f32.mxu0 0.0
    %2971 = vmatmul.mubr.f32.gmra.mrb[0].mxu0 %v2899
    %v2972 = vpop.f32.mrb[0].mxu0
    %v2973 = vadd.f32 %v2894, %v2972
    %v2974 = vpop.f32.mrb[0].mxu0
    %2975 = vdwg.mxu0
    %v2976 = vmul.f32 %v2968, 0.5
    %v2977 = vmul.f32 %v2973, 0.5
    %v2978 = vmul.f32 %v2968, %v2968
    %v2979 = vmul.f32 %v2973, %v2973
    %v2980 = vmul.f32 %v2978, %v2968
    %v2981 = vmul.f32 %v2979, %v2973
    %v2982 = vmul.f32 %v2980, 0.044715
    %v2983 = vmul.f32 %v2981, 0.044715
    %v2984 = vadd.f32 %v2968, %v2982
    %v2985 = vadd.f32 %v2973, %v2983
    %v2986 = vmul.f32 %v2984, 0.7978846
    %v2987 = vmul.f32 %v2985, 0.7978846
    %v2988 = vtanh.pop %v2986
    %v2989 = vtanh.pop %v2987
    %v2990 = vadd.f32 %v2988, 1.0
    %v2991 = vadd.f32 %v2989, 1.0
    %v2992 = vmul.f32 %v2976, %v2990
    %v2993 = vmul.f32 %v2977, %v2991
    %s2994 = scalar_lea.vmem %s12, 64
    %v2995 = vld [vmem:[%s2994] sm:$0xff]
    %v2996 = vld [vmem:[%s2994 + $0x8] sm:$0xff]
    %v2997 = vld [vmem:[%s2994 + $0x10] sm:$0xff]
    %v2998 = vld [vmem:[%s2994 + $0x18] sm:$0xff]
    %v2999 = vld [vmem:[%s2994 + $0x20] sm:$0xff]
    %v3000 = vld [vmem:[%s2994 + $0x28] sm:$0xff]
    %v3001 = vld [vmem:[%s2994 + $0x30] sm:$0xff]
    %v3002 = vld [vmem:[%s2994 + $0x38] sm:$0xff]
    %3004 = vrot.lane.b32.xlu0 %v2894, 64
    %v3005 = vpop.permute.xlu0 %3004
    %v3008 = vsel %vm1705, %v2992, 0
    %v3011 = vsel %vm1705, %v2993, 0
    %3013 = vmatprep.subr.mxu0 0.0
    %3014 = vmatpush1.msra.mxu0 %v2995
    %3015 = vmatprep.subr.mxu0 0.0
    %3016 = vmatpush1.msra.mxu0 %v2996
    %3017 = vmatprep.subr.mxu0 0.0
    %3018 = vmatpush1.msra.mxu0 %v2997
    %3019 = vmatprep.subr.mxu0 0.0
    %3020 = vmatpush1.msra.mxu0 %v2998
    %3021 = vmatprep.subr.mxu0 0.0
    %3022 = vmatpush1.msra.mxu0 %v2999
    %3023 = vmatprep.subr.mxu0 0.0
    %3024 = vmatpush1.msra.mxu0 %v3000
    %3025 = vmatprep.subr.mxu0 0.0
    %3026 = vmatpush1.msra.mxu0 %v3001
    %3027 = vmatprep.subr.mxu0 0.0
    %3028 = vmatpush1.msra.mxu0 %v3002
    %3029 = vmatprep.subr.mxu0 0.0
    %3030 = vmatpush1.msra.mxu0 0.0
    %3031 = vmatprep.subr.mxu0 0.0
    %3032 = vmatpush1.msra.mxu0 0.0
    %3033 = vmatprep.subr.mxu0 0.0
    %3034 = vmatpush1.msra.mxu0 0.0
    %3035 = vmatprep.subr.mxu0 0.0
    %3036 = vmatpush1.msra.mxu0 0.0
    %3037 = vmatprep.subr.mxu0 0.0
    %3038 = vmatpush1.msra.mxu0 0.0
    %3039 = vmatprep.subr.mxu0 0.0
    %3040 = vmatpush1.msra.mxu0 0.0
    %3041 = vmatprep.subr.mxu0 0.0
    %3042 = vmatpush1.msra.mxu0 0.0
    %3043 = vmatprep.subr.mxu0 0.0
    %3044 = vmatpush1.msra.mxu0 0.0
    %3045 = vmatprep.subr.mxu0 0.0
    %3046 = vmatpush1.msra.mxu0 0.0
    %3047 = vmatprep.subr.mxu0 0.0
    %3048 = vmatpush1.msra.mxu0 0.0
    %3049 = vmatprep.subr.mxu0 0.0
    %3050 = vmatpush1.msra.mxu0 0.0
    %3051 = vmatprep.subr.mxu0 0.0
    %3052 = vmatpush1.msra.mxu0 0.0
    %3053 = vmatprep.subr.mxu0 0.0
    %3054 = vmatpush1.msra.mxu0 0.0
    %3055 = vmatprep.subr.mxu0 0.0
    %3056 = vmatpush1.msra.mxu0 0.0
    %3057 = vmatprep.subr.mxu0 0.0
    %3058 = vmatpush1.msra.mxu0 0.0
    %3059 = vmatprep.subr.mxu0 0.0
    %3060 = vmatpush1.msra.mxu0 0.0
    %3061 = vmatprep.subr.mxu0 0.0
    %3062 = vmatpush1.msra.mxu0 0.0
    %3063 = vmatprep.subr.mxu0 0.0
    %3064 = vmatpush1.msra.mxu0 0.0
    %3065 = vmatprep.subr.mxu0 0.0
    %3066 = vmatpush1.msra.mxu0 0.0
    %3067 = vmatprep.subr.mxu0 0.0
    %3068 = vmatpush1.msra.mxu0 0.0
    %3069 = vmatprep.subr.mxu0 0.0
    %3070 = vmatpush1.msra.mxu0 0.0
    %3071 = vmatprep.subr.mxu0 0.0
    %3072 = vmatpush1.msra.mxu0 0.0
    %3073 = vmatprep.subr.mxu0 0.0
    %3074 = vmatpush1.msra.mxu0 0.0
    %3075 = vmatprep.subr.mxu0 0.0
    %3076 = vmatpush1.msra.mxu0 0.0
    %3077 = vmatprep.mubr.f32.mxu0 0.0
    %3078 = vmatmul.mubr.f32.gmra.mrb[0].mxu0 %v3008
    %v3079 = vpop.f32.mrb[0].mxu0
    %v3080 = vadd.f32 %v3005, %v3079
    %v3081 = vpop.f32.mrb[0].mxu0
    %3082 = vmatprep.mubr.f32.mxu0 0.0
    %3083 = vmatmul.mubr.f32.gmra.mrb[0].mxu0 %v3011
    %v3084 = vpop.f32.mrb[0].mxu0
    %v3085 = vadd.f32 %v3005, %v3084
    %v3086 = vpop.f32.mrb[0].mxu0
    %3087 = vdwg.mxu0
    %v3088 = vadd.f32 %v3080, %v2884
    %v3089 = vadd.f32 %v3085, %v2885
    %v3090 = vsel %vm98, %v3088, 0.0
    %3091 = vadd.xlane.f32.xlu0 %v3090
    %v3092 = vpop.xlane.xlu0 %3091
    %v3093 = vsel %vm98, %v3089, 0.0
    %3094 = vadd.xlane.f32.xlu0 %v3093
    %v3095 = vpop.xlane.xlu0 %3094
    %v3096 = vmul.f32 %v3092, %v491
    %v3097 = vmul.f32 %v3095, %v491
    %v3098 = vsub.f32 %v3088, %v3096
    %v3099 = vsub.f32 %v3089, %v3097
    %v3100 = vmul.f32 %v3098, %v3098
    %v3101 = vmul.f32 %v3099, %v3099
    %v3102 = vsel %vm98, %v3100, 0.0
    %3103 = vadd.xlane.f32.xlu0 %v3102
    %v3104 = vpop.xlane.xlu0 %3103
    %v3105 = vsel %vm98, %v3101, 0.0
    %3106 = vadd.xlane.f32.xlu0 %v3105
    %v3107 = vpop.xlane.xlu0 %3106
    %v3108 = vmul.f32 %v3104, %v491
    %v3109 = vmul.f32 %v3107, %v491
    %v3110 = vadd.f32 %v3108, 1e-12
    %v3111 = vadd.f32 %v3109, 1e-12
    %v3112 = vrsqrt.pop %v3110
    %v3113 = vrsqrt.pop %v3111
    %v3114 = vmul.f32 %v3098, %v3112
    %v3115 = vmul.f32 %v3099, %v3113
    %3116 = vrot.lane.b32.xlu0 %v2877, 64
    %v3117 = vpop.permute.xlu0 %3116
    %v3119 = vmul.f32 %v3114, %v3117
    %v3120 = vmul.f32 %v3115, %v3117
    %3121 = vrot.lane.b32.xlu0 %v2877, 32
    %v3122 = vpop.permute.xlu0 %3121
    %v3124 = vadd.f32 %v3119, %v3122
    %v3125 = vadd.f32 %v3120, %v3122
    %v3126 = vld [vmem:[%s13] sm:$0xff]
    %v3127 = vld [vmem:[%s13 + $0x8] sm:$0xff]
    %v3128 = vld [vmem:[%s13 + $0x10] sm:$0xff]
    %v3129 = vld [vmem:[%s13 + $0x18] sm:$0xff]
    %3131 = vrot.lane.b32.xlu0 %v520, 96
    %v3132 = vpop.permute.xlu0 %3131
    %v3135 = vsel %vm98, %v3124, 0
    %v3138 = vsel %vm98, %v3125, 0
    %3140 = vmatprep.subr.mxu0 0.0
    %3141 = vmatpush1.msra.mxu0 %v3126
    %3142 = vmatprep.subr.mxu0 0.0
    %3143 = vmatpush1.msra.mxu0 %v3127
    %3144 = vmatprep.subr.mxu0 0.0
    %3145 = vmatpush1.msra.mxu0 %v3128
    %3146 = vmatprep.subr.mxu0 0.0
    %3147 = vmatpush1.msra.mxu0 %v3129
    %3148 = vmatprep.subr.mxu0 0.0
    %3149 = vmatpush1.msra.mxu0 0.0
    %3150 = vmatprep.subr.mxu0 0.0
    %3151 = vmatpush1.msra.mxu0 0.0
    %3152 = vmatprep.subr.mxu0 0.0
    %3153 = vmatpush1.msra.mxu0 0.0
    %3154 = vmatprep.subr.mxu0 0.0
    %3155 = vmatpush1.msra.mxu0 0.0
    %3156 = vmatprep.subr.mxu0 0.0
    %3157 = vmatpush1.msra.mxu0 0.0
    %3158 = vmatprep.subr.mxu0 0.0
    %3159 = vmatpush1.msra.mxu0 0.0
    %3160 = vmatprep.subr.mxu0 0.0
    %3161 = vmatpush1.msra.mxu0 0.0
    %3162 = vmatprep.subr.mxu0 0.0
    %3163 = vmatpush1.msra.mxu0 0.0
    %3164 = vmatprep.subr.mxu0 0.0
    %3165 = vmatpush1.msra.mxu0 0.0
    %3166 = vmatprep.subr.mxu0 0.0
    %3167 = vmatpush1.msra.mxu0 0.0
    %3168 = vmatprep.subr.mxu0 0.0
    %3169 = vmatpush1.msra.mxu0 0.0
    %3170 = vmatprep.subr.mxu0 0.0
    %3171 = vmatpush1.msra.mxu0 0.0
    %3172 = vmatprep.subr.mxu0 0.0
    %3173 = vmatpush1.msra.mxu0 0.0
    %3174 = vmatprep.subr.mxu0 0.0
    %3175 = vmatpush1.msra.mxu0 0.0
    %3176 = vmatprep.subr.mxu0 0.0
    %3177 = vmatpush1.msra.mxu0 0.0
    %3178 = vmatprep.subr.mxu0 0.0
    %3179 = vmatpush1.msra.mxu0 0.0
    %3180 = vmatprep.subr.mxu0 0.0
    %3181 = vmatpush1.msra.mxu0 0.0
    %3182 = vmatprep.subr.mxu0 0.0
    %3183 = vmatpush1.msra.mxu0 0.0
    %3184 = vmatprep.subr.mxu0 0.0
    %3185 = vmatpush1.msra.mxu0 0.0
    %3186 = vmatprep.subr.mxu0 0.0
    %3187 = vmatpush1.msra.mxu0 0.0
    %3188 = vmatprep.subr.mxu0 0.0
    %3189 = vmatpush1.msra.mxu0 0.0
    %3190 = vmatprep.subr.mxu0 0.0
    %3191 = vmatpush1.msra.mxu0 0.0
    %3192 = vmatprep.subr.mxu0 0.0
    %3193 = vmatpush1.msra.mxu0 0.0
    %3194 = vmatprep.subr.mxu0 0.0
    %3195 = vmatpush1.msra.mxu0 0.0
    %3196 = vmatprep.subr.mxu0 0.0
    %3197 = vmatpush1.msra.mxu0 0.0
    %3198 = vmatprep.subr.mxu0 0.0
    %3199 = vmatpush1.msra.mxu0 0.0
    %3200 = vmatprep.subr.mxu0 0.0
    %3201 = vmatpush1.msra.mxu0 0.0
    %3202 = vmatprep.subr.mxu0 0.0
    %3203 = vmatpush1.msra.mxu0 0.0
    %3204 = vmatprep.mubr.f32.mxu0 0.0
    %3205 = vmatmul.mubr.f32.gmra.mrb[0].mxu0 %v3135
    %v3206 = vpop.f32.mrb[0].mxu0
    %v3207 = vadd.f32 %v3132, %v3206
    %v3208 = vpop.f32.mrb[0].mxu0
    %3209 = vmatprep.mubr.f32.mxu0 0.0
    %3210 = vmatmul.mubr.f32.gmra.mrb[0].mxu0 %v3138
    %v3211 = vpop.f32.mrb[0].mxu0
    %v3212 = vadd.f32 %v3132, %v3211
    %v3213 = vpop.f32.mrb[0].mxu0
    %3214 = vdwg.mxu0
    %v3215 = vtanh.pop %v3207
    %v3216 = vtanh.pop %v3212
    %v3217 = vld [vmem:[%s14] sm:$0xff]
    %v3218 = vld [vmem:[%s14 + $0x8] sm:$0xff]
    %v3219 = vld [vmem:[%s14 + $0x10] sm:$0xff]
    %v3220 = vld [vmem:[%s14 + $0x18] sm:$0xff]
    %v3221 = vlaneseq
    %v3222 = vshrl.u32 %v3221, 7
    %v3223 = vsub.s32 3, %v3222
    %v3224 = vrot.slane %v88, %v3223
    %v3226 = vsel %vm98, %v3215, 0
    %v3229 = vsel %vm98, %v3216, 0
    %3231 = vmatprep.subr.mxu0 0.0
    %3232 = vmatpush1.msra.mxu0 %v3217
    %3233 = vmatprep.subr.mxu0 0.0
    %3234 = vmatpush1.msra.mxu0 %v3218
    %3235 = vmatprep.subr.mxu0 0.0
    %3236 = vmatpush1.msra.mxu0 %v3219
    %3237 = vmatprep.subr.mxu0 0.0
    %3238 = vmatpush1.msra.mxu0 %v3220
    %3239 = vmatprep.subr.mxu0 0.0
    %3240 = vmatpush1.msra.mxu0 0.0
    %3241 = vmatprep.subr.mxu0 0.0
    %3242 = vmatpush1.msra.mxu0 0.0
    %3243 = vmatprep.subr.mxu0 0.0
    %3244 = vmatpush1.msra.mxu0 0.0
    %3245 = vmatprep.subr.mxu0 0.0
    %3246 = vmatpush1.msra.mxu0 0.0
    %3247 = vmatprep.subr.mxu0 0.0
    %3248 = vmatpush1.msra.mxu0 0.0
    %3249 = vmatprep.subr.mxu0 0.0
    %3250 = vmatpush1.msra.mxu0 0.0
    %3251 = vmatprep.subr.mxu0 0.0
    %3252 = vmatpush1.msra.mxu0 0.0
    %3253 = vmatprep.subr.mxu0 0.0
    %3254 = vmatpush1.msra.mxu0 0.0
    %3255 = vmatprep.subr.mxu0 0.0
    %3256 = vmatpush1.msra.mxu0 0.0
    %3257 = vmatprep.subr.mxu0 0.0
    %3258 = vmatpush1.msra.mxu0 0.0
    %3259 = vmatprep.subr.mxu0 0.0
    %3260 = vmatpush1.msra.mxu0 0.0
    %3261 = vmatprep.subr.mxu0 0.0
    %3262 = vmatpush1.msra.mxu0 0.0
    %3263 = vmatprep.subr.mxu0 0.0
    %3264 = vmatpush1.msra.mxu0 0.0
    %3265 = vmatprep.subr.mxu0 0.0
    %3266 = vmatpush1.msra.mxu0 0.0
    %3267 = vmatprep.subr.mxu0 0.0
    %3268 = vmatpush1.msra.mxu0 0.0
    %3269 = vmatprep.subr.mxu0 0.0
    %3270 = vmatpush1.msra.mxu0 0.0
    %3271 = vmatprep.subr.mxu0 0.0
    %3272 = vmatpush1.msra.mxu0 0.0
    %3273 = vmatprep.subr.mxu0 0.0
    %3274 = vmatpush1.msra.mxu0 0.0
    %3275 = vmatprep.subr.mxu0 0.0
    %3276 = vmatpush1.msra.mxu0 0.0
    %3277 = vmatprep.subr.mxu0 0.0
    %3278 = vmatpush1.msra.mxu0 0.0
    %3279 = vmatprep.subr.mxu0 0.0
    %3280 = vmatpush1.msra.mxu0 0.0
    %3281 = vmatprep.subr.mxu0 0.0
    %3282 = vmatpush1.msra.mxu0 0.0
    %3283 = vmatprep.subr.mxu0 0.0
    %3284 = vmatpush1.msra.mxu0 0.0
    %3285 = vmatprep.subr.mxu0 0.0
    %3286 = vmatpush1.msra.mxu0 0.0
    %3287 = vmatprep.subr.mxu0 0.0
    %3288 = vmatpush1.msra.mxu0 0.0
    %3289 = vmatprep.subr.mxu0 0.0
    %3290 = vmatpush1.msra.mxu0 0.0
    %3291 = vmatprep.subr.mxu0 0.0
    %3292 = vmatpush1.msra.mxu0 0.0
    %3293 = vmatprep.subr.mxu0 0.0
    %3294 = vmatpush1.msra.mxu0 0.0
    %3295 = vmatprep.mubr.f32.mxu0 0.0
    %3296 = vmatmul.mubr.f32.gmra.mrb[0].mxu0 %v3226
    %v3297 = vpop.f32.mrb[0].mxu0
    %v3298 = vadd.f32 %v3224, %v3297
    %v3299 = vpop.f32.mrb[0].mxu0
    %3300 = vmatprep.mubr.f32.mxu0 0.0
    %3301 = vmatmul.mubr.f32.gmra.mrb[0].mxu0 %v3229
    %v3302 = vpop.f32.mrb[0].mxu0
    %v3303 = vadd.f32 %v3224, %v3302
    %v3304 = vpop.f32.mrb[0].mxu0
    %3305 = vdwg.mxu0
    %3306 = vst [vmem:[#allocation8] sm:$0xff] %v3298
    %3307 = vst [vmem:[#allocation8 + $0x8] sm:$0xff] %v3303
    // Predicated region
    $region74: #{tpu_custom_call.1} parent=1 // pred_check
      _
    $region75: #{tpu_custom_call.1} parent=1 // pred_check_branch
      %3309 = sbr.rel (0) target = $region77
    $region76: #{tpu_custom_call.1} parent=1 // pred_region
      %s3311 = ssub.s32 256, 256
      %3312 = vsyncadd [#allocation4], %s3311
      %s3313 = sshll.u32 [#allocation8], 4
      %s3314 = int_to_ptr.vmem [resolvable:$true] %s3313
      %3319 = dma.vmem_to_hbm [thread:$0]  %s3314, 256, %s15, [#allocation4], 128, 128, 8
    $region77: #{tpu_custom_call.1} parent=1 // pred_fallthru
      _
    // Predicated region
    $region78: #{tpu_custom_call.1} parent=1 // pred_check
      _
    $region79: #{tpu_custom_call.1} parent=1 // pred_check_branch
      %3321 = sbr.rel (0) target = $region81
    $region80: #{tpu_custom_call.1} parent=1 // pred_region
      %3322 = dma.done [#allocation4], 256
    $region81: #{tpu_custom_call.1} parent=1 // pred_fallthru
      _
    %3323 = vsyncpa [#allocation3], 1
    %3324 = vsyncpa [#allocation6], 1
    %3325 = vsyncpa [#allocation4], 1

</llo_original>
